<compile_context>
chip_gen: v7x
topology: tpu7x:2x2x1
jax: 0.10.0
libtpu: 0.0.40
codegen_flags: <defaults>
</compile_context>

<pallas_src>
import math
from functools import partial

import jax
import jax.numpy as jnp
from jax.experimental import pallas as pl
from jax.experimental.pallas import tpu as pltpu

LN_EPS = 1e-12        # BERT layer_norm_eps
MASK_NEG = -1e9       # large finite additive mask (robust vs. finfo.min stacking)


def _layernorm(x, g, b):
    mu = jnp.mean(x, axis=-1, keepdims=True)
    var = jnp.mean(jnp.square(x - mu), axis=-1, keepdims=True)
    return (x - mu) * jax.lax.rsqrt(var + LN_EPS) * g + b


def _gelu_exact(x):
    # exact GELU (erf form), matching torch.nn.GELU() / HF "gelu"
    return 0.5 * x * (1.0 + jax.lax.erf(x * (1.0 / math.sqrt(2.0))))


def _bf16(x):
    return x.astype(jnp.bfloat16)


# --------------------------- fused Pallas kernels ---------------------------

def encoder_layer_kernel(*refs, num_heads, head_dim, scale, apply_pre_ln):
    """One full BERT encoder layer for one batch element per grid step."""
    if apply_pre_ln:
        (h_ref, bias_ref, preg_ref, preb_ref,
         wqkv_ref, bqkv_ref, wo_ref, bo_ref, ln1g_ref, ln1b_ref,
         wi_ref, bi_ref, wf_ref, bf_ref, ln2g_ref, ln2b_ref,
         o_ref, ctx_scr) = refs
    else:
        (h_ref, bias_ref,
         wqkv_ref, bqkv_ref, wo_ref, bo_ref, ln1g_ref, ln1b_ref,
         wi_ref, bi_ref, wf_ref, bf_ref, ln2g_ref, ln2b_ref,
         o_ref, ctx_scr) = refs

    hidden = num_heads * head_dim
    h = h_ref[0]                                                   # (S, H) f32
    if apply_pre_ln:
        # fused embedding LayerNorm (first layer only)
        h = _layernorm(h, preg_ref[...], preb_ref[...])

    # Fused QKV projection: bf16 operands, f32 MXU accumulation.
    qkv = jnp.dot(_bf16(h), wqkv_ref[...],
                  preferred_element_type=jnp.float32) + bqkv_ref[...]   # (S, 3H)

    bias = bias_ref[0]                                             # (1, S) key mask

    # Multi-head attention: per-head contexts written into a (S, H) VMEM slab
    # so the output projection is a single K=H matmul after the loop.
    # TODO(synk): at BERT-base (dh=64) process heads in pairs / head-major
    # layout so head slices are dense 128-lane blocks.
    for hd in range(num_heads):
        lo = hd * head_dim
        q = _bf16(qkv[:, lo:lo + head_dim] * scale)                # scale folded into Q
        k = _bf16(qkv[:, hidden + lo:hidden + lo + head_dim])
        v = _bf16(qkv[:, 2 * hidden + lo:2 * hidden + lo + head_dim])
        s = jax.lax.dot_general(q, k, (((1,), (1,)), ((), ())),    # (S, S), no K^T copy
                                preferred_element_type=jnp.float32)
        s = s + bias
        s = s - jnp.max(s, axis=-1, keepdims=True)
        p = jnp.exp(s)
        p = p * pl.reciprocal(jnp.sum(p, axis=-1, keepdims=True), approx=True)
        ctx_scr[:, lo:lo + head_dim] = jnp.dot(
            _bf16(p), v, preferred_element_type=jnp.float32)

    attn = jnp.dot(_bf16(ctx_scr[...]), wo_ref[...],
                   preferred_element_type=jnp.float32) + bo_ref[...]
    h1 = _layernorm(attn + h, ln1g_ref[...], ln1b_ref[...])

    # FFN with exact-erf GELU (f32 elementwise), second residual + LayerNorm.
    ff = jnp.dot(_bf16(h1), wi_ref[...],
                 preferred_element_type=jnp.float32) + bi_ref[...]
    ff = _gelu_exact(ff)
    ff_out = jnp.dot(_bf16(ff), wf_ref[...],
                     preferred_element_type=jnp.float32) + bf_ref[...]
    o_ref[0] = _layernorm(ff_out + h1, ln2g_ref[...], ln2b_ref[...])


def head_kernel(x_ref, pw_ref, pb_ref, cw_ref, cb_ref, o_ref):
    """Fused pooler (tanh dense) + classifier; rows padded to 8 sublanes and
    classifier output padded to 128 lanes so all stores are unmasked."""
    pooled = jnp.tanh(jnp.dot(_bf16(x_ref[...]), pw_ref[...],
                              preferred_element_type=jnp.float32) + pb_ref[...])
    o_ref[...] = jnp.dot(_bf16(pooled), cw_ref[...],
                         preferred_element_type=jnp.float32) + cb_ref[...]


# ------------------------------ wrappers -------------------------------------

def encoder_layer(h, key_bias, lp, *, num_heads, head_dim, scale, pre_ln=None):
    B, S, H = h.shape
    apply_pre_ln = pre_ln is not None

    def full(shape):
        return pl.BlockSpec(shape, lambda b, _n=len(shape): (0,) * _n)

    in_specs = [
        pl.BlockSpec((1, S, H), lambda b: (b, 0, 0)),   # hidden states (per batch)
        pl.BlockSpec((1, 1, S), lambda b: (b, 0, 0)),   # additive key mask (per batch)
    ]
    args = [h, key_bias]
    if apply_pre_ln:
        in_specs += [full((1, H)), full((1, H))]
        args += [pre_ln[0], pre_ln[1]]

    weight_args = [lp["wqkv"], lp["bqkv"], lp["wo"], lp["bo"],
                   lp["ln1_g"], lp["ln1_b"], lp["wi"], lp["bi"],
                   lp["wf"], lp["bf"], lp["ln2_g"], lp["ln2_b"]]
    in_specs += [full(a.shape) for a in weight_args]    # weights resident across grid
    args += weight_args

    return pl.pallas_call(
        partial(encoder_layer_kernel, num_heads=num_heads, head_dim=head_dim,
                scale=scale, apply_pre_ln=apply_pre_ln),
        grid=(B,),
        in_specs=in_specs,
        out_specs=pl.BlockSpec((1, S, H), lambda b: (b, 0, 0)),
        out_shape=jax.ShapeDtypeStruct((B, S, H), jnp.float32),
        scratch_shapes=[pltpu.VMEM((S, H), jnp.float32)],   # per-head context slab
        input_output_aliases={0: 0},                        # update h in place
        compiler_params=pltpu.CompilerParams(
            dimension_semantics=("parallel",)),             # batch across TCs (v7x)
    )(*args)


def pooler_classifier(cls_pad, pw, pb, cw_pad, cb_pad):
    M = cls_pad.shape[0]
    NP = cw_pad.shape[1]
    return pl.pallas_call(
        head_kernel,
        out_shape=jax.ShapeDtypeStruct((M, NP), jnp.float32),
    )(cls_pad, pw, pb, cw_pad, cb_pad)


# ------------------------------ model -----------------------------------------

def init_params(key, cfg):
    H, I = cfg["hidden"], cfg["intermediate"]
    V, P, T = cfg["vocab"], cfg["max_pos"], cfg["type_vocab"]
    L, C = cfg["layers"], cfg["num_classes"]
    CP = ((C + 127) // 128) * 128          # classifier output padded to lane width

    keys = iter(jax.random.split(key, 16 + 8 * L))

    def w(shape, dtype=jnp.bfloat16):      # BERT init N(0, 0.02); matmul weights bf16
        return (0.02 * jax.random.normal(next(keys), shape)).astype(dtype)

    zeros = lambda s: jnp.zeros(s, jnp.float32)
    ones = lambda s: jnp.ones(s, jnp.float32)

    cls_w = 0.02 * jax.random.normal(next(keys), (H, C))
    params = {
        "word_emb": w((V, H), jnp.float32),
        "pos_emb": w((P, H), jnp.float32),
        "type_emb": w((T, H), jnp.float32),
        "emb_ln_g": ones((1, H)), "emb_ln_b": zeros((1, H)),
        "layers": [],
        "pooler_w": w((H, H)), "pooler_b": zeros((1, H)),
        # zero-padded to 128 output lanes; real logits are the first C columns.
        "cls_w_pad": jnp.zeros((H, CP), jnp.float32).at[:, :C].set(cls_w)
                        .astype(jnp.bfloat16),
        "cls_b_pad": zeros((1, CP)),
    }
    for _ in range(L):
        params["layers"].append({
            "wqkv": w((H, 3 * H)), "bqkv": zeros((1, 3 * H)),   # fused Q/K/V weights
            "wo": w((H, H)), "bo": zeros((1, H)),
            "ln1_g": ones((1, H)), "ln1_b": zeros((1, H)),
            "wi": w((H, I)), "bi": zeros((1, I)),
            "wf": w((I, H)), "bf": zeros((1, H)),
            "ln2_g": ones((1, H)), "ln2_b": zeros((1, H)),
        })
    return params


def bert_classifier_forward(params, input_ids, attention_mask, cfg):
    B, S = input_ids.shape
    H, nh = cfg["hidden"], cfg["heads"]
    dh = H // nh
    C = cfg["num_classes"]

    # TODO(synk): embedding row-gather stays in XLA (jnp.take); no clean Pallas
    # gather needed at this size.
    we = jnp.take(params["word_emb"], input_ids, axis=0)          # (B,S,H)
    pe = params["pos_emb"][:S][None, :, :]                        # (1,S,H)
    te = params["type_emb"][0][None, None, :]                     # token_type_ids = 0
    h = (we + pe + te).astype(jnp.float32)                        # (B,S,H)

    # Per-batch additive key mask (B,1,S); batch separation comes from the grid,
    # so no (B*S, B*S) bias is ever materialized or DMAed.
    key_bias = ((1.0 - attention_mask.astype(jnp.float32)) * MASK_NEG)[:, None, :]

    scale = 1.0 / math.sqrt(dh)
    for li, lp in enumerate(params["layers"]):
        pre_ln = (params["emb_ln_g"], params["emb_ln_b"]) if li == 0 else None
        h = encoder_layer(h, key_bias, lp, num_heads=nh, head_dim=dh,
                          scale=scale, pre_ln=pre_ln)

    cls_tok = h[:, 0, :]                                          # [CLS] rows (B,H)
    M = max(8, B)                                                 # 8-sublane granule
    cls_pad = jnp.zeros((M, H), jnp.float32).at[:B].set(cls_tok)
    logits_pad = pooler_classifier(cls_pad, params["pooler_w"], params["pooler_b"],
                                   params["cls_w_pad"], params["cls_b_pad"])
    logits = logits_pad[:B, :C]                                   # (B, num_classes)
    # dropout is identity in eval
    return {"out": logits}


# ------------------------------- main ------------------------------------------

if __name__ == "__main__":
    cfg = dict(vocab=100, max_pos=64, type_vocab=2, hidden=32, heads=4,
               layers=2, intermediate=128, num_classes=3)

    key = jax.random.PRNGKey(0)
    pkey, ikey = jax.random.split(key)
    params = init_params(pkey, cfg)

    B, S = 2, 8
    input_ids = jax.random.randint(ikey, (B, S), 0, cfg["vocab"], dtype=jnp.int32)
    attention_mask = jnp.array([[1, 1, 1, 1, 1, 1, 1, 1],
                                [1, 1, 1, 1, 1, 0, 0, 0]], dtype=jnp.int32)

    fwd = jax.jit(partial(bert_classifier_forward, cfg=cfg))
    out = fwd(params, input_ids, attention_mask)
    jax.block_until_ready(out["out"])
    assert out["out"].shape == (B, cfg["num_classes"])
    print("KERNEL_OK")
</pallas_src>

<mosaic_0001>
module attributes {stable_mosaic.version = 11 : i64} {
  func.func @encoder_layer_kernel(%arg0: i32, %arg1: memref<1x8x32xf32, #tpu.memory_space<vmem>>, %arg2: memref<1x1x8xf32, #tpu.memory_space<vmem>>, %arg3: memref<32x96xbf16, #tpu.memory_space<vmem>>, %arg4: memref<1x96xf32, #tpu.memory_space<vmem>>, %arg5: memref<32x32xbf16, #tpu.memory_space<vmem>>, %arg6: memref<1x32xf32, #tpu.memory_space<vmem>>, %arg7: memref<1x32xf32, #tpu.memory_space<vmem>>, %arg8: memref<1x32xf32, #tpu.memory_space<vmem>>, %arg9: memref<32x128xbf16, #tpu.memory_space<vmem>>, %arg10: memref<1x128xf32, #tpu.memory_space<vmem>>, %arg11: memref<128x32xbf16, #tpu.memory_space<vmem>>, %arg12: memref<1x32xf32, #tpu.memory_space<vmem>>, %arg13: memref<1x32xf32, #tpu.memory_space<vmem>>, %arg14: memref<1x32xf32, #tpu.memory_space<vmem>>, %arg15: memref<1x8x32xf32, #tpu.memory_space<vmem>>, %arg16: memref<8x32xf32, #tpu.memory_space<vmem>>) attributes {dimension_semantics = [#tpu.dimension_semantics<parallel>], iteration_bounds = array<i64: 2>, scalar_prefetch = 0 : i64, scratch_operands = 1 : i64, tpu.core_type = #tpu.core_type<tc>, window_params = [{transform_indices = @transform_0, window_bounds = array<i64: 1, 8, 32>}, {transform_indices = @transform_1, window_bounds = array<i64: 1, 1, 8>}, {pipeline_mode = #tpu.pipeline_mode<synchronous>, transform_indices = @transform_2, window_bounds = array<i64: 32, 96>}, {pipeline_mode = #tpu.pipeline_mode<synchronous>, transform_indices = @transform_3, window_bounds = array<i64: 1, 96>}, {pipeline_mode = #tpu.pipeline_mode<synchronous>, transform_indices = @transform_4, window_bounds = array<i64: 32, 32>}, {pipeline_mode = #tpu.pipeline_mode<synchronous>, transform_indices = @transform_5, window_bounds = array<i64: 1, 32>}, {pipeline_mode = #tpu.pipeline_mode<synchronous>, transform_indices = @transform_6, window_bounds = array<i64: 1, 32>}, {pipeline_mode = #tpu.pipeline_mode<synchronous>, transform_indices = @transform_7, window_bounds = array<i64: 1, 32>}, {pipeline_mode = #tpu.pipeline_mode<synchronous>, transform_indices = @transform_8, window_bounds = array<i64: 32, 128>}, {pipeline_mode = #tpu.pipeline_mode<synchronous>, transform_indices = @transform_9, window_bounds = array<i64: 1, 128>}, {pipeline_mode = #tpu.pipeline_mode<synchronous>, transform_indices = @transform_10, window_bounds = array<i64: 128, 32>}, {pipeline_mode = #tpu.pipeline_mode<synchronous>, transform_indices = @transform_11, window_bounds = array<i64: 1, 32>}, {pipeline_mode = #tpu.pipeline_mode<synchronous>, transform_indices = @transform_12, window_bounds = array<i64: 1, 32>}, {pipeline_mode = #tpu.pipeline_mode<synchronous>, transform_indices = @transform_13, window_bounds = array<i64: 1, 32>}, {transform_indices = @transform_14, window_bounds = array<i64: 1, 8, 32>}]} {
    %c0 = arith.constant 0 : index
    %c0_0 = arith.constant 0 : index
    %c0_1 = arith.constant 0 : index
    %0 = vector.load %arg1[%c0, %c0_0, %c0_1] : memref<1x8x32xf32, #tpu.memory_space<vmem>>, vector<1x8x32xf32>
    %1 = vector.shape_cast %0 : vector<1x8x32xf32> to vector<8x32xf32>
    %2 = arith.truncf %1 : vector<8x32xf32> to vector<8x32xbf16>
    %c0_2 = arith.constant 0 : index
    %c0_3 = arith.constant 0 : index
    %3 = vector.load %arg3[%c0_2, %c0_3] : memref<32x96xbf16, #tpu.memory_space<vmem>>, vector<32x96xbf16>
    %cst = arith.constant dense<0.000000e+00> : vector<8x96xf32>
    %4 = tpu.matmul %2, %3, %cst {dimension_numbers = #tpu.dot_dimension_numbers<[1], [0], [0], [1], [0, 0, 1, 1], [], []>} : vector<8x32xbf16>, vector<32x96xbf16>, vector<8x96xf32> -> vector<8x96xf32>
    %c0_4 = arith.constant 0 : index
    %c0_5 = arith.constant 0 : index
    %5 = vector.load %arg4[%c0_4, %c0_5] : memref<1x96xf32, #tpu.memory_space<vmem>>, vector<1x96xf32>
    %6 = vector.broadcast %5 : vector<1x96xf32> to vector<8x96xf32>
    %7 = arith.addf %4, %6 : vector<8x96xf32>
    %c0_6 = arith.constant 0 : index
    %c0_7 = arith.constant 0 : index
    %c0_8 = arith.constant 0 : index
    %8 = vector.load %arg2[%c0_6, %c0_7, %c0_8] : memref<1x1x8xf32, #tpu.memory_space<vmem>>, vector<1x1x8xf32>
    %9 = vector.shape_cast %8 : vector<1x1x8xf32> to vector<1x8xf32>
    %10 = vector.extract_strided_slice %7 {offsets = [0, 0], sizes = [8, 8], strides = [1, 1]} : vector<8x96xf32> to vector<8x8xf32>
    %cst_9 = arith.constant 0.353553385 : f32
    %11 = vector.broadcast %cst_9 : f32 to vector<8x8xf32>
    %12 = arith.mulf %10, %11 : vector<8x8xf32>
    %13 = arith.truncf %12 : vector<8x8xf32> to vector<8x8xbf16>
    %14 = vector.extract_strided_slice %7 {offsets = [0, 32], sizes = [8, 8], strides = [1, 1]} : vector<8x96xf32> to vector<8x8xf32>
    %15 = arith.truncf %14 : vector<8x8xf32> to vector<8x8xbf16>
    %16 = vector.extract_strided_slice %7 {offsets = [0, 64], sizes = [8, 8], strides = [1, 1]} : vector<8x96xf32> to vector<8x8xf32>
    %17 = arith.truncf %16 : vector<8x8xf32> to vector<8x8xbf16>
    %cst_10 = arith.constant dense<0.000000e+00> : vector<8x8xf32>
    %18 = tpu.matmul %13, %15, %cst_10 {dimension_numbers = #tpu.dot_dimension_numbers<[1], [1], [0], [0], [0, 0, 1, 0], [], []>} : vector<8x8xbf16>, vector<8x8xbf16>, vector<8x8xf32> -> vector<8x8xf32>
    %19 = vector.broadcast %9 : vector<1x8xf32> to vector<8x8xf32>
    %20 = arith.addf %18, %19 : vector<8x8xf32>
    %cst_11 = arith.constant dense<0xFF800000> : vector<8xf32>
    %21 = vector.multi_reduction <maximumf>, %20, %cst_11 [1] : vector<8x8xf32> to vector<8xf32>
    %22 = vector.shape_cast %21 : vector<8xf32> to vector<8x1xf32>
    %23 = vector.broadcast %22 : vector<8x1xf32> to vector<8x8xf32>
    %24 = arith.subf %20, %23 : vector<8x8xf32>
    %25 = math.exp %24 : vector<8x8xf32>
    %cst_12 = arith.constant dense<0.000000e+00> : vector<8xf32>
    %26 = vector.multi_reduction <add>, %25, %cst_12 [1] : vector<8x8xf32> to vector<8xf32>
    %27 = vector.shape_cast %26 : vector<8xf32> to vector<8x1xf32>
    %28 = tpu.reciprocal %27 {approx = true} : vector<8x1xf32> -> vector<8x1xf32>
    %29 = vector.broadcast %28 : vector<8x1xf32> to vector<8x8xf32>
    %30 = arith.mulf %25, %29 : vector<8x8xf32>
    %31 = arith.truncf %30 : vector<8x8xf32> to vector<8x8xbf16>
    %cst_13 = arith.constant dense<0.000000e+00> : vector<8x8xf32>
    %32 = tpu.matmul %31, %17, %cst_13 {dimension_numbers = #tpu.dot_dimension_numbers<[1], [0], [0], [1], [0, 0, 1, 1], [], []>} : vector<8x8xbf16>, vector<8x8xbf16>, vector<8x8xf32> -> vector<8x8xf32>
    %c0_14 = arith.constant 0 : index
    %c0_15 = arith.constant 0 : index
    %33 = vector.load %arg16[%c0_14, %c0_15] : memref<8x32xf32, #tpu.memory_space<vmem>>, vector<8x8xf32>
    tpu.vector_store %arg16[%c0_14, %c0_15], %32 {strides = array<i32>} : memref<8x32xf32, #tpu.memory_space<vmem>>, vector<8x8xf32>,
    %34 = vector.extract_strided_slice %7 {offsets = [0, 8], sizes = [8, 8], strides = [1, 1]} : vector<8x96xf32> to vector<8x8xf32>
    %cst_16 = arith.constant 0.353553385 : f32
    %35 = vector.broadcast %cst_16 : f32 to vector<8x8xf32>
    %36 = arith.mulf %34, %35 : vector<8x8xf32>
    %37 = arith.truncf %36 : vector<8x8xf32> to vector<8x8xbf16>
    %38 = vector.extract_strided_slice %7 {offsets = [0, 40], sizes = [8, 8], strides = [1, 1]} : vector<8x96xf32> to vector<8x8xf32>
    %39 = arith.truncf %38 : vector<8x8xf32> to vector<8x8xbf16>
    %40 = vector.extract_strided_slice %7 {offsets = [0, 72], sizes = [8, 8], strides = [1, 1]} : vector<8x96xf32> to vector<8x8xf32>
    %41 = arith.truncf %40 : vector<8x8xf32> to vector<8x8xbf16>
    %cst_17 = arith.constant dense<0.000000e+00> : vector<8x8xf32>
    %42 = tpu.matmul %37, %39, %cst_17 {dimension_numbers = #tpu.dot_dimension_numbers<[1], [1], [0], [0], [0, 0, 1, 0], [], []>} : vector<8x8xbf16>, vector<8x8xbf16>, vector<8x8xf32> -> vector<8x8xf32>
    %43 = vector.broadcast %9 : vector<1x8xf32> to vector<8x8xf32>
    %44 = arith.addf %42, %43 : vector<8x8xf32>
    %cst_18 = arith.constant dense<0xFF800000> : vector<8xf32>
    %45 = vector.multi_reduction <maximumf>, %44, %cst_18 [1] : vector<8x8xf32> to vector<8xf32>
    %46 = vector.shape_cast %45 : vector<8xf32> to vector<8x1xf32>
    %47 = vector.broadcast %46 : vector<8x1xf32> to vector<8x8xf32>
    %48 = arith.subf %44, %47 : vector<8x8xf32>
    %49 = math.exp %48 : vector<8x8xf32>
    %cst_19 = arith.constant dense<0.000000e+00> : vector<8xf32>
    %50 = vector.multi_reduction <add>, %49, %cst_19 [1] : vector<8x8xf32> to vector<8xf32>
    %51 = vector.shape_cast %50 : vector<8xf32> to vector<8x1xf32>
    %52 = tpu.reciprocal %51 {approx = true} : vector<8x1xf32> -> vector<8x1xf32>
    %53 = vector.broadcast %52 : vector<8x1xf32> to vector<8x8xf32>
    %54 = arith.mulf %49, %53 : vector<8x8xf32>
    %55 = arith.truncf %54 : vector<8x8xf32> to vector<8x8xbf16>
    %cst_20 = arith.constant dense<0.000000e+00> : vector<8x8xf32>
    %56 = tpu.matmul %55, %41, %cst_20 {dimension_numbers = #tpu.dot_dimension_numbers<[1], [0], [0], [1], [0, 0, 1, 1], [], []>} : vector<8x8xbf16>, vector<8x8xbf16>, vector<8x8xf32> -> vector<8x8xf32>
    %c0_21 = arith.constant 0 : index
    %c8 = arith.constant 8 : index
    %57 = vector.load %arg16[%c0_21, %c8] : memref<8x32xf32, #tpu.memory_space<vmem>>, vector<8x8xf32>
    tpu.vector_store %arg16[%c0_21, %c8], %56 {strides = array<i32>} : memref<8x32xf32, #tpu.memory_space<vmem>>, vector<8x8xf32>,
    %58 = vector.extract_strided_slice %7 {offsets = [0, 16], sizes = [8, 8], strides = [1, 1]} : vector<8x96xf32> to vector<8x8xf32>
    %cst_22 = arith.constant 0.353553385 : f32
    %59 = vector.broadcast %cst_22 : f32 to vector<8x8xf32>
    %60 = arith.mulf %58, %59 : vector<8x8xf32>
    %61 = arith.truncf %60 : vector<8x8xf32> to vector<8x8xbf16>
    %62 = vector.extract_strided_slice %7 {offsets = [0, 48], sizes = [8, 8], strides = [1, 1]} : vector<8x96xf32> to vector<8x8xf32>
    %63 = arith.truncf %62 : vector<8x8xf32> to vector<8x8xbf16>
    %64 = vector.extract_strided_slice %7 {offsets = [0, 80], sizes = [8, 8], strides = [1, 1]} : vector<8x96xf32> to vector<8x8xf32>
    %65 = arith.truncf %64 : vector<8x8xf32> to vector<8x8xbf16>
    %cst_23 = arith.constant dense<0.000000e+00> : vector<8x8xf32>
    %66 = tpu.matmul %61, %63, %cst_23 {dimension_numbers = #tpu.dot_dimension_numbers<[1], [1], [0], [0], [0, 0, 1, 0], [], []>} : vector<8x8xbf16>, vector<8x8xbf16>, vector<8x8xf32> -> vector<8x8xf32>
    %67 = vector.broadcast %9 : vector<1x8xf32> to vector<8x8xf32>
    %68 = arith.addf %66, %67 : vector<8x8xf32>
    %cst_24 = arith.constant dense<0xFF800000> : vector<8xf32>
    %69 = vector.multi_reduction <maximumf>, %68, %cst_24 [1] : vector<8x8xf32> to vector<8xf32>
    %70 = vector.shape_cast %69 : vector<8xf32> to vector<8x1xf32>
    %71 = vector.broadcast %70 : vector<8x1xf32> to vector<8x8xf32>
    %72 = arith.subf %68, %71 : vector<8x8xf32>
    %73 = math.exp %72 : vector<8x8xf32>
    %cst_25 = arith.constant dense<0.000000e+00> : vector<8xf32>
    %74 = vector.multi_reduction <add>, %73, %cst_25 [1] : vector<8x8xf32> to vector<8xf32>
    %75 = vector.shape_cast %74 : vector<8xf32> to vector<8x1xf32>
    %76 = tpu.reciprocal %75 {approx = true} : vector<8x1xf32> -> vector<8x1xf32>
    %77 = vector.broadcast %76 : vector<8x1xf32> to vector<8x8xf32>
    %78 = arith.mulf %73, %77 : vector<8x8xf32>
    %79 = arith.truncf %78 : vector<8x8xf32> to vector<8x8xbf16>
    %cst_26 = arith.constant dense<0.000000e+00> : vector<8x8xf32>
    %80 = tpu.matmul %79, %65, %cst_26 {dimension_numbers = #tpu.dot_dimension_numbers<[1], [0], [0], [1], [0, 0, 1, 1], [], []>} : vector<8x8xbf16>, vector<8x8xbf16>, vector<8x8xf32> -> vector<8x8xf32>
    %c0_27 = arith.constant 0 : index
    %c16 = arith.constant 16 : index
    %81 = vector.load %arg16[%c0_27, %c16] : memref<8x32xf32, #tpu.memory_space<vmem>>, vector<8x8xf32>
    tpu.vector_store %arg16[%c0_27, %c16], %80 {strides = array<i32>} : memref<8x32xf32, #tpu.memory_space<vmem>>, vector<8x8xf32>,
    %82 = vector.extract_strided_slice %7 {offsets = [0, 24], sizes = [8, 8], strides = [1, 1]} : vector<8x96xf32> to vector<8x8xf32>
    %cst_28 = arith.constant 0.353553385 : f32
    %83 = vector.broadcast %cst_28 : f32 to vector<8x8xf32>
    %84 = arith.mulf %82, %83 : vector<8x8xf32>
    %85 = arith.truncf %84 : vector<8x8xf32> to vector<8x8xbf16>
    %86 = vector.extract_strided_slice %7 {offsets = [0, 56], sizes = [8, 8], strides = [1, 1]} : vector<8x96xf32> to vector<8x8xf32>
    %87 = arith.truncf %86 : vector<8x8xf32> to vector<8x8xbf16>
    %88 = vector.extract_strided_slice %7 {offsets = [0, 88], sizes = [8, 8], strides = [1, 1]} : vector<8x96xf32> to vector<8x8xf32>
    %89 = arith.truncf %88 : vector<8x8xf32> to vector<8x8xbf16>
    %cst_29 = arith.constant dense<0.000000e+00> : vector<8x8xf32>
    %90 = tpu.matmul %85, %87, %cst_29 {dimension_numbers = #tpu.dot_dimension_numbers<[1], [1], [0], [0], [0, 0, 1, 0], [], []>} : vector<8x8xbf16>, vector<8x8xbf16>, vector<8x8xf32> -> vector<8x8xf32>
    %91 = vector.broadcast %9 : vector<1x8xf32> to vector<8x8xf32>
    %92 = arith.addf %90, %91 : vector<8x8xf32>
    %cst_30 = arith.constant dense<0xFF800000> : vector<8xf32>
    %93 = vector.multi_reduction <maximumf>, %92, %cst_30 [1] : vector<8x8xf32> to vector<8xf32>
    %94 = vector.shape_cast %93 : vector<8xf32> to vector<8x1xf32>
    %95 = vector.broadcast %94 : vector<8x1xf32> to vector<8x8xf32>
    %96 = arith.subf %92, %95 : vector<8x8xf32>
    %97 = math.exp %96 : vector<8x8xf32>
    %cst_31 = arith.constant dense<0.000000e+00> : vector<8xf32>
    %98 = vector.multi_reduction <add>, %97, %cst_31 [1] : vector<8x8xf32> to vector<8xf32>
    %99 = vector.shape_cast %98 : vector<8xf32> to vector<8x1xf32>
    %100 = tpu.reciprocal %99 {approx = true} : vector<8x1xf32> -> vector<8x1xf32>
    %101 = vector.broadcast %100 : vector<8x1xf32> to vector<8x8xf32>
    %102 = arith.mulf %97, %101 : vector<8x8xf32>
    %103 = arith.truncf %102 : vector<8x8xf32> to vector<8x8xbf16>
    %cst_32 = arith.constant dense<0.000000e+00> : vector<8x8xf32>
    %104 = tpu.matmul %103, %89, %cst_32 {dimension_numbers = #tpu.dot_dimension_numbers<[1], [0], [0], [1], [0, 0, 1, 1], [], []>} : vector<8x8xbf16>, vector<8x8xbf16>, vector<8x8xf32> -> vector<8x8xf32>
    %c0_33 = arith.constant 0 : index
    %c24 = arith.constant 24 : index
    %105 = vector.load %arg16[%c0_33, %c24] : memref<8x32xf32, #tpu.memory_space<vmem>>, vector<8x8xf32>
    tpu.vector_store %arg16[%c0_33, %c24], %104 {strides = array<i32>} : memref<8x32xf32, #tpu.memory_space<vmem>>, vector<8x8xf32>,
    %c0_34 = arith.constant 0 : index
    %c0_35 = arith.constant 0 : index
    %106 = vector.load %arg16[%c0_34, %c0_35] : memref<8x32xf32, #tpu.memory_space<vmem>>, vector<8x32xf32>
    %107 = arith.truncf %106 : vector<8x32xf32> to vector<8x32xbf16>
    %c0_36 = arith.constant 0 : index
    %c0_37 = arith.constant 0 : index
    %108 = vector.load %arg5[%c0_36, %c0_37] : memref<32x32xbf16, #tpu.memory_space<vmem>>, vector<32x32xbf16>
    %cst_38 = arith.constant dense<0.000000e+00> : vector<8x32xf32>
    %109 = tpu.matmul %107, %108, %cst_38 {dimension_numbers = #tpu.dot_dimension_numbers<[1], [0], [0], [1], [0, 0, 1, 1], [], []>} : vector<8x32xbf16>, vector<32x32xbf16>, vector<8x32xf32> -> vector<8x32xf32>
    %c0_39 = arith.constant 0 : index
    %c0_40 = arith.constant 0 : index
    %110 = vector.load %arg6[%c0_39, %c0_40] : memref<1x32xf32, #tpu.memory_space<vmem>>, vector<1x32xf32>
    %111 = vector.broadcast %110 : vector<1x32xf32> to vector<8x32xf32>
    %112 = arith.addf %109, %111 : vector<8x32xf32>
    %113 = arith.addf %112, %1 : vector<8x32xf32>
    %c0_41 = arith.constant 0 : index
    %c0_42 = arith.constant 0 : index
    %114 = vector.load %arg7[%c0_41, %c0_42] : memref<1x32xf32, #tpu.memory_space<vmem>>, vector<1x32xf32>
    %c0_43 = arith.constant 0 : index
    %c0_44 = arith.constant 0 : index
    %115 = vector.load %arg8[%c0_43, %c0_44] : memref<1x32xf32, #tpu.memory_space<vmem>>, vector<1x32xf32>
    %cst_45 = arith.constant dense<0.000000e+00> : vector<8xf32>
    %116 = vector.multi_reduction <add>, %113, %cst_45 [1] : vector<8x32xf32> to vector<8xf32>
    %117 = vector.shape_cast %116 : vector<8xf32> to vector<8x1xf32>
    %cst_46 = arith.constant 3.200000e+01 : f32
    %118 = vector.broadcast %cst_46 : f32 to vector<8x1xf32>
    %119 = arith.divf %117, %118 : vector<8x1xf32>
    %120 = vector.broadcast %119 : vector<8x1xf32> to vector<8x32xf32>
    %121 = arith.subf %113, %120 : vector<8x32xf32>
    %122 = arith.mulf %121, %121 : vector<8x32xf32>
    %cst_47 = arith.constant dense<0.000000e+00> : vector<8xf32>
    %123 = vector.multi_reduction <add>, %122, %cst_47 [1] : vector<8x32xf32> to vector<8xf32>
    %124 = vector.shape_cast %123 : vector<8xf32> to vector<8x1xf32>
    %cst_48 = arith.constant 3.200000e+01 : f32
    %125 = vector.broadcast %cst_48 : f32 to vector<8x1xf32>
    %126 = arith.divf %124, %125 : vector<8x1xf32>
    %127 = vector.broadcast %119 : vector<8x1xf32> to vector<8x32xf32>
    %128 = arith.subf %113, %127 : vector<8x32xf32>
    %cst_49 = arith.constant 9.99999996E-13 : f32
    %129 = vector.broadcast %cst_49 : f32 to vector<8x1xf32>
    %130 = arith.addf %126, %129 : vector<8x1xf32>
    %131 = math.rsqrt %130 : vector<8x1xf32>
    %132 = vector.broadcast %131 : vector<8x1xf32> to vector<8x32xf32>
    %133 = arith.mulf %128, %132 : vector<8x32xf32>
    %134 = vector.broadcast %114 : vector<1x32xf32> to vector<8x32xf32>
    %135 = arith.mulf %133, %134 : vector<8x32xf32>
    %136 = vector.broadcast %115 : vector<1x32xf32> to vector<8x32xf32>
    %137 = arith.addf %135, %136 : vector<8x32xf32>
    %138 = arith.truncf %137 : vector<8x32xf32> to vector<8x32xbf16>
    %c0_50 = arith.constant 0 : index
    %c0_51 = arith.constant 0 : index
    %139 = vector.load %arg9[%c0_50, %c0_51] : memref<32x128xbf16, #tpu.memory_space<vmem>>, vector<32x128xbf16>
    %cst_52 = arith.constant dense<0.000000e+00> : vector<8x128xf32>
    %140 = tpu.matmul %138, %139, %cst_52 {dimension_numbers = #tpu.dot_dimension_numbers<[1], [0], [0], [1], [0, 0, 1, 1], [], []>} : vector<8x32xbf16>, vector<32x128xbf16>, vector<8x128xf32> -> vector<8x128xf32>
    %c0_53 = arith.constant 0 : index
    %c0_54 = arith.constant 0 : index
    %141 = vector.load %arg10[%c0_53, %c0_54] : memref<1x128xf32, #tpu.memory_space<vmem>>, vector<1x128xf32>
    %142 = vector.broadcast %141 : vector<1x128xf32> to vector<8x128xf32>
    %143 = arith.addf %140, %142 : vector<8x128xf32>
    %cst_55 = arith.constant 5.000000e-01 : f32
    %144 = vector.broadcast %cst_55 : f32 to vector<8x128xf32>
    %145 = arith.mulf %144, %143 : vector<8x128xf32>
    %cst_56 = arith.constant 0.707106769 : f32
    %146 = vector.broadcast %cst_56 : f32 to vector<8x128xf32>
    %147 = arith.mulf %143, %146 : vector<8x128xf32>
    %148 = math.erf %147 : vector<8x128xf32>
    %cst_57 = arith.constant 1.000000e+00 : f32
    %149 = vector.broadcast %cst_57 : f32 to vector<8x128xf32>
    %150 = arith.addf %149, %148 : vector<8x128xf32>
    %151 = arith.mulf %145, %150 : vector<8x128xf32>
    %152 = arith.truncf %151 : vector<8x128xf32> to vector<8x128xbf16>
    %c0_58 = arith.constant 0 : index
    %c0_59 = arith.constant 0 : index
    %153 = vector.load %arg11[%c0_58, %c0_59] : memref<128x32xbf16, #tpu.memory_space<vmem>>, vector<128x32xbf16>
    %cst_60 = arith.constant dense<0.000000e+00> : vector<8x32xf32>
    %154 = tpu.matmul %152, %153, %cst_60 {dimension_numbers = #tpu.dot_dimension_numbers<[1], [0], [0], [1], [0, 0, 1, 1], [], []>} : vector<8x128xbf16>, vector<128x32xbf16>, vector<8x32xf32> -> vector<8x32xf32>
    %c0_61 = arith.constant 0 : index
    %c0_62 = arith.constant 0 : index
    %155 = vector.load %arg12[%c0_61, %c0_62] : memref<1x32xf32, #tpu.memory_space<vmem>>, vector<1x32xf32>
    %156 = vector.broadcast %155 : vector<1x32xf32> to vector<8x32xf32>
    %157 = arith.addf %154, %156 : vector<8x32xf32>
    %158 = arith.addf %157, %137 : vector<8x32xf32>
    %c0_63 = arith.constant 0 : index
    %c0_64 = arith.constant 0 : index
    %159 = vector.load %arg13[%c0_63, %c0_64] : memref<1x32xf32, #tpu.memory_space<vmem>>, vector<1x32xf32>
    %c0_65 = arith.constant 0 : index
    %c0_66 = arith.constant 0 : index
    %160 = vector.load %arg14[%c0_65, %c0_66] : memref<1x32xf32, #tpu.memory_space<vmem>>, vector<1x32xf32>
    %cst_67 = arith.constant dense<0.000000e+00> : vector<8xf32>
    %161 = vector.multi_reduction <add>, %158, %cst_67 [1] : vector<8x32xf32> to vector<8xf32>
    %162 = vector.shape_cast %161 : vector<8xf32> to vector<8x1xf32>
    %cst_68 = arith.constant 3.200000e+01 : f32
    %163 = vector.broadcast %cst_68 : f32 to vector<8x1xf32>
    %164 = arith.divf %162, %163 : vector<8x1xf32>
    %165 = vector.broadcast %164 : vector<8x1xf32> to vector<8x32xf32>
    %166 = arith.subf %158, %165 : vector<8x32xf32>
    %167 = arith.mulf %166, %166 : vector<8x32xf32>
    %cst_69 = arith.constant dense<0.000000e+00> : vector<8xf32>
    %168 = vector.multi_reduction <add>, %167, %cst_69 [1] : vector<8x32xf32> to vector<8xf32>
    %169 = vector.shape_cast %168 : vector<8xf32> to vector<8x1xf32>
    %cst_70 = arith.constant 3.200000e+01 : f32
    %170 = vector.broadcast %cst_70 : f32 to vector<8x1xf32>
    %171 = arith.divf %169, %170 : vector<8x1xf32>
    %172 = vector.broadcast %164 : vector<8x1xf32> to vector<8x32xf32>
    %173 = arith.subf %158, %172 : vector<8x32xf32>
    %cst_71 = arith.constant 9.99999996E-13 : f32
    %174 = vector.broadcast %cst_71 : f32 to vector<8x1xf32>
    %175 = arith.addf %171, %174 : vector<8x1xf32>
    %176 = math.rsqrt %175 : vector<8x1xf32>
    %177 = vector.broadcast %176 : vector<8x1xf32> to vector<8x32xf32>
    %178 = arith.mulf %173, %177 : vector<8x32xf32>
    %179 = vector.broadcast %159 : vector<1x32xf32> to vector<8x32xf32>
    %180 = arith.mulf %178, %179 : vector<8x32xf32>
    %181 = vector.broadcast %160 : vector<1x32xf32> to vector<8x32xf32>
    %182 = arith.addf %180, %181 : vector<8x32xf32>
    %c0_72 = arith.constant 0 : index
    %c0_73 = arith.constant 0 : index
    %c0_74 = arith.constant 0 : index
    %183 = vector.load %arg15[%c0_72, %c0_73, %c0_74] : memref<1x8x32xf32, #tpu.memory_space<vmem>>, vector<1x8x32xf32>
    %184 = vector.shape_cast %183 : vector<1x8x32xf32> to vector<8x32xf32>
    %185 = vector.shape_cast %182 : vector<8x32xf32> to vector<1x8x32xf32>
    tpu.vector_store %arg15[%c0_72, %c0_73, %c0_74], %185 {strides = array<i32>} : memref<1x8x32xf32, #tpu.memory_space<vmem>>, vector<1x8x32xf32>,
    return
  }
  func.func @transform_0(%arg0: i32) -> (i32, i32, i32) {
    %c0_i32 = arith.constant 0 : i32
    %c0_i32_0 = arith.constant 0 : i32
    %c0_i32_1 = arith.constant 0 : i32
    return %arg0, %c0_i32, %c0_i32_0 : i32, i32, i32
  }
  func.func @transform_1(%arg0: i32) -> (i32, i32, i32) {
    %c0_i32 = arith.constant 0 : i32
    %c0_i32_0 = arith.constant 0 : i32
    %c0_i32_1 = arith.constant 0 : i32
    return %arg0, %c0_i32, %c0_i32_0 : i32, i32, i32
  }
  func.func @transform_2(%arg0: i32) -> (i32, i32) {
    %c0_i32 = arith.constant 0 : i32
    %c0_i32_0 = arith.constant 0 : i32
    %c0_i32_1 = arith.constant 0 : i32
    return %c0_i32, %c0_i32_0 : i32, i32
  }
  func.func @transform_3(%arg0: i32) -> (i32, i32) {
    %c0_i32 = arith.constant 0 : i32
    %c0_i32_0 = arith.constant 0 : i32
    %c0_i32_1 = arith.constant 0 : i32
    return %c0_i32, %c0_i32_0 : i32, i32
  }
  func.func @transform_4(%arg0: i32) -> (i32, i32) {
    %c0_i32 = arith.constant 0 : i32
    %c0_i32_0 = arith.constant 0 : i32
    %c0_i32_1 = arith.constant 0 : i32
    return %c0_i32, %c0_i32_0 : i32, i32
  }
  func.func @transform_5(%arg0: i32) -> (i32, i32) {
    %c0_i32 = arith.constant 0 : i32
    %c0_i32_0 = arith.constant 0 : i32
    %c0_i32_1 = arith.constant 0 : i32
    return %c0_i32, %c0_i32_0 : i32, i32
  }
  func.func @transform_6(%arg0: i32) -> (i32, i32) {
    %c0_i32 = arith.constant 0 : i32
    %c0_i32_0 = arith.constant 0 : i32
    %c0_i32_1 = arith.constant 0 : i32
    return %c0_i32, %c0_i32_0 : i32, i32
  }
  func.func @transform_7(%arg0: i32) -> (i32, i32) {
    %c0_i32 = arith.constant 0 : i32
    %c0_i32_0 = arith.constant 0 : i32
    %c0_i32_1 = arith.constant 0 : i32
    return %c0_i32, %c0_i32_0 : i32, i32
  }
  func.func @transform_8(%arg0: i32) -> (i32, i32) {
    %c0_i32 = arith.constant 0 : i32
    %c0_i32_0 = arith.constant 0 : i32
    %c0_i32_1 = arith.constant 0 : i32
    return %c0_i32, %c0_i32_0 : i32, i32
  }
  func.func @transform_9(%arg0: i32) -> (i32, i32) {
    %c0_i32 = arith.constant 0 : i32
    %c0_i32_0 = arith.constant 0 : i32
    %c0_i32_1 = arith.constant 0 : i32
    return %c0_i32, %c0_i32_0 : i32, i32
  }
  func.func @transform_10(%arg0: i32) -> (i32, i32) {
    %c0_i32 = arith.constant 0 : i32
    %c0_i32_0 = arith.constant 0 : i32
    %c0_i32_1 = arith.constant 0 : i32
    return %c0_i32, %c0_i32_0 : i32, i32
  }
  func.func @transform_11(%arg0: i32) -> (i32, i32) {
    %c0_i32 = arith.constant 0 : i32
    %c0_i32_0 = arith.constant 0 : i32
    %c0_i32_1 = arith.constant 0 : i32
    return %c0_i32, %c0_i32_0 : i32, i32
  }
  func.func @transform_12(%arg0: i32) -> (i32, i32) {
    %c0_i32 = arith.constant 0 : i32
    %c0_i32_0 = arith.constant 0 : i32
    %c0_i32_1 = arith.constant 0 : i32
    return %c0_i32, %c0_i32_0 : i32, i32
  }
  func.func @transform_13(%arg0: i32) -> (i32, i32) {
    %c0_i32 = arith.constant 0 : i32
    %c0_i32_0 = arith.constant 0 : i32
    %c0_i32_1 = arith.constant 0 : i32
    return %c0_i32, %c0_i32_0 : i32, i32
  }
  func.func @transform_14(%arg0: i32) -> (i32, i32, i32) {
    %c0_i32 = arith.constant 0 : i32
    %c0_i32_0 = arith.constant 0 : i32
    %c0_i32_1 = arith.constant 0 : i32
    return %arg0, %c0_i32, %c0_i32_0 : i32, i32, i32
  }
}

module attributes {stable_mosaic.version = 11 : i64} {
  func.func @head_kernel(%arg0: memref<8x32xf32, #tpu.memory_space<vmem>>, %arg1: memref<32x32xbf16, #tpu.memory_space<vmem>>, %arg2: memref<1x32xf32, #tpu.memory_space<vmem>>, %arg3: memref<32x128xbf16, #tpu.memory_space<vmem>>, %arg4: memref<1x128xf32, #tpu.memory_space<vmem>>, %arg5: memref<8x128xf32, #tpu.memory_space<vmem>>) attributes {dimension_semantics = [], scalar_prefetch = 0 : i64, scratch_operands = 0 : i64, tpu.core_type = #tpu.core_type<tc>} {
    %c0 = arith.constant 0 : index
    %c0_0 = arith.constant 0 : index
    %0 = vector.load %arg0[%c0, %c0_0] : memref<8x32xf32, #tpu.memory_space<vmem>>, vector<8x32xf32>
    %1 = arith.truncf %0 : vector<8x32xf32> to vector<8x32xbf16>
    %c0_1 = arith.constant 0 : index
    %c0_2 = arith.constant 0 : index
    %2 = vector.load %arg1[%c0_1, %c0_2] : memref<32x32xbf16, #tpu.memory_space<vmem>>, vector<32x32xbf16>
    %cst = arith.constant dense<0.000000e+00> : vector<8x32xf32>
    %3 = tpu.matmul %1, %2, %cst {dimension_numbers = #tpu.dot_dimension_numbers<[1], [0], [0], [1], [0, 0, 1, 1], [], []>} : vector<8x32xbf16>, vector<32x32xbf16>, vector<8x32xf32> -> vector<8x32xf32>
    %c0_3 = arith.constant 0 : index
    %c0_4 = arith.constant 0 : index
    %4 = vector.load %arg2[%c0_3, %c0_4] : memref<1x32xf32, #tpu.memory_space<vmem>>, vector<1x32xf32>
    %5 = vector.broadcast %4 : vector<1x32xf32> to vector<8x32xf32>
    %6 = arith.addf %3, %5 : vector<8x32xf32>
    %7 = math.tanh %6 : vector<8x32xf32>
    %8 = arith.truncf %7 : vector<8x32xf32> to vector<8x32xbf16>
    %c0_5 = arith.constant 0 : index
    %c0_6 = arith.constant 0 : index
    %9 = vector.load %arg3[%c0_5, %c0_6] : memref<32x128xbf16, #tpu.memory_space<vmem>>, vector<32x128xbf16>
    %cst_7 = arith.constant dense<0.000000e+00> : vector<8x128xf32>
    %10 = tpu.matmul %8, %9, %cst_7 {dimension_numbers = #tpu.dot_dimension_numbers<[1], [0], [0], [1], [0, 0, 1, 1], [], []>} : vector<8x32xbf16>, vector<32x128xbf16>, vector<8x128xf32> -> vector<8x128xf32>
    %c0_8 = arith.constant 0 : index
    %c0_9 = arith.constant 0 : index
    %11 = vector.load %arg4[%c0_8, %c0_9] : memref<1x128xf32, #tpu.memory_space<vmem>>, vector<1x128xf32>
    %12 = vector.broadcast %11 : vector<1x128xf32> to vector<8x128xf32>
    %13 = arith.addf %10, %12 : vector<8x128xf32>
    %c0_10 = arith.constant 0 : index
    %c0_11 = arith.constant 0 : index
    %14 = vector.load %arg5[%c0_10, %c0_11] : memref<8x128xf32, #tpu.memory_space<vmem>>, vector<8x128xf32>
    tpu.vector_store %arg5[%c0_10, %c0_11], %13 {strides = array<i32>} : memref<8x128xf32, #tpu.memory_space<vmem>>, vector<8x128xf32>,
    return
  }
}

module attributes {stable_mosaic.version = 11 : i64} {
  func.func @encoder_layer_kernel(%arg0: i32, %arg1: memref<1x8x32xf32, #tpu.memory_space<vmem>>, %arg2: memref<1x1x8xf32, #tpu.memory_space<vmem>>, %arg3: memref<1x32xf32, #tpu.memory_space<vmem>>, %arg4: memref<1x32xf32, #tpu.memory_space<vmem>>, %arg5: memref<32x96xbf16, #tpu.memory_space<vmem>>, %arg6: memref<1x96xf32, #tpu.memory_space<vmem>>, %arg7: memref<32x32xbf16, #tpu.memory_space<vmem>>, %arg8: memref<1x32xf32, #tpu.memory_space<vmem>>, %arg9: memref<1x32xf32, #tpu.memory_space<vmem>>, %arg10: memref<1x32xf32, #tpu.memory_space<vmem>>, %arg11: memref<32x128xbf16, #tpu.memory_space<vmem>>, %arg12: memref<1x128xf32, #tpu.memory_space<vmem>>, %arg13: memref<128x32xbf16, #tpu.memory_space<vmem>>, %arg14: memref<1x32xf32, #tpu.memory_space<vmem>>, %arg15: memref<1x32xf32, #tpu.memory_space<vmem>>, %arg16: memref<1x32xf32, #tpu.memory_space<vmem>>, %arg17: memref<1x8x32xf32, #tpu.memory_space<vmem>>, %arg18: memref<8x32xf32, #tpu.memory_space<vmem>>) attributes {dimension_semantics = [#tpu.dimension_semantics<parallel>], iteration_bounds = array<i64: 2>, scalar_prefetch = 0 : i64, scratch_operands = 1 : i64, tpu.core_type = #tpu.core_type<tc>, window_params = [{transform_indices = @transform_0, window_bounds = array<i64: 1, 8, 32>}, {transform_indices = @transform_1, window_bounds = array<i64: 1, 1, 8>}, {pipeline_mode = #tpu.pipeline_mode<synchronous>, transform_indices = @transform_2, window_bounds = array<i64: 1, 32>}, {pipeline_mode = #tpu.pipeline_mode<synchronous>, transform_indices = @transform_3, window_bounds = array<i64: 1, 32>}, {pipeline_mode = #tpu.pipeline_mode<synchronous>, transform_indices = @transform_4, window_bounds = array<i64: 32, 96>}, {pipeline_mode = #tpu.pipeline_mode<synchronous>, transform_indices = @transform_5, window_bounds = array<i64: 1, 96>}, {pipeline_mode = #tpu.pipeline_mode<synchronous>, transform_indices = @transform_6, window_bounds = array<i64: 32, 32>}, {pipeline_mode = #tpu.pipeline_mode<synchronous>, transform_indices = @transform_7, window_bounds = array<i64: 1, 32>}, {pipeline_mode = #tpu.pipeline_mode<synchronous>, transform_indices = @transform_8, window_bounds = array<i64: 1, 32>}, {pipeline_mode = #tpu.pipeline_mode<synchronous>, transform_indices = @transform_9, window_bounds = array<i64: 1, 32>}, {pipeline_mode = #tpu.pipeline_mode<synchronous>, transform_indices = @transform_10, window_bounds = array<i64: 32, 128>}, {pipeline_mode = #tpu.pipeline_mode<synchronous>, transform_indices = @transform_11, window_bounds = array<i64: 1, 128>}, {pipeline_mode = #tpu.pipeline_mode<synchronous>, transform_indices = @transform_12, window_bounds = array<i64: 128, 32>}, {pipeline_mode = #tpu.pipeline_mode<synchronous>, transform_indices = @transform_13, window_bounds = array<i64: 1, 32>}, {pipeline_mode = #tpu.pipeline_mode<synchronous>, transform_indices = @transform_14, window_bounds = array<i64: 1, 32>}, {pipeline_mode = #tpu.pipeline_mode<synchronous>, transform_indices = @transform_15, window_bounds = array<i64: 1, 32>}, {transform_indices = @transform_16, window_bounds = array<i64: 1, 8, 32>}]} {
    %c0 = arith.constant 0 : index
    %c0_0 = arith.constant 0 : index
    %c0_1 = arith.constant 0 : index
    %0 = vector.load %arg1[%c0, %c0_0, %c0_1] : memref<1x8x32xf32, #tpu.memory_space<vmem>>, vector<1x8x32xf32>
    %1 = vector.shape_cast %0 : vector<1x8x32xf32> to vector<8x32xf32>
    %c0_2 = arith.constant 0 : index
    %c0_3 = arith.constant 0 : index
    %2 = vector.load %arg3[%c0_2, %c0_3] : memref<1x32xf32, #tpu.memory_space<vmem>>, vector<1x32xf32>
    %c0_4 = arith.constant 0 : index
    %c0_5 = arith.constant 0 : index
    %3 = vector.load %arg4[%c0_4, %c0_5] : memref<1x32xf32, #tpu.memory_space<vmem>>, vector<1x32xf32>
    %cst = arith.constant dense<0.000000e+00> : vector<8xf32>
    %4 = vector.multi_reduction <add>, %1, %cst [1] : vector<8x32xf32> to vector<8xf32>
    %5 = vector.shape_cast %4 : vector<8xf32> to vector<8x1xf32>
    %cst_6 = arith.constant 3.200000e+01 : f32
    %6 = vector.broadcast %cst_6 : f32 to vector<8x1xf32>
    %7 = arith.divf %5, %6 : vector<8x1xf32>
    %8 = vector.broadcast %7 : vector<8x1xf32> to vector<8x32xf32>
    %9 = arith.subf %1, %8 : vector<8x32xf32>
    %10 = arith.mulf %9, %9 : vector<8x32xf32>
    %cst_7 = arith.constant dense<0.000000e+00> : vector<8xf32>
    %11 = vector.multi_reduction <add>, %10, %cst_7 [1] : vector<8x32xf32> to vector<8xf32>
    %12 = vector.shape_cast %11 : vector<8xf32> to vector<8x1xf32>
    %cst_8 = arith.constant 3.200000e+01 : f32
    %13 = vector.broadcast %cst_8 : f32 to vector<8x1xf32>
    %14 = arith.divf %12, %13 : vector<8x1xf32>
    %15 = vector.broadcast %7 : vector<8x1xf32> to vector<8x32xf32>
    %16 = arith.subf %1, %15 : vector<8x32xf32>
    %cst_9 = arith.constant 9.99999996E-13 : f32
    %17 = vector.broadcast %cst_9 : f32 to vector<8x1xf32>
    %18 = arith.addf %14, %17 : vector<8x1xf32>
    %19 = math.rsqrt %18 : vector<8x1xf32>
    %20 = vector.broadcast %19 : vector<8x1xf32> to vector<8x32xf32>
    %21 = arith.mulf %16, %20 : vector<8x32xf32>
    %22 = vector.broadcast %2 : vector<1x32xf32> to vector<8x32xf32>
    %23 = arith.mulf %21, %22 : vector<8x32xf32>
    %24 = vector.broadcast %3 : vector<1x32xf32> to vector<8x32xf32>
    %25 = arith.addf %23, %24 : vector<8x32xf32>
    %26 = arith.truncf %25 : vector<8x32xf32> to vector<8x32xbf16>
    %c0_10 = arith.constant 0 : index
    %c0_11 = arith.constant 0 : index
    %27 = vector.load %arg5[%c0_10, %c0_11] : memref<32x96xbf16, #tpu.memory_space<vmem>>, vector<32x96xbf16>
    %cst_12 = arith.constant dense<0.000000e+00> : vector<8x96xf32>
    %28 = tpu.matmul %26, %27, %cst_12 {dimension_numbers = #tpu.dot_dimension_numbers<[1], [0], [0], [1], [0, 0, 1, 1], [], []>} : vector<8x32xbf16>, vector<32x96xbf16>, vector<8x96xf32> -> vector<8x96xf32>
    %c0_13 = arith.constant 0 : index
    %c0_14 = arith.constant 0 : index
    %29 = vector.load %arg6[%c0_13, %c0_14] : memref<1x96xf32, #tpu.memory_space<vmem>>, vector<1x96xf32>
    %30 = vector.broadcast %29 : vector<1x96xf32> to vector<8x96xf32>
    %31 = arith.addf %28, %30 : vector<8x96xf32>
    %c0_15 = arith.constant 0 : index
    %c0_16 = arith.constant 0 : index
    %c0_17 = arith.constant 0 : index
    %32 = vector.load %arg2[%c0_15, %c0_16, %c0_17] : memref<1x1x8xf32, #tpu.memory_space<vmem>>, vector<1x1x8xf32>
    %33 = vector.shape_cast %32 : vector<1x1x8xf32> to vector<1x8xf32>
    %34 = vector.extract_strided_slice %31 {offsets = [0, 0], sizes = [8, 8], strides = [1, 1]} : vector<8x96xf32> to vector<8x8xf32>
    %cst_18 = arith.constant 0.353553385 : f32
    %35 = vector.broadcast %cst_18 : f32 to vector<8x8xf32>
    %36 = arith.mulf %34, %35 : vector<8x8xf32>
    %37 = arith.truncf %36 : vector<8x8xf32> to vector<8x8xbf16>
    %38 = vector.extract_strided_slice %31 {offsets = [0, 32], sizes = [8, 8], strides = [1, 1]} : vector<8x96xf32> to vector<8x8xf32>
    %39 = arith.truncf %38 : vector<8x8xf32> to vector<8x8xbf16>
    %40 = vector.extract_strided_slice %31 {offsets = [0, 64], sizes = [8, 8], strides = [1, 1]} : vector<8x96xf32> to vector<8x8xf32>
    %41 = arith.truncf %40 : vector<8x8xf32> to vector<8x8xbf16>
    %cst_19 = arith.constant dense<0.000000e+00> : vector<8x8xf32>
    %42 = tpu.matmul %37, %39, %cst_19 {dimension_numbers = #tpu.dot_dimension_numbers<[1], [1], [0], [0], [0, 0, 1, 0], [], []>} : vector<8x8xbf16>, vector<8x8xbf16>, vector<8x8xf32> -> vector<8x8xf32>
    %43 = vector.broadcast %33 : vector<1x8xf32> to vector<8x8xf32>
    %44 = arith.addf %42, %43 : vector<8x8xf32>
    %cst_20 = arith.constant dense<0xFF800000> : vector<8xf32>
    %45 = vector.multi_reduction <maximumf>, %44, %cst_20 [1] : vector<8x8xf32> to vector<8xf32>
    %46 = vector.shape_cast %45 : vector<8xf32> to vector<8x1xf32>
    %47 = vector.broadcast %46 : vector<8x1xf32> to vector<8x8xf32>
    %48 = arith.subf %44, %47 : vector<8x8xf32>
    %49 = math.exp %48 : vector<8x8xf32>
    %cst_21 = arith.constant dense<0.000000e+00> : vector<8xf32>
    %50 = vector.multi_reduction <add>, %49, %cst_21 [1] : vector<8x8xf32> to vector<8xf32>
    %51 = vector.shape_cast %50 : vector<8xf32> to vector<8x1xf32>
    %52 = tpu.reciprocal %51 {approx = true} : vector<8x1xf32> -> vector<8x1xf32>
    %53 = vector.broadcast %52 : vector<8x1xf32> to vector<8x8xf32>
    %54 = arith.mulf %49, %53 : vector<8x8xf32>
    %55 = arith.truncf %54 : vector<8x8xf32> to vector<8x8xbf16>
    %cst_22 = arith.constant dense<0.000000e+00> : vector<8x8xf32>
    %56 = tpu.matmul %55, %41, %cst_22 {dimension_numbers = #tpu.dot_dimension_numbers<[1], [0], [0], [1], [0, 0, 1, 1], [], []>} : vector<8x8xbf16>, vector<8x8xbf16>, vector<8x8xf32> -> vector<8x8xf32>
    %c0_23 = arith.constant 0 : index
    %c0_24 = arith.constant 0 : index
    %57 = vector.load %arg18[%c0_23, %c0_24] : memref<8x32xf32, #tpu.memory_space<vmem>>, vector<8x8xf32>
    tpu.vector_store %arg18[%c0_23, %c0_24], %56 {strides = array<i32>} : memref<8x32xf32, #tpu.memory_space<vmem>>, vector<8x8xf32>,
    %58 = vector.extract_strided_slice %31 {offsets = [0, 8], sizes = [8, 8], strides = [1, 1]} : vector<8x96xf32> to vector<8x8xf32>
    %cst_25 = arith.constant 0.353553385 : f32
    %59 = vector.broadcast %cst_25 : f32 to vector<8x8xf32>
    %60 = arith.mulf %58, %59 : vector<8x8xf32>
    %61 = arith.truncf %60 : vector<8x8xf32> to vector<8x8xbf16>
    %62 = vector.extract_strided_slice %31 {offsets = [0, 40], sizes = [8, 8], strides = [1, 1]} : vector<8x96xf32> to vector<8x8xf32>
    %63 = arith.truncf %62 : vector<8x8xf32> to vector<8x8xbf16>
    %64 = vector.extract_strided_slice %31 {offsets = [0, 72], sizes = [8, 8], strides = [1, 1]} : vector<8x96xf32> to vector<8x8xf32>
    %65 = arith.truncf %64 : vector<8x8xf32> to vector<8x8xbf16>
    %cst_26 = arith.constant dense<0.000000e+00> : vector<8x8xf32>
    %66 = tpu.matmul %61, %63, %cst_26 {dimension_numbers = #tpu.dot_dimension_numbers<[1], [1], [0], [0], [0, 0, 1, 0], [], []>} : vector<8x8xbf16>, vector<8x8xbf16>, vector<8x8xf32> -> vector<8x8xf32>
    %67 = vector.broadcast %33 : vector<1x8xf32> to vector<8x8xf32>
    %68 = arith.addf %66, %67 : vector<8x8xf32>
    %cst_27 = arith.constant dense<0xFF800000> : vector<8xf32>
    %69 = vector.multi_reduction <maximumf>, %68, %cst_27 [1] : vector<8x8xf32> to vector<8xf32>
    %70 = vector.shape_cast %69 : vector<8xf32> to vector<8x1xf32>
    %71 = vector.broadcast %70 : vector<8x1xf32> to vector<8x8xf32>
    %72 = arith.subf %68, %71 : vector<8x8xf32>
    %73 = math.exp %72 : vector<8x8xf32>
    %cst_28 = arith.constant dense<0.000000e+00> : vector<8xf32>
    %74 = vector.multi_reduction <add>, %73, %cst_28 [1] : vector<8x8xf32> to vector<8xf32>
    %75 = vector.shape_cast %74 : vector<8xf32> to vector<8x1xf32>
    %76 = tpu.reciprocal %75 {approx = true} : vector<8x1xf32> -> vector<8x1xf32>
    %77 = vector.broadcast %76 : vector<8x1xf32> to vector<8x8xf32>
    %78 = arith.mulf %73, %77 : vector<8x8xf32>
    %79 = arith.truncf %78 : vector<8x8xf32> to vector<8x8xbf16>
    %cst_29 = arith.constant dense<0.000000e+00> : vector<8x8xf32>
    %80 = tpu.matmul %79, %65, %cst_29 {dimension_numbers = #tpu.dot_dimension_numbers<[1], [0], [0], [1], [0, 0, 1, 1], [], []>} : vector<8x8xbf16>, vector<8x8xbf16>, vector<8x8xf32> -> vector<8x8xf32>
    %c0_30 = arith.constant 0 : index
    %c8 = arith.constant 8 : index
    %81 = vector.load %arg18[%c0_30, %c8] : memref<8x32xf32, #tpu.memory_space<vmem>>, vector<8x8xf32>
    tpu.vector_store %arg18[%c0_30, %c8], %80 {strides = array<i32>} : memref<8x32xf32, #tpu.memory_space<vmem>>, vector<8x8xf32>,
    %82 = vector.extract_strided_slice %31 {offsets = [0, 16], sizes = [8, 8], strides = [1, 1]} : vector<8x96xf32> to vector<8x8xf32>
    %cst_31 = arith.constant 0.353553385 : f32
    %83 = vector.broadcast %cst_31 : f32 to vector<8x8xf32>
    %84 = arith.mulf %82, %83 : vector<8x8xf32>
    %85 = arith.truncf %84 : vector<8x8xf32> to vector<8x8xbf16>
    %86 = vector.extract_strided_slice %31 {offsets = [0, 48], sizes = [8, 8], strides = [1, 1]} : vector<8x96xf32> to vector<8x8xf32>
    %87 = arith.truncf %86 : vector<8x8xf32> to vector<8x8xbf16>
    %88 = vector.extract_strided_slice %31 {offsets = [0, 80], sizes = [8, 8], strides = [1, 1]} : vector<8x96xf32> to vector<8x8xf32>
    %89 = arith.truncf %88 : vector<8x8xf32> to vector<8x8xbf16>
    %cst_32 = arith.constant dense<0.000000e+00> : vector<8x8xf32>
    %90 = tpu.matmul %85, %87, %cst_32 {dimension_numbers = #tpu.dot_dimension_numbers<[1], [1], [0], [0], [0, 0, 1, 0], [], []>} : vector<8x8xbf16>, vector<8x8xbf16>, vector<8x8xf32> -> vector<8x8xf32>
    %91 = vector.broadcast %33 : vector<1x8xf32> to vector<8x8xf32>
    %92 = arith.addf %90, %91 : vector<8x8xf32>
    %cst_33 = arith.constant dense<0xFF800000> : vector<8xf32>
    %93 = vector.multi_reduction <maximumf>, %92, %cst_33 [1] : vector<8x8xf32> to vector<8xf32>
    %94 = vector.shape_cast %93 : vector<8xf32> to vector<8x1xf32>
    %95 = vector.broadcast %94 : vector<8x1xf32> to vector<8x8xf32>
    %96 = arith.subf %92, %95 : vector<8x8xf32>
    %97 = math.exp %96 : vector<8x8xf32>
    %cst_34 = arith.constant dense<0.000000e+00> : vector<8xf32>
    %98 = vector.multi_reduction <add>, %97, %cst_34 [1] : vector<8x8xf32> to vector<8xf32>
    %99 = vector.shape_cast %98 : vector<8xf32> to vector<8x1xf32>
    %100 = tpu.reciprocal %99 {approx = true} : vector<8x1xf32> -> vector<8x1xf32>
    %101 = vector.broadcast %100 : vector<8x1xf32> to vector<8x8xf32>
    %102 = arith.mulf %97, %101 : vector<8x8xf32>
    %103 = arith.truncf %102 : vector<8x8xf32> to vector<8x8xbf16>
    %cst_35 = arith.constant dense<0.000000e+00> : vector<8x8xf32>
    %104 = tpu.matmul %103, %89, %cst_35 {dimension_numbers = #tpu.dot_dimension_numbers<[1], [0], [0], [1], [0, 0, 1, 1], [], []>} : vector<8x8xbf16>, vector<8x8xbf16>, vector<8x8xf32> -> vector<8x8xf32>
    %c0_36 = arith.constant 0 : index
    %c16 = arith.constant 16 : index
    %105 = vector.load %arg18[%c0_36, %c16] : memref<8x32xf32, #tpu.memory_space<vmem>>, vector<8x8xf32>
    tpu.vector_store %arg18[%c0_36, %c16], %104 {strides = array<i32>} : memref<8x32xf32, #tpu.memory_space<vmem>>, vector<8x8xf32>,
    %106 = vector.extract_strided_slice %31 {offsets = [0, 24], sizes = [8, 8], strides = [1, 1]} : vector<8x96xf32> to vector<8x8xf32>
    %cst_37 = arith.constant 0.353553385 : f32
    %107 = vector.broadcast %cst_37 : f32 to vector<8x8xf32>
    %108 = arith.mulf %106, %107 : vector<8x8xf32>
    %109 = arith.truncf %108 : vector<8x8xf32> to vector<8x8xbf16>
    %110 = vector.extract_strided_slice %31 {offsets = [0, 56], sizes = [8, 8], strides = [1, 1]} : vector<8x96xf32> to vector<8x8xf32>
    %111 = arith.truncf %110 : vector<8x8xf32> to vector<8x8xbf16>
    %112 = vector.extract_strided_slice %31 {offsets = [0, 88], sizes = [8, 8], strides = [1, 1]} : vector<8x96xf32> to vector<8x8xf32>
    %113 = arith.truncf %112 : vector<8x8xf32> to vector<8x8xbf16>
    %cst_38 = arith.constant dense<0.000000e+00> : vector<8x8xf32>
    %114 = tpu.matmul %109, %111, %cst_38 {dimension_numbers = #tpu.dot_dimension_numbers<[1], [1], [0], [0], [0, 0, 1, 0], [], []>} : vector<8x8xbf16>, vector<8x8xbf16>, vector<8x8xf32> -> vector<8x8xf32>
    %115 = vector.broadcast %33 : vector<1x8xf32> to vector<8x8xf32>
    %116 = arith.addf %114, %115 : vector<8x8xf32>
    %cst_39 = arith.constant dense<0xFF800000> : vector<8xf32>
    %117 = vector.multi_reduction <maximumf>, %116, %cst_39 [1] : vector<8x8xf32> to vector<8xf32>
    %118 = vector.shape_cast %117 : vector<8xf32> to vector<8x1xf32>
    %119 = vector.broadcast %118 : vector<8x1xf32> to vector<8x8xf32>
    %120 = arith.subf %116, %119 : vector<8x8xf32>
    %121 = math.exp %120 : vector<8x8xf32>
    %cst_40 = arith.constant dense<0.000000e+00> : vector<8xf32>
    %122 = vector.multi_reduction <add>, %121, %cst_40 [1] : vector<8x8xf32> to vector<8xf32>
    %123 = vector.shape_cast %122 : vector<8xf32> to vector<8x1xf32>
    %124 = tpu.reciprocal %123 {approx = true} : vector<8x1xf32> -> vector<8x1xf32>
    %125 = vector.broadcast %124 : vector<8x1xf32> to vector<8x8xf32>
    %126 = arith.mulf %121, %125 : vector<8x8xf32>
    %127 = arith.truncf %126 : vector<8x8xf32> to vector<8x8xbf16>
    %cst_41 = arith.constant dense<0.000000e+00> : vector<8x8xf32>
    %128 = tpu.matmul %127, %113, %cst_41 {dimension_numbers = #tpu.dot_dimension_numbers<[1], [0], [0], [1], [0, 0, 1, 1], [], []>} : vector<8x8xbf16>, vector<8x8xbf16>, vector<8x8xf32> -> vector<8x8xf32>
    %c0_42 = arith.constant 0 : index
    %c24 = arith.constant 24 : index
    %129 = vector.load %arg18[%c0_42, %c24] : memref<8x32xf32, #tpu.memory_space<vmem>>, vector<8x8xf32>
    tpu.vector_store %arg18[%c0_42, %c24], %128 {strides = array<i32>} : memref<8x32xf32, #tpu.memory_space<vmem>>, vector<8x8xf32>,
    %c0_43 = arith.constant 0 : index
    %c0_44 = arith.constant 0 : index
    %130 = vector.load %arg18[%c0_43, %c0_44] : memref<8x32xf32, #tpu.memory_space<vmem>>, vector<8x32xf32>
    %131 = arith.truncf %130 : vector<8x32xf32> to vector<8x32xbf16>
    %c0_45 = arith.constant 0 : index
    %c0_46 = arith.constant 0 : index
    %132 = vector.load %arg7[%c0_45, %c0_46] : memref<32x32xbf16, #tpu.memory_space<vmem>>, vector<32x32xbf16>
    %cst_47 = arith.constant dense<0.000000e+00> : vector<8x32xf32>
    %133 = tpu.matmul %131, %132, %cst_47 {dimension_numbers = #tpu.dot_dimension_numbers<[1], [0], [0], [1], [0, 0, 1, 1], [], []>} : vector<8x32xbf16>, vector<32x32xbf16>, vector<8x32xf32> -> vector<8x32xf32>
    %c0_48 = arith.constant 0 : index
    %c0_49 = arith.constant 0 : index
    %134 = vector.load %arg8[%c0_48, %c0_49] : memref<1x32xf32, #tpu.memory_space<vmem>>, vector<1x32xf32>
    %135 = vector.broadcast %134 : vector<1x32xf32> to vector<8x32xf32>
    %136 = arith.addf %133, %135 : vector<8x32xf32>
    %137 = arith.addf %136, %25 : vector<8x32xf32>
    %c0_50 = arith.constant 0 : index
    %c0_51 = arith.constant 0 : index
    %138 = vector.load %arg9[%c0_50, %c0_51] : memref<1x32xf32, #tpu.memory_space<vmem>>, vector<1x32xf32>
    %c0_52 = arith.constant 0 : index
    %c0_53 = arith.constant 0 : index
    %139 = vector.load %arg10[%c0_52, %c0_53] : memref<1x32xf32, #tpu.memory_space<vmem>>, vector<1x32xf32>
    %cst_54 = arith.constant dense<0.000000e+00> : vector<8xf32>
    %140 = vector.multi_reduction <add>, %137, %cst_54 [1] : vector<8x32xf32> to vector<8xf32>
    %141 = vector.shape_cast %140 : vector<8xf32> to vector<8x1xf32>
    %cst_55 = arith.constant 3.200000e+01 : f32
    %142 = vector.broadcast %cst_55 : f32 to vector<8x1xf32>
    %143 = arith.divf %141, %142 : vector<8x1xf32>
    %144 = vector.broadcast %143 : vector<8x1xf32> to vector<8x32xf32>
    %145 = arith.subf %137, %144 : vector<8x32xf32>
    %146 = arith.mulf %145, %145 : vector<8x32xf32>
    %cst_56 = arith.constant dense<0.000000e+00> : vector<8xf32>
    %147 = vector.multi_reduction <add>, %146, %cst_56 [1] : vector<8x32xf32> to vector<8xf32>
    %148 = vector.shape_cast %147 : vector<8xf32> to vector<8x1xf32>
    %cst_57 = arith.constant 3.200000e+01 : f32
    %149 = vector.broadcast %cst_57 : f32 to vector<8x1xf32>
    %150 = arith.divf %148, %149 : vector<8x1xf32>
    %151 = vector.broadcast %143 : vector<8x1xf32> to vector<8x32xf32>
    %152 = arith.subf %137, %151 : vector<8x32xf32>
    %cst_58 = arith.constant 9.99999996E-13 : f32
    %153 = vector.broadcast %cst_58 : f32 to vector<8x1xf32>
    %154 = arith.addf %150, %153 : vector<8x1xf32>
    %155 = math.rsqrt %154 : vector<8x1xf32>
    %156 = vector.broadcast %155 : vector<8x1xf32> to vector<8x32xf32>
    %157 = arith.mulf %152, %156 : vector<8x32xf32>
    %158 = vector.broadcast %138 : vector<1x32xf32> to vector<8x32xf32>
    %159 = arith.mulf %157, %158 : vector<8x32xf32>
    %160 = vector.broadcast %139 : vector<1x32xf32> to vector<8x32xf32>
    %161 = arith.addf %159, %160 : vector<8x32xf32>
    %162 = arith.truncf %161 : vector<8x32xf32> to vector<8x32xbf16>
    %c0_59 = arith.constant 0 : index
    %c0_60 = arith.constant 0 : index
    %163 = vector.load %arg11[%c0_59, %c0_60] : memref<32x128xbf16, #tpu.memory_space<vmem>>, vector<32x128xbf16>
    %cst_61 = arith.constant dense<0.000000e+00> : vector<8x128xf32>
    %164 = tpu.matmul %162, %163, %cst_61 {dimension_numbers = #tpu.dot_dimension_numbers<[1], [0], [0], [1], [0, 0, 1, 1], [], []>} : vector<8x32xbf16>, vector<32x128xbf16>, vector<8x128xf32> -> vector<8x128xf32>
    %c0_62 = arith.constant 0 : index
    %c0_63 = arith.constant 0 : index
    %165 = vector.load %arg12[%c0_62, %c0_63] : memref<1x128xf32, #tpu.memory_space<vmem>>, vector<1x128xf32>
    %166 = vector.broadcast %165 : vector<1x128xf32> to vector<8x128xf32>
    %167 = arith.addf %164, %166 : vector<8x128xf32>
    %cst_64 = arith.constant 5.000000e-01 : f32
    %168 = vector.broadcast %cst_64 : f32 to vector<8x128xf32>
    %169 = arith.mulf %168, %167 : vector<8x128xf32>
    %cst_65 = arith.constant 0.707106769 : f32
    %170 = vector.broadcast %cst_65 : f32 to vector<8x128xf32>
    %171 = arith.mulf %167, %170 : vector<8x128xf32>
    %172 = math.erf %171 : vector<8x128xf32>
    %cst_66 = arith.constant 1.000000e+00 : f32
    %173 = vector.broadcast %cst_66 : f32 to vector<8x128xf32>
    %174 = arith.addf %173, %172 : vector<8x128xf32>
    %175 = arith.mulf %169, %174 : vector<8x128xf32>
    %176 = arith.truncf %175 : vector<8x128xf32> to vector<8x128xbf16>
    %c0_67 = arith.constant 0 : index
    %c0_68 = arith.constant 0 : index
    %177 = vector.load %arg13[%c0_67, %c0_68] : memref<128x32xbf16, #tpu.memory_space<vmem>>, vector<128x32xbf16>
    %cst_69 = arith.constant dense<0.000000e+00> : vector<8x32xf32>
    %178 = tpu.matmul %176, %177, %cst_69 {dimension_numbers = #tpu.dot_dimension_numbers<[1], [0], [0], [1], [0, 0, 1, 1], [], []>} : vector<8x128xbf16>, vector<128x32xbf16>, vector<8x32xf32> -> vector<8x32xf32>
    %c0_70 = arith.constant 0 : index
    %c0_71 = arith.constant 0 : index
    %179 = vector.load %arg14[%c0_70, %c0_71] : memref<1x32xf32, #tpu.memory_space<vmem>>, vector<1x32xf32>
    %180 = vector.broadcast %179 : vector<1x32xf32> to vector<8x32xf32>
    %181 = arith.addf %178, %180 : vector<8x32xf32>
    %182 = arith.addf %181, %161 : vector<8x32xf32>
    %c0_72 = arith.constant 0 : index
    %c0_73 = arith.constant 0 : index
    %183 = vector.load %arg15[%c0_72, %c0_73] : memref<1x32xf32, #tpu.memory_space<vmem>>, vector<1x32xf32>
    %c0_74 = arith.constant 0 : index
    %c0_75 = arith.constant 0 : index
    %184 = vector.load %arg16[%c0_74, %c0_75] : memref<1x32xf32, #tpu.memory_space<vmem>>, vector<1x32xf32>
    %cst_76 = arith.constant dense<0.000000e+00> : vector<8xf32>
    %185 = vector.multi_reduction <add>, %182, %cst_76 [1] : vector<8x32xf32> to vector<8xf32>
    %186 = vector.shape_cast %185 : vector<8xf32> to vector<8x1xf32>
    %cst_77 = arith.constant 3.200000e+01 : f32
    %187 = vector.broadcast %cst_77 : f32 to vector<8x1xf32>
    %188 = arith.divf %186, %187 : vector<8x1xf32>
    %189 = vector.broadcast %188 : vector<8x1xf32> to vector<8x32xf32>
    %190 = arith.subf %182, %189 : vector<8x32xf32>
    %191 = arith.mulf %190, %190 : vector<8x32xf32>
    %cst_78 = arith.constant dense<0.000000e+00> : vector<8xf32>
    %192 = vector.multi_reduction <add>, %191, %cst_78 [1] : vector<8x32xf32> to vector<8xf32>
    %193 = vector.shape_cast %192 : vector<8xf32> to vector<8x1xf32>
    %cst_79 = arith.constant 3.200000e+01 : f32
    %194 = vector.broadcast %cst_79 : f32 to vector<8x1xf32>
    %195 = arith.divf %193, %194 : vector<8x1xf32>
    %196 = vector.broadcast %188 : vector<8x1xf32> to vector<8x32xf32>
    %197 = arith.subf %182, %196 : vector<8x32xf32>
    %cst_80 = arith.constant 9.99999996E-13 : f32
    %198 = vector.broadcast %cst_80 : f32 to vector<8x1xf32>
    %199 = arith.addf %195, %198 : vector<8x1xf32>
    %200 = math.rsqrt %199 : vector<8x1xf32>
    %201 = vector.broadcast %200 : vector<8x1xf32> to vector<8x32xf32>
    %202 = arith.mulf %197, %201 : vector<8x32xf32>
    %203 = vector.broadcast %183 : vector<1x32xf32> to vector<8x32xf32>
    %204 = arith.mulf %202, %203 : vector<8x32xf32>
    %205 = vector.broadcast %184 : vector<1x32xf32> to vector<8x32xf32>
    %206 = arith.addf %204, %205 : vector<8x32xf32>
    %c0_81 = arith.constant 0 : index
    %c0_82 = arith.constant 0 : index
    %c0_83 = arith.constant 0 : index
    %207 = vector.load %arg17[%c0_81, %c0_82, %c0_83] : memref<1x8x32xf32, #tpu.memory_space<vmem>>, vector<1x8x32xf32>
    %208 = vector.shape_cast %207 : vector<1x8x32xf32> to vector<8x32xf32>
    %209 = vector.shape_cast %206 : vector<8x32xf32> to vector<1x8x32xf32>
    tpu.vector_store %arg17[%c0_81, %c0_82, %c0_83], %209 {strides = array<i32>} : memref<1x8x32xf32, #tpu.memory_space<vmem>>, vector<1x8x32xf32>,
    return
  }
  func.func @transform_0(%arg0: i32) -> (i32, i32, i32) {
    %c0_i32 = arith.constant 0 : i32
    %c0_i32_0 = arith.constant 0 : i32
    %c0_i32_1 = arith.constant 0 : i32
    return %arg0, %c0_i32, %c0_i32_0 : i32, i32, i32
  }
  func.func @transform_1(%arg0: i32) -> (i32, i32, i32) {
    %c0_i32 = arith.constant 0 : i32
    %c0_i32_0 = arith.constant 0 : i32
    %c0_i32_1 = arith.constant 0 : i32
    return %arg0, %c0_i32, %c0_i32_0 : i32, i32, i32
  }
  func.func @transform_2(%arg0: i32) -> (i32, i32) {
    %c0_i32 = arith.constant 0 : i32
    %c0_i32_0 = arith.constant 0 : i32
    %c0_i32_1 = arith.constant 0 : i32
    return %c0_i32, %c0_i32_0 : i32, i32
  }
  func.func @transform_3(%arg0: i32) -> (i32, i32) {
    %c0_i32 = arith.constant 0 : i32
    %c0_i32_0 = arith.constant 0 : i32
    %c0_i32_1 = arith.constant 0 : i32
    return %c0_i32, %c0_i32_0 : i32, i32
  }
  func.func @transform_4(%arg0: i32) -> (i32, i32) {
    %c0_i32 = arith.constant 0 : i32
    %c0_i32_0 = arith.constant 0 : i32
    %c0_i32_1 = arith.constant 0 : i32
    return %c0_i32, %c0_i32_0 : i32, i32
  }
  func.func @transform_5(%arg0: i32) -> (i32, i32) {
    %c0_i32 = arith.constant 0 : i32
    %c0_i32_0 = arith.constant 0 : i32
    %c0_i32_1 = arith.constant 0 : i32
    return %c0_i32, %c0_i32_0 : i32, i32
  }
  func.func @transform_6(%arg0: i32) -> (i32, i32) {
    %c0_i32 = arith.constant 0 : i32
    %c0_i32_0 = arith.constant 0 : i32
    %c0_i32_1 = arith.constant 0 : i32
    return %c0_i32, %c0_i32_0 : i32, i32
  }
  func.func @transform_7(%arg0: i32) -> (i32, i32) {
    %c0_i32 = arith.constant 0 : i32
    %c0_i32_0 = arith.constant 0 : i32
    %c0_i32_1 = arith.constant 0 : i32
    return %c0_i32, %c0_i32_0 : i32, i32
  }
  func.func @transform_8(%arg0: i32) -> (i32, i32) {
    %c0_i32 = arith.constant 0 : i32
    %c0_i32_0 = arith.constant 0 : i32
    %c0_i32_1 = arith.constant 0 : i32
    return %c0_i32, %c0_i32_0 : i32, i32
  }
  func.func @transform_9(%arg0: i32) -> (i32, i32) {
    %c0_i32 = arith.constant 0 : i32
    %c0_i32_0 = arith.constant 0 : i32
    %c0_i32_1 = arith.constant 0 : i32
    return %c0_i32, %c0_i32_0 : i32, i32
  }
  func.func @transform_10(%arg0: i32) -> (i32, i32) {
    %c0_i32 = arith.constant 0 : i32
    %c0_i32_0 = arith.constant 0 : i32
    %c0_i32_1 = arith.constant 0 : i32
    return %c0_i32, %c0_i32_0 : i32, i32
  }
  func.func @transform_11(%arg0: i32) -> (i32, i32) {
    %c0_i32 = arith.constant 0 : i32
    %c0_i32_0 = arith.constant 0 : i32
    %c0_i32_1 = arith.constant 0 : i32
    return %c0_i32, %c0_i32_0 : i32, i32
  }
  func.func @transform_12(%arg0: i32) -> (i32, i32) {
    %c0_i32 = arith.constant 0 : i32
    %c0_i32_0 = arith.constant 0 : i32
    %c0_i32_1 = arith.constant 0 : i32
    return %c0_i32, %c0_i32_0 : i32, i32
  }
  func.func @transform_13(%arg0: i32) -> (i32, i32) {
    %c0_i32 = arith.constant 0 : i32
    %c0_i32_0 = arith.constant 0 : i32
    %c0_i32_1 = arith.constant 0 : i32
    return %c0_i32, %c0_i32_0 : i32, i32
  }
  func.func @transform_14(%arg0: i32) -> (i32, i32) {
    %c0_i32 = arith.constant 0 : i32
    %c0_i32_0 = arith.constant 0 : i32
    %c0_i32_1 = arith.constant 0 : i32
    return %c0_i32, %c0_i32_0 : i32, i32
  }
  func.func @transform_15(%arg0: i32) -> (i32, i32) {
    %c0_i32 = arith.constant 0 : i32
    %c0_i32_0 = arith.constant 0 : i32
    %c0_i32_1 = arith.constant 0 : i32
    return %c0_i32, %c0_i32_0 : i32, i32
  }
  func.func @transform_16(%arg0: i32) -> (i32, i32, i32) {
    %c0_i32 = arith.constant 0 : i32
    %c0_i32_0 = arith.constant 0 : i32
    %c0_i32_1 = arith.constant 0 : i32
    return %arg0, %c0_i32, %c0_i32_0 : i32, i32, i32
  }
}

</mosaic_0001>

<llo_original>
// kernel: bert_classifier_forward.5
$region0: #{bert_classifier_forward.5}
  #allocation0 [shape = 'u32[]', space=smem, size = 0x4, offset = 0x4, fixed_abs, tag = 'smem constant byte address 0x4 - core index']
  #allocation1 [shape = 'u32[144,128]{1,0:T(1,128)}', space=vmem, size = 0x12000, scoped, tag = 'internal scratch']
  %s0 = inlined_call_operand.vmem [shape: f32[8,32], index: 0, kind: input, shape index: {}]
  %s1 = inlined_call_operand.vmem [shape: bf16[32,32], index: 1, kind: input, shape index: {}]
  %s2 = inlined_call_operand.vmem [shape: f32[1,32], index: 2, kind: input, shape index: {}]
  %s3 = inlined_call_operand.vmem [shape: bf16[32,128], index: 3, kind: input, shape index: {}]
  %s4 = inlined_call_operand.vmem [shape: f32[1,128], index: 4, kind: input, shape index: {}]
  %s5 = inlined_call_operand.vmem [shape: f32[8,128], index: 5, kind: output, shape index: {}]
  %s6 = sld [smem:[#allocation0]]
  $region30: #{bert_classifier_forward.5} parent=0
    _
  %s8 = ssub.s32 1, %s6
  %s9 = scalar_select 0, %s8, %s6
  // Predicated region
  $region2: #{bert_classifier_forward.5} parent=0 // pred_check
    _
  $region3: #{bert_classifier_forward.5} parent=0 // pred_check_branch
    %11 = sbr.rel (0) target = $region5
  $region4: #{bert_classifier_forward.5} parent=0 // pred_region
    _
  $region5: #{bert_classifier_forward.5} parent=0 // pred_fallthru
    _
  // Predicated region
  $region6: #{bert_classifier_forward.5} parent=0 // pred_check
    _
  $region7: #{bert_classifier_forward.5} parent=0 // pred_check_branch
    %13 = sbr.rel (0) target = $region9
  $region8: #{bert_classifier_forward.5} parent=0 // pred_region
    _
  $region9: #{bert_classifier_forward.5} parent=0 // pred_fallthru
    _
  // Predicated region
  $region10: #{bert_classifier_forward.5} parent=0 // pred_check
    _
  $region11: #{bert_classifier_forward.5} parent=0 // pred_check_branch
    %15 = sbr.rel (0) target = $region13
  $region12: #{bert_classifier_forward.5} parent=0 // pred_region
    _
  $region13: #{bert_classifier_forward.5} parent=0 // pred_fallthru
    _
  // Predicated region
  $region14: #{bert_classifier_forward.5} parent=0 // pred_check
    _
  $region15: #{bert_classifier_forward.5} parent=0 // pred_check_branch
    %17 = sbr.rel (0) target = $region17
  $region16: #{bert_classifier_forward.5} parent=0 // pred_region
    _
  $region17: #{bert_classifier_forward.5} parent=0 // pred_fallthru
    _
  // Predicated region
  $region18: #{bert_classifier_forward.5} parent=0 // pred_check
    _
  $region19: #{bert_classifier_forward.5} parent=0 // pred_check_branch
    %19 = sbr.rel (0) target = $region21
  $region20: #{bert_classifier_forward.5} parent=0 // pred_region
    _
  $region21: #{bert_classifier_forward.5} parent=0 // pred_fallthru
    _
  %v21 = vld [vmem:[%s0] sm:$0xff]
  %v22 = vpack.c.bf16 %v21, %v21
  %v23 = vld [vmem:[%s1] sm:$0xf]
  %v24 = vld [vmem:[%s1 + $0x4] sm:$0xf]
  %v25 = vld [vmem:[%s1 + $0x8] sm:$0xf]
  %v26 = vld [vmem:[%s1 + $0xc] sm:$0xf]
  %v27 = vld [vmem:[%s2] sm:$0x1]
  %v29 = vlaneseq
  %v30 = vshrl.u32 %v29, 7
  %v31 = vsub.s32 0, %v30
  %v32 = vrot.slane %v27, %v31
  %v38 = vunpack.c.l.b16 %v23
  %v39 = vunpack.c.l.b16 %v24
  %v40 = vunpack.c.l.b16 %v25
  %v41 = vunpack.c.l.b16 %v26
  %v42 = vpack.c.b16 %v39, %v38
  %v43 = vpack.c.b16 %v41, %v40
  %vm46 = vcmask 261120
  %v48 = vsel %vm46, %v22, 0
  %50 = vmatprep.subr.bf16.mxu0 0
  %51 = vmatpush1.bf16.msra.mxu0 %v42
  %52 = vmatprep.subr.bf16.mxu0 0
  %53 = vmatpush1.bf16.msra.mxu0 %v43
  %54 = vmatprep.subr.bf16.mxu0 0
  %55 = vmatpush1.bf16.msra.mxu0 0
  %56 = vmatprep.subr.bf16.mxu0 0
  %57 = vmatpush1.bf16.msra.mxu0 0
  %58 = vmatprep.subr.bf16.mxu0 0
  %59 = vmatpush1.bf16.msra.mxu0 0
  %60 = vmatprep.subr.bf16.mxu0 0
  %61 = vmatpush1.bf16.msra.mxu0 0
  %62 = vmatprep.subr.bf16.mxu0 0
  %63 = vmatpush1.bf16.msra.mxu0 0
  %64 = vmatprep.subr.bf16.mxu0 0
  %65 = vmatpush1.bf16.msra.mxu0 0
  %66 = vmatprep.subr.bf16.mxu0 0
  %67 = vmatpush1.bf16.msra.mxu0 0
  %68 = vmatprep.subr.bf16.mxu0 0
  %69 = vmatpush1.bf16.msra.mxu0 0
  %70 = vmatprep.subr.bf16.mxu0 0
  %71 = vmatpush1.bf16.msra.mxu0 0
  %72 = vmatprep.subr.bf16.mxu0 0
  %73 = vmatpush1.bf16.msra.mxu0 0
  %74 = vmatprep.subr.bf16.mxu0 0
  %75 = vmatpush1.bf16.msra.mxu0 0
  %76 = vmatprep.subr.bf16.mxu0 0
  %77 = vmatpush1.bf16.msra.mxu0 0
  %78 = vmatprep.subr.bf16.mxu0 0
  %79 = vmatpush1.bf16.msra.mxu0 0
  %80 = vmatprep.subr.bf16.mxu0 0
  %81 = vmatpush1.bf16.msra.mxu0 0
  %82 = vmatprep.mubr.bf16.mxu0 0
  %83 = vmatmul.mubr.bf16.gmra.mrb[0].mxu0 %v48
  %v84 = vpop.f32.mrb[0].mxu0
  %v85 = vadd.f32 %v32, %v84
  %v86 = vpop.f32.mrb[0].mxu0
  %v87 = vpop.f32.mrb[0].mxu0
  %v88 = vpop.f32.mrb[0].mxu0
  %89 = vdwg.mxu0
  %v90 = vtanh.pop %v85
  %v91 = vpack.c.bf16 %v90, %v90
  %v92 = vld [vmem:[%s3] sm:$0xf]
  %v93 = vld [vmem:[%s3 + $0x4] sm:$0xf]
  %v94 = vld [vmem:[%s3 + $0x8] sm:$0xf]
  %v95 = vld [vmem:[%s3 + $0xc] sm:$0xf]
  %v96 = vld [vmem:[%s4] sm:$0x1]
  %v98 = vlaneseq
  %v99 = vshrl.u32 %v98, 7
  %v100 = vsub.s32 0, %v99
  %v101 = vrot.slane %v96, %v100
  %v107 = vunpack.c.l.b16 %v92
  %v108 = vunpack.c.l.b16 %v93
  %v109 = vunpack.c.l.b16 %v94
  %v110 = vunpack.c.l.b16 %v95
  %v111 = vpack.c.b16 %v108, %v107
  %v112 = vpack.c.b16 %v110, %v109
  %v116 = vsel %vm46, %v91, 0
  %118 = vmatprep.subr.bf16.mxu0 0
  %119 = vmatpush1.bf16.msra.mxu0 %v111
  %120 = vmatprep.subr.bf16.mxu0 0
  %121 = vmatpush1.bf16.msra.mxu0 %v112
  %122 = vmatprep.subr.bf16.mxu0 0
  %123 = vmatpush1.bf16.msra.mxu0 0
  %124 = vmatprep.subr.bf16.mxu0 0
  %125 = vmatpush1.bf16.msra.mxu0 0
  %126 = vmatprep.subr.bf16.mxu0 0
  %127 = vmatpush1.bf16.msra.mxu0 0
  %128 = vmatprep.subr.bf16.mxu0 0
  %129 = vmatpush1.bf16.msra.mxu0 0
  %130 = vmatprep.subr.bf16.mxu0 0
  %131 = vmatpush1.bf16.msra.mxu0 0
  %132 = vmatprep.subr.bf16.mxu0 0
  %133 = vmatpush1.bf16.msra.mxu0 0
  %134 = vmatprep.subr.bf16.mxu0 0
  %135 = vmatpush1.bf16.msra.mxu0 0
  %136 = vmatprep.subr.bf16.mxu0 0
  %137 = vmatpush1.bf16.msra.mxu0 0
  %138 = vmatprep.subr.bf16.mxu0 0
  %139 = vmatpush1.bf16.msra.mxu0 0
  %140 = vmatprep.subr.bf16.mxu0 0
  %141 = vmatpush1.bf16.msra.mxu0 0
  %142 = vmatprep.subr.bf16.mxu0 0
  %143 = vmatpush1.bf16.msra.mxu0 0
  %144 = vmatprep.subr.bf16.mxu0 0
  %145 = vmatpush1.bf16.msra.mxu0 0
  %146 = vmatprep.subr.bf16.mxu0 0
  %147 = vmatpush1.bf16.msra.mxu0 0
  %148 = vmatprep.subr.bf16.mxu0 0
  %149 = vmatpush1.bf16.msra.mxu0 0
  %150 = vmatprep.mubr.bf16.mxu0 0
  %151 = vmatmul.mubr.bf16.gmra.mrb[0].mxu0 %v116
  %v152 = vpop.f32.mrb[0].mxu0
  %v153 = vadd.f32 %v101, %v152
  %v154 = vpop.f32.mrb[0].mxu0
  %v155 = vpop.f32.mrb[0].mxu0
  %v156 = vpop.f32.mrb[0].mxu0
  %157 = vdwg.mxu0
  %158 = vst [vmem:[%s5] sm:$0xff] %v153
  // Predicated region
  $region22: #{bert_classifier_forward.5} parent=0 // pred_check
    _
  $region23: #{bert_classifier_forward.5} parent=0 // pred_check_branch
    %160 = sbr.rel (0) target = $region25
  $region24: #{bert_classifier_forward.5} parent=0 // pred_region
    _
  $region25: #{bert_classifier_forward.5} parent=0 // pred_fallthru
    _
  // Predicated region
  $region26: #{bert_classifier_forward.5} parent=0 // pred_check
    _
  $region27: #{bert_classifier_forward.5} parent=0 // pred_check_branch
    %162 = sbr.rel (0) target = $region29
  $region28: #{bert_classifier_forward.5} parent=0 // pred_region
    _
  $region29: #{bert_classifier_forward.5} parent=0 // pred_fallthru
    _

// kernel: bert_classifier_forward.4
$region0: #{bert_classifier_forward.4}
  #allocation0 [shape = 'u32[]', space=smem, size = 0x4, offset = 0x4, fixed_abs, tag = 'smem constant byte address 0x4 - core index']
  #allocation1 [shape = 'u32[144,128]{1,0:T(1,128)}', space=vmem, size = 0x12000, scoped, tag = 'internal scratch']
  #allocation2 [shape = 'f32[8,32]{1,0:T(8,128)}', space=vmem, size = 0x1000, scoped, tag = 'scratch operand']
  %s0 = inlined_call_operand.vmem [shape: f32[2,8,32], index: 0, kind: input, shape index: {}, may-alias: {0,14}]
  %s1 = inlined_call_operand.vmem [shape: f32[2,1,8], index: 1, kind: input, shape index: {}]
  %s2 = inlined_call_operand.vmem [shape: bf16[32,96], index: 2, kind: input, shape index: {}]
  %s3 = inlined_call_operand.vmem [shape: f32[1,96], index: 3, kind: input, shape index: {}]
  %s4 = inlined_call_operand.vmem [shape: bf16[32,32], index: 4, kind: input, shape index: {}]
  %s5 = inlined_call_operand.vmem [shape: f32[1,32], index: 5, kind: input, shape index: {}]
  %s6 = inlined_call_operand.vmem [shape: f32[1,32], index: 6, kind: input, shape index: {}]
  %s7 = inlined_call_operand.vmem [shape: f32[1,32], index: 7, kind: input, shape index: {}]
  %s8 = inlined_call_operand.vmem [shape: bf16[32,128], index: 8, kind: input, shape index: {}]
  %s9 = inlined_call_operand.vmem [shape: f32[1,128], index: 9, kind: input, shape index: {}]
  %s10 = inlined_call_operand.vmem [shape: bf16[128,32], index: 10, kind: input, shape index: {}]
  %s11 = inlined_call_operand.vmem [shape: f32[1,32], index: 11, kind: input, shape index: {}]
  %s12 = inlined_call_operand.vmem [shape: f32[1,32], index: 12, kind: input, shape index: {}]
  %s13 = inlined_call_operand.vmem [shape: f32[1,32], index: 13, kind: input, shape index: {}]
  %s14 = inlined_call_operand.vmem [shape: f32[2,8,32], index: 14, kind: output, shape index: {}, may-alias: {0,14}]
  %s15 = sld [smem:[#allocation0]]
  $region89: #{bert_classifier_forward.4} parent=0
    _
  %s17 = ssub.s32 1, %s15
  %s18 = scalar_select 0, %s17, %s15
  loop: start=0, step=1, limit=4
  $region2: #{bert_classifier_forward.4} parent=0 // loop_pre_header
    _
  $region3: #{bert_classifier_forward.4} parent=0 // loop_header
    %s20 = sphi 0, %s24
    %p21 = scmp.ge.s32.totalorder %s20, 4
    %s30 = sphi 0, %s32
    %s33 = sphi 0, %s30
    %s34 = sphi 0, %s33
    %s50 = sphi 0, %s34
    %s56 = sphi 0, %s58
    %s59 = sphi 0, %s56
    %s60 = sphi 0, %s59
    %s76 = sphi 0, %s60
    %s80 = sphi 0, %s80
    %s82 = sphi 0, %s80
    %s83 = sphi 0, %s82
    %s97 = sphi 0, %s83
    %s101 = sphi 0, %s101
    %s103 = sphi 0, %s101
    %s104 = sphi 0, %s103
    %s118 = sphi 0, %s104
    %s122 = sphi 0, %s122
    %s124 = sphi 0, %s122
    %s125 = sphi 0, %s124
    %s139 = sphi 0, %s125
    %s143 = sphi 0, %s143
    %s145 = sphi 0, %s143
    %s146 = sphi 0, %s145
    %s160 = sphi 0, %s146
    %s164 = sphi 0, %s164
    %s166 = sphi 0, %s164
    %s167 = sphi 0, %s166
    %s181 = sphi 0, %s167
    %s185 = sphi 0, %s185
    %s187 = sphi 0, %s185
    %s188 = sphi 0, %s187
    %s202 = sphi 0, %s188
    %s206 = sphi 0, %s206
    %s208 = sphi 0, %s206
    %s209 = sphi 0, %s208
    %s223 = sphi 0, %s209
    %s227 = sphi 0, %s227
    %s229 = sphi 0, %s227
    %s230 = sphi 0, %s229
    %s244 = sphi 0, %s230
    %s248 = sphi 0, %s248
    %s250 = sphi 0, %s248
    %s251 = sphi 0, %s250
    %s265 = sphi 0, %s251
    %s269 = sphi 0, %s269
    %s271 = sphi 0, %s269
    %s272 = sphi 0, %s271
    %s286 = sphi 0, %s272
    %s290 = sphi 0, %s290
    %s292 = sphi 0, %s290
    %s293 = sphi 0, %s292
    %s307 = sphi 0, %s293
    %s311 = sphi 0, %s311
    %s313 = sphi 0, %s311
    %s314 = sphi 0, %s313
    %s328 = sphi 0, %s314
    %s334 = sphi 0, %s336
    %s337 = sphi 0, %s334
    %s338 = sphi 0, %s337
    %s354 = sphi 0, %s338
  $region4: #{bert_classifier_forward.4} parent=0 // loop_header_branch
    %23 = sbr.rel (%p21) target = $region8
  $region5: #{bert_classifier_forward.4} parent=0 // loop_body
    %s25 = ssub.s32 %s20, 1
    %s26 = ssub.s32 %s20, 2
    %s27 = sadd.s32 %s20, 1
    %s28 = ssub.s32 %s20, %s27
    %p29 = scmp.eq.s32.totalorder %s28, 0
    %s31 = sadd.s32 %s30, 1
    %s32 = scalar_select %p29, %s30, %s31
    %p35 = pneg %p29
    %p36 = scmp.eq.s32.totalorder %s20, 1
    %p37 = por %p35, %p36
    %p38 = scmp.ne.s32.totalorder %s30, %s33
    %p39 = scmp.eq.s32.totalorder %s20, 0
    %p40 = por %p38, %p39
    %p41 = scmp.ne.s32.totalorder %s30, %s33
    %p42 = scmp.eq.s32.totalorder %s25, 1
    %p43 = por %p41, %p42
    %p44 = scmp.ne.s32.totalorder %s33, %s34
    %p45 = scmp.eq.s32.totalorder %s25, 0
    %p46 = por %p44, %p45
    %p47 = scmp.ne.s32.totalorder %s33, %s34
    %p48 = scmp.eq.s32.totalorder %s26, 1
    %p49 = por %p47, %p48
    %p51 = scmp.ne.s32.totalorder %s34, %s50
    %p52 = scmp.eq.s32.totalorder %s26, 0
    %p53 = por %p51, %p52
    %s54 = ssub.s32 %s20, %s27
    %p55 = scmp.eq.s32.totalorder %s54, 0
    %s57 = sadd.s32 %s56, 1
    %s58 = scalar_select %p55, %s56, %s57
    %p61 = pneg %p55
    %p62 = scmp.eq.s32.totalorder %s20, 1
    %p63 = por %p61, %p62
    %p64 = scmp.ne.s32.totalorder %s56, %s59
    %p65 = scmp.eq.s32.totalorder %s20, 0
    %p66 = por %p64, %p65
    %p67 = scmp.ne.s32.totalorder %s56, %s59
    %p68 = scmp.eq.s32.totalorder %s25, 1
    %p69 = por %p67, %p68
    %p70 = scmp.ne.s32.totalorder %s59, %s60
    %p71 = scmp.eq.s32.totalorder %s25, 0
    %p72 = por %p70, %p71
    %p73 = scmp.ne.s32.totalorder %s59, %s60
    %p74 = scmp.eq.s32.totalorder %s26, 1
    %p75 = por %p73, %p74
    %p77 = scmp.ne.s32.totalorder %s60, %s76
    %p78 = scmp.eq.s32.totalorder %s26, 0
    %p79 = por %p77, %p78
    %s81 = sadd.s32 %s80, 1
    %p84 = scmp.eq.s32.totalorder %s20, 1
    %p85 = scmp.ne.s32.totalorder %s80, %s82
    %p86 = scmp.eq.s32.totalorder %s20, 0
    %p87 = por %p85, %p86
    %p88 = scmp.ne.s32.totalorder %s80, %s82
    %p89 = scmp.eq.s32.totalorder %s25, 1
    %p90 = por %p88, %p89
    %p91 = scmp.ne.s32.totalorder %s82, %s83
    %p92 = scmp.eq.s32.totalorder %s25, 0
    %p93 = por %p91, %p92
    %p94 = scmp.ne.s32.totalorder %s82, %s83
    %p95 = scmp.eq.s32.totalorder %s26, 1
    %p96 = por %p94, %p95
    %p98 = scmp.ne.s32.totalorder %s83, %s97
    %p99 = scmp.eq.s32.totalorder %s26, 0
    %p100 = por %p98, %p99
    %s102 = sadd.s32 %s101, 1
    %p105 = scmp.eq.s32.totalorder %s20, 1
    %p106 = scmp.ne.s32.totalorder %s101, %s103
    %p107 = scmp.eq.s32.totalorder %s20, 0
    %p108 = por %p106, %p107
    %p109 = scmp.ne.s32.totalorder %s101, %s103
    %p110 = scmp.eq.s32.totalorder %s25, 1
    %p111 = por %p109, %p110
    %p112 = scmp.ne.s32.totalorder %s103, %s104
    %p113 = scmp.eq.s32.totalorder %s25, 0
    %p114 = por %p112, %p113
    %p115 = scmp.ne.s32.totalorder %s103, %s104
    %p116 = scmp.eq.s32.totalorder %s26, 1
    %p117 = por %p115, %p116
    %p119 = scmp.ne.s32.totalorder %s104, %s118
    %p120 = scmp.eq.s32.totalorder %s26, 0
    %p121 = por %p119, %p120
    %s123 = sadd.s32 %s122, 1
    %p126 = scmp.eq.s32.totalorder %s20, 1
    %p127 = scmp.ne.s32.totalorder %s122, %s124
    %p128 = scmp.eq.s32.totalorder %s20, 0
    %p129 = por %p127, %p128
    %p130 = scmp.ne.s32.totalorder %s122, %s124
    %p131 = scmp.eq.s32.totalorder %s25, 1
    %p132 = por %p130, %p131
    %p133 = scmp.ne.s32.totalorder %s124, %s125
    %p134 = scmp.eq.s32.totalorder %s25, 0
    %p135 = por %p133, %p134
    %p136 = scmp.ne.s32.totalorder %s124, %s125
    %p137 = scmp.eq.s32.totalorder %s26, 1
    %p138 = por %p136, %p137
    %p140 = scmp.ne.s32.totalorder %s125, %s139
    %p141 = scmp.eq.s32.totalorder %s26, 0
    %p142 = por %p140, %p141
    %s144 = sadd.s32 %s143, 1
    %p147 = scmp.eq.s32.totalorder %s20, 1
    %p148 = scmp.ne.s32.totalorder %s143, %s145
    %p149 = scmp.eq.s32.totalorder %s20, 0
    %p150 = por %p148, %p149
    %p151 = scmp.ne.s32.totalorder %s143, %s145
    %p152 = scmp.eq.s32.totalorder %s25, 1
    %p153 = por %p151, %p152
    %p154 = scmp.ne.s32.totalorder %s145, %s146
    %p155 = scmp.eq.s32.totalorder %s25, 0
    %p156 = por %p154, %p155
    %p157 = scmp.ne.s32.totalorder %s145, %s146
    %p158 = scmp.eq.s32.totalorder %s26, 1
    %p159 = por %p157, %p158
    %p161 = scmp.ne.s32.totalorder %s146, %s160
    %p162 = scmp.eq.s32.totalorder %s26, 0
    %p163 = por %p161, %p162
    %s165 = sadd.s32 %s164, 1
    %p168 = scmp.eq.s32.totalorder %s20, 1
    %p169 = scmp.ne.s32.totalorder %s164, %s166
    %p170 = scmp.eq.s32.totalorder %s20, 0
    %p171 = por %p169, %p170
    %p172 = scmp.ne.s32.totalorder %s164, %s166
    %p173 = scmp.eq.s32.totalorder %s25, 1
    %p174 = por %p172, %p173
    %p175 = scmp.ne.s32.totalorder %s166, %s167
    %p176 = scmp.eq.s32.totalorder %s25, 0
    %p177 = por %p175, %p176
    %p178 = scmp.ne.s32.totalorder %s166, %s167
    %p179 = scmp.eq.s32.totalorder %s26, 1
    %p180 = por %p178, %p179
    %p182 = scmp.ne.s32.totalorder %s167, %s181
    %p183 = scmp.eq.s32.totalorder %s26, 0
    %p184 = por %p182, %p183
    %s186 = sadd.s32 %s185, 1
    %p189 = scmp.eq.s32.totalorder %s20, 1
    %p190 = scmp.ne.s32.totalorder %s185, %s187
    %p191 = scmp.eq.s32.totalorder %s20, 0
    %p192 = por %p190, %p191
    %p193 = scmp.ne.s32.totalorder %s185, %s187
    %p194 = scmp.eq.s32.totalorder %s25, 1
    %p195 = por %p193, %p194
    %p196 = scmp.ne.s32.totalorder %s187, %s188
    %p197 = scmp.eq.s32.totalorder %s25, 0
    %p198 = por %p196, %p197
    %p199 = scmp.ne.s32.totalorder %s187, %s188
    %p200 = scmp.eq.s32.totalorder %s26, 1
    %p201 = por %p199, %p200
    %p203 = scmp.ne.s32.totalorder %s188, %s202
    %p204 = scmp.eq.s32.totalorder %s26, 0
    %p205 = por %p203, %p204
    %s207 = sadd.s32 %s206, 1
    %p210 = scmp.eq.s32.totalorder %s20, 1
    %p211 = scmp.ne.s32.totalorder %s206, %s208
    %p212 = scmp.eq.s32.totalorder %s20, 0
    %p213 = por %p211, %p212
    %p214 = scmp.ne.s32.totalorder %s206, %s208
    %p215 = scmp.eq.s32.totalorder %s25, 1
    %p216 = por %p214, %p215
    %p217 = scmp.ne.s32.totalorder %s208, %s209
    %p218 = scmp.eq.s32.totalorder %s25, 0
    %p219 = por %p217, %p218
    %p220 = scmp.ne.s32.totalorder %s208, %s209
    %p221 = scmp.eq.s32.totalorder %s26, 1
    %p222 = por %p220, %p221
    %p224 = scmp.ne.s32.totalorder %s209, %s223
    %p225 = scmp.eq.s32.totalorder %s26, 0
    %p226 = por %p224, %p225
    %s228 = sadd.s32 %s227, 1
    %p231 = scmp.eq.s32.totalorder %s20, 1
    %p232 = scmp.ne.s32.totalorder %s227, %s229
    %p233 = scmp.eq.s32.totalorder %s20, 0
    %p234 = por %p232, %p233
    %p235 = scmp.ne.s32.totalorder %s227, %s229
    %p236 = scmp.eq.s32.totalorder %s25, 1
    %p237 = por %p235, %p236
    %p238 = scmp.ne.s32.totalorder %s229, %s230
    %p239 = scmp.eq.s32.totalorder %s25, 0
    %p240 = por %p238, %p239
    %p241 = scmp.ne.s32.totalorder %s229, %s230
    %p242 = scmp.eq.s32.totalorder %s26, 1
    %p243 = por %p241, %p242
    %p245 = scmp.ne.s32.totalorder %s230, %s244
    %p246 = scmp.eq.s32.totalorder %s26, 0
    %p247 = por %p245, %p246
    %s249 = sadd.s32 %s248, 1
    %p252 = scmp.eq.s32.totalorder %s20, 1
    %p253 = scmp.ne.s32.totalorder %s248, %s250
    %p254 = scmp.eq.s32.totalorder %s20, 0
    %p255 = por %p253, %p254
    %p256 = scmp.ne.s32.totalorder %s248, %s250
    %p257 = scmp.eq.s32.totalorder %s25, 1
    %p258 = por %p256, %p257
    %p259 = scmp.ne.s32.totalorder %s250, %s251
    %p260 = scmp.eq.s32.totalorder %s25, 0
    %p261 = por %p259, %p260
    %p262 = scmp.ne.s32.totalorder %s250, %s251
    %p263 = scmp.eq.s32.totalorder %s26, 1
    %p264 = por %p262, %p263
    %p266 = scmp.ne.s32.totalorder %s251, %s265
    %p267 = scmp.eq.s32.totalorder %s26, 0
    %p268 = por %p266, %p267
    %s270 = sadd.s32 %s269, 1
    %p273 = scmp.eq.s32.totalorder %s20, 1
    %p274 = scmp.ne.s32.totalorder %s269, %s271
    %p275 = scmp.eq.s32.totalorder %s20, 0
    %p276 = por %p274, %p275
    %p277 = scmp.ne.s32.totalorder %s269, %s271
    %p278 = scmp.eq.s32.totalorder %s25, 1
    %p279 = por %p277, %p278
    %p280 = scmp.ne.s32.totalorder %s271, %s272
    %p281 = scmp.eq.s32.totalorder %s25, 0
    %p282 = por %p280, %p281
    %p283 = scmp.ne.s32.totalorder %s271, %s272
    %p284 = scmp.eq.s32.totalorder %s26, 1
    %p285 = por %p283, %p284
    %p287 = scmp.ne.s32.totalorder %s272, %s286
    %p288 = scmp.eq.s32.totalorder %s26, 0
    %p289 = por %p287, %p288
    %s291 = sadd.s32 %s290, 1
    %p294 = scmp.eq.s32.totalorder %s20, 1
    %p295 = scmp.ne.s32.totalorder %s290, %s292
    %p296 = scmp.eq.s32.totalorder %s20, 0
    %p297 = por %p295, %p296
    %p298 = scmp.ne.s32.totalorder %s290, %s292
    %p299 = scmp.eq.s32.totalorder %s25, 1
    %p300 = por %p298, %p299
    %p301 = scmp.ne.s32.totalorder %s292, %s293
    %p302 = scmp.eq.s32.totalorder %s25, 0
    %p303 = por %p301, %p302
    %p304 = scmp.ne.s32.totalorder %s292, %s293
    %p305 = scmp.eq.s32.totalorder %s26, 1
    %p306 = por %p304, %p305
    %p308 = scmp.ne.s32.totalorder %s293, %s307
    %p309 = scmp.eq.s32.totalorder %s26, 0
    %p310 = por %p308, %p309
    %s312 = sadd.s32 %s311, 1
    %p315 = scmp.eq.s32.totalorder %s20, 1
    %p316 = scmp.ne.s32.totalorder %s311, %s313
    %p317 = scmp.eq.s32.totalorder %s20, 0
    %p318 = por %p316, %p317
    %p319 = scmp.ne.s32.totalorder %s311, %s313
    %p320 = scmp.eq.s32.totalorder %s25, 1
    %p321 = por %p319, %p320
    %p322 = scmp.ne.s32.totalorder %s313, %s314
    %p323 = scmp.eq.s32.totalorder %s25, 0
    %p324 = por %p322, %p323
    %p325 = scmp.ne.s32.totalorder %s313, %s314
    %p326 = scmp.eq.s32.totalorder %s26, 1
    %p327 = por %p325, %p326
    %p329 = scmp.ne.s32.totalorder %s314, %s328
    %p330 = scmp.eq.s32.totalorder %s26, 0
    %p331 = por %p329, %p330
    %s332 = ssub.s32 %s20, %s27
    %p333 = scmp.eq.s32.totalorder %s332, 0
    %s335 = sadd.s32 %s334, 1
    %s336 = scalar_select %p333, %s334, %s335
    %p339 = pneg %p333
    %p340 = scmp.eq.s32.totalorder %s20, 1
    %p341 = por %p339, %p340
    %p342 = scmp.ne.s32.totalorder %s334, %s337
    %p343 = scmp.eq.s32.totalorder %s20, 0
    %p344 = por %p342, %p343
    %p345 = scmp.ne.s32.totalorder %s334, %s337
    %p346 = scmp.eq.s32.totalorder %s25, 1
    %p347 = por %p345, %p346
    %p348 = scmp.ne.s32.totalorder %s337, %s338
    %p349 = scmp.eq.s32.totalorder %s25, 0
    %p350 = por %p348, %p349
    %p351 = scmp.ne.s32.totalorder %s337, %s338
    %p352 = scmp.eq.s32.totalorder %s26, 1
    %p353 = por %p351, %p352
    %p355 = scmp.ne.s32.totalorder %s338, %s354
    %p356 = scmp.eq.s32.totalorder %s26, 0
    %p357 = por %p355, %p356
    %p358 = scmp.le.s32.totalorder 1, %s20
    %p359 = scmp.lt.s32.totalorder %s20, 3
    %p360 = pnand %p358, %p359
    %p361 = pneg %p360
    // Predicated region
    $region9: #{bert_classifier_forward.4} parent=5 // pred_check
      _
    $region10: #{bert_classifier_forward.4} parent=5 // pred_check_branch
      %363 = sbr.rel (%p360) target = $region12
    $region11: #{bert_classifier_forward.4} parent=5 // pred_region
      %s364 = ssub.s32 %s20, 1
      // Predicated region
      $region13: #{bert_classifier_forward.4} parent=11 // pred_check
        %p365 = pneg %p93
      $region14: #{bert_classifier_forward.4} parent=11 // pred_check_branch
        %367 = sbr.rel (%p365) target = $region16
      $region15: #{bert_classifier_forward.4} parent=11 // pred_region
        _
      $region16: #{bert_classifier_forward.4} parent=11 // pred_fallthru
        _
      // Predicated region
      $region17: #{bert_classifier_forward.4} parent=11 // pred_check
        %p368 = pneg %p114
      $region18: #{bert_classifier_forward.4} parent=11 // pred_check_branch
        %370 = sbr.rel (%p368) target = $region20
      $region19: #{bert_classifier_forward.4} parent=11 // pred_region
        _
      $region20: #{bert_classifier_forward.4} parent=11 // pred_fallthru
        _
      // Predicated region
      $region21: #{bert_classifier_forward.4} parent=11 // pred_check
        %p371 = pneg %p135
      $region22: #{bert_classifier_forward.4} parent=11 // pred_check_branch
        %373 = sbr.rel (%p371) target = $region24
      $region23: #{bert_classifier_forward.4} parent=11 // pred_region
        _
      $region24: #{bert_classifier_forward.4} parent=11 // pred_fallthru
        _
      // Predicated region
      $region25: #{bert_classifier_forward.4} parent=11 // pred_check
        %p374 = pneg %p156
      $region26: #{bert_classifier_forward.4} parent=11 // pred_check_branch
        %376 = sbr.rel (%p374) target = $region28
      $region27: #{bert_classifier_forward.4} parent=11 // pred_region
        _
      $region28: #{bert_classifier_forward.4} parent=11 // pred_fallthru
        _
      // Predicated region
      $region29: #{bert_classifier_forward.4} parent=11 // pred_check
        %p377 = pneg %p177
      $region30: #{bert_classifier_forward.4} parent=11 // pred_check_branch
        %379 = sbr.rel (%p377) target = $region32
      $region31: #{bert_classifier_forward.4} parent=11 // pred_region
        _
      $region32: #{bert_classifier_forward.4} parent=11 // pred_fallthru
        _
      // Predicated region
      $region33: #{bert_classifier_forward.4} parent=11 // pred_check
        %p380 = pneg %p198
      $region34: #{bert_classifier_forward.4} parent=11 // pred_check_branch
        %382 = sbr.rel (%p380) target = $region36
      $region35: #{bert_classifier_forward.4} parent=11 // pred_region
        _
      $region36: #{bert_classifier_forward.4} parent=11 // pred_fallthru
        _
      // Predicated region
      $region37: #{bert_classifier_forward.4} parent=11 // pred_check
        %p383 = pneg %p219
      $region38: #{bert_classifier_forward.4} parent=11 // pred_check_branch
        %385 = sbr.rel (%p383) target = $region40
      $region39: #{bert_classifier_forward.4} parent=11 // pred_region
        _
      $region40: #{bert_classifier_forward.4} parent=11 // pred_fallthru
        _
      // Predicated region
      $region41: #{bert_classifier_forward.4} parent=11 // pred_check
        %p386 = pneg %p240
      $region42: #{bert_classifier_forward.4} parent=11 // pred_check_branch
        %388 = sbr.rel (%p386) target = $region44
      $region43: #{bert_classifier_forward.4} parent=11 // pred_region
        _
      $region44: #{bert_classifier_forward.4} parent=11 // pred_fallthru
        _
      // Predicated region
      $region45: #{bert_classifier_forward.4} parent=11 // pred_check
        %p389 = pneg %p261
      $region46: #{bert_classifier_forward.4} parent=11 // pred_check_branch
        %391 = sbr.rel (%p389) target = $region48
      $region47: #{bert_classifier_forward.4} parent=11 // pred_region
        _
      $region48: #{bert_classifier_forward.4} parent=11 // pred_fallthru
        _
      // Predicated region
      $region49: #{bert_classifier_forward.4} parent=11 // pred_check
        %p392 = pneg %p282
      $region50: #{bert_classifier_forward.4} parent=11 // pred_check_branch
        %394 = sbr.rel (%p392) target = $region52
      $region51: #{bert_classifier_forward.4} parent=11 // pred_region
        _
      $region52: #{bert_classifier_forward.4} parent=11 // pred_fallthru
        _
      // Predicated region
      $region53: #{bert_classifier_forward.4} parent=11 // pred_check
        %p395 = pneg %p303
      $region54: #{bert_classifier_forward.4} parent=11 // pred_check_branch
        %397 = sbr.rel (%p395) target = $region56
      $region55: #{bert_classifier_forward.4} parent=11 // pred_region
        _
      $region56: #{bert_classifier_forward.4} parent=11 // pred_fallthru
        _
      // Predicated region
      $region57: #{bert_classifier_forward.4} parent=11 // pred_check
        %p398 = pneg %p324
      $region58: #{bert_classifier_forward.4} parent=11 // pred_check_branch
        %400 = sbr.rel (%p398) target = $region60
      $region59: #{bert_classifier_forward.4} parent=11 // pred_region
        _
      $region60: #{bert_classifier_forward.4} parent=11 // pred_fallthru
        _
    $region12: #{bert_classifier_forward.4} parent=5 // pred_fallthru
      _
    %p401 = scmp.lt.s32.totalorder %s20, 2
    // Predicated region
    $region61: #{bert_classifier_forward.4} parent=5 // pred_check
      %p402 = pneg %p401
    $region62: #{bert_classifier_forward.4} parent=5 // pred_check_branch
      %404 = sbr.rel (%p402) target = $region64
    $region63: #{bert_classifier_forward.4} parent=5 // pred_region
      // Predicated region
      $region65: #{bert_classifier_forward.4} parent=63 // pred_check
        %p405 = pneg %p40
      $region66: #{bert_classifier_forward.4} parent=63 // pred_check_branch
        %407 = sbr.rel (%p405) target = $region68
      $region67: #{bert_classifier_forward.4} parent=63 // pred_region
        %p408 = scmp.lt.s32.totalorder %s20, 1
        %s409 = scalar_select %p408, %s20, 1
        %s410 = smul.addr %s409, 8
        %s411 = scalar_lea.vmem %s0, %s410
      $region68: #{bert_classifier_forward.4} parent=63 // pred_fallthru
        _
      // Predicated region
      $region69: #{bert_classifier_forward.4} parent=63 // pred_check
        %p412 = pneg %p66
      $region70: #{bert_classifier_forward.4} parent=63 // pred_check_branch
        %414 = sbr.rel (%p412) target = $region72
      $region71: #{bert_classifier_forward.4} parent=63 // pred_region
        %p415 = scmp.lt.s32.totalorder %s20, 1
        %s416 = scalar_select %p415, %s20, 1
        %s417 = scalar_lea.vmem %s1, %s416
      $region72: #{bert_classifier_forward.4} parent=63 // pred_fallthru
        _
    $region64: #{bert_classifier_forward.4} parent=5 // pred_fallthru
      _
    %p418 = scmp.le.s32.totalorder 1, %s20
    %p419 = scmp.lt.s32.totalorder %s20, 3
    %p420 = pnand %p418, %p419
    %p421 = pneg %p420
    // Predicated region
    $region73: #{bert_classifier_forward.4} parent=5 // pred_check
      _
    $region74: #{bert_classifier_forward.4} parent=5 // pred_check_branch
      %423 = sbr.rel (%p420) target = $region76
    $region75: #{bert_classifier_forward.4} parent=5 // pred_region
      %s424 = ssub.s32 %s20, 1
      %p425 = scmp.lt.s32.totalorder %s25, 1
      %s426 = scalar_select %p425, %s25, 1
      %s427 = smul.addr %s426, 8
      %s428 = scalar_lea.vmem %s0, %s427
      %p429 = pneg %p46
      %p430 = pneg %p43
      %p431 = scmp.lt.s32.totalorder %s25, 1
      %s432 = scalar_select %p431, %s25, 1
      %s433 = scalar_lea.vmem %s1, %s432
      %p434 = pneg %p72
      %p435 = pneg %p69
      %p436 = pneg %p93
      %p437 = pneg %p90
      %p438 = pneg %p114
      %p439 = pneg %p111
      %p440 = pneg %p135
      %p441 = pneg %p132
      %p442 = pneg %p156
      %p443 = pneg %p153
      %p444 = pneg %p177
      %p445 = pneg %p174
      %p446 = pneg %p198
      %p447 = pneg %p195
      %p448 = pneg %p219
      %p449 = pneg %p216
      %p450 = pneg %p240
      %p451 = pneg %p237
      %p452 = pneg %p261
      %p453 = pneg %p258
      %p454 = pneg %p282
      %p455 = pneg %p279
      %p456 = pneg %p303
      %p457 = pneg %p300
      %p458 = pneg %p324
      %p459 = pneg %p321
      %p460 = pneg %p350
      %p461 = pneg %p347
      %p462 = scmp.lt.s32.totalorder %s25, 1
      %s463 = scalar_select %p462, %s25, 1
      %s464 = smul.addr %s463, 8
      %s465 = scalar_lea.vmem %s14, %s464
      %p466 = scmp.lt.s32.totalorder %s25, 1
      %s467 = scalar_select %p466, %s25, 1
      %s468 = smul.addr %s467, 8
      %s469 = scalar_lea.vmem %s0, %s468
      %p470 = scmp.lt.s32.totalorder %s25, 1
      %s471 = scalar_select %p470, %s25, 1
      %s472 = scalar_lea.vmem %s1, %s471
      %p473 = scmp.lt.s32.totalorder %s25, 1
      %s474 = scalar_select %p473, %s25, 1
      %s475 = smul.addr %s474, 8
      %s476 = scalar_lea.vmem %s14, %s475
      %v478 = vld [vmem:[%s469] sm:$0xff]
      %v479 = vpack.c.bf16 %v478, %v478
      %v480 = vld [vmem:[%s2] sm:$0xf]
      %v481 = vld [vmem:[%s2 + $0x4] sm:$0xf]
      %v482 = vld [vmem:[%s2 + $0x8] sm:$0xf]
      %v483 = vld [vmem:[%s2 + $0xc] sm:$0xf]
      %v484 = vld [vmem:[%s3] sm:$0x1]
      %v486 = vlaneseq
      %v487 = vshrl.u32 %v486, 7
      %v488 = vsub.s32 0, %v487
      %v489 = vrot.slane %v484, %v488
      %v495 = vunpack.c.l.b16 %v480
      %v496 = vunpack.c.l.b16 %v481
      %v497 = vunpack.c.l.b16 %v482
      %v498 = vunpack.c.l.b16 %v483
      %v499 = vpack.c.b16 %v496, %v495
      %v500 = vpack.c.b16 %v498, %v497
      %vm503 = vcmask 261120
      %v505 = vsel %vm503, %v479, 0
      %507 = vmatprep.subr.bf16.mxu0 0
      %508 = vmatpush1.bf16.msra.mxu0 %v499
      %509 = vmatprep.subr.bf16.mxu0 0
      %510 = vmatpush1.bf16.msra.mxu0 %v500
      %511 = vmatprep.subr.bf16.mxu0 0
      %512 = vmatpush1.bf16.msra.mxu0 0
      %513 = vmatprep.subr.bf16.mxu0 0
      %514 = vmatpush1.bf16.msra.mxu0 0
      %515 = vmatprep.subr.bf16.mxu0 0
      %516 = vmatpush1.bf16.msra.mxu0 0
      %517 = vmatprep.subr.bf16.mxu0 0
      %518 = vmatpush1.bf16.msra.mxu0 0
      %519 = vmatprep.subr.bf16.mxu0 0
      %520 = vmatpush1.bf16.msra.mxu0 0
      %521 = vmatprep.subr.bf16.mxu0 0
      %522 = vmatpush1.bf16.msra.mxu0 0
      %523 = vmatprep.subr.bf16.mxu0 0
      %524 = vmatpush1.bf16.msra.mxu0 0
      %525 = vmatprep.subr.bf16.mxu0 0
      %526 = vmatpush1.bf16.msra.mxu0 0
      %527 = vmatprep.subr.bf16.mxu0 0
      %528 = vmatpush1.bf16.msra.mxu0 0
      %529 = vmatprep.subr.bf16.mxu0 0
      %530 = vmatpush1.bf16.msra.mxu0 0
      %531 = vmatprep.subr.bf16.mxu0 0
      %532 = vmatpush1.bf16.msra.mxu0 0
      %533 = vmatprep.subr.bf16.mxu0 0
      %534 = vmatpush1.bf16.msra.mxu0 0
      %535 = vmatprep.subr.bf16.mxu0 0
      %536 = vmatpush1.bf16.msra.mxu0 0
      %537 = vmatprep.subr.bf16.mxu0 0
      %538 = vmatpush1.bf16.msra.mxu0 0
      %539 = vmatprep.mubr.bf16.mxu0 0
      %540 = vmatmul.mubr.bf16.gmra.mrb[0].mxu0 %v505
      %v541 = vpop.f32.mrb[0].mxu0
      %v542 = vadd.f32 %v489, %v541
      %v543 = vpop.f32.mrb[0].mxu0
      %v544 = vpop.f32.mrb[0].mxu0
      %v545 = vpop.f32.mrb[0].mxu0
      %546 = vdwg.mxu0
      %v547 = vld [vmem:[%s472] sm:$0x1]
      %v548 = vmul.f32 %v542, 0.35355338
      %v549 = vpack.c.bf16 %v548, %v548
      %v550 = vpack.c.bf16 %v542, %v542
      %v552 = vlaneseq
      %v553 = vshrl.u32 %v552, 7
      %v554 = vsub.s32 0, %v553
      %v555 = vrot.slane %v547, %v554
      %558 = vrot.lane.b32.xlu0 %v550, 96
      %v559 = vpop.permute.xlu0 %558
      %vm560 = vcmask 64512
      %v562 = vsel %vm560, %v549, 0
      %v565 = vsel %vm560, %v559, 0
      %567 = vmatprep.subr.bf16.mxu0 0
      %568 = vmatpush1.bf16.xpose.msra.mxu0 %v565
      %569 = vmatprep.subr.bf16.mxu0 0
      %570 = vmatpush1.bf16.xpose.msra.mxu0 0
      %571 = vmatprep.subr.bf16.mxu0 0
      %572 = vmatpush1.bf16.xpose.msra.mxu0 0
      %573 = vmatprep.subr.bf16.mxu0 0
      %574 = vmatpush1.bf16.xpose.msra.mxu0 0
      %575 = vmatprep.subr.bf16.mxu0 0
      %576 = vmatpush1.bf16.xpose.msra.mxu0 0
      %577 = vmatprep.subr.bf16.mxu0 0
      %578 = vmatpush1.bf16.xpose.msra.mxu0 0
      %579 = vmatprep.subr.bf16.mxu0 0
      %580 = vmatpush1.bf16.xpose.msra.mxu0 0
      %581 = vmatprep.subr.bf16.mxu0 0
      %582 = vmatpush1.bf16.xpose.msra.mxu0 0
      %583 = vmatprep.subr.bf16.mxu0 0
      %584 = vmatpush1.bf16.xpose.msra.mxu0 0
      %585 = vmatprep.subr.bf16.mxu0 0
      %586 = vmatpush1.bf16.xpose.msra.mxu0 0
      %587 = vmatprep.subr.bf16.mxu0 0
      %588 = vmatpush1.bf16.xpose.msra.mxu0 0
      %589 = vmatprep.subr.bf16.mxu0 0
      %590 = vmatpush1.bf16.xpose.msra.mxu0 0
      %591 = vmatprep.subr.bf16.mxu0 0
      %592 = vmatpush1.bf16.xpose.msra.mxu0 0
      %593 = vmatprep.subr.bf16.mxu0 0
      %594 = vmatpush1.bf16.xpose.msra.mxu0 0
      %595 = vmatprep.subr.bf16.mxu0 0
      %596 = vmatpush1.bf16.xpose.msra.mxu0 0
      %597 = vmatprep.subr.bf16.mxu0 0
      %598 = vmatpush1.bf16.xpose.msra.mxu0 0
      %599 = vmatprep.mubr.bf16.mxu0 0
      %600 = vmatmul.mubr.bf16.gmra.mrb[0].mxu0 %v562
      %v601 = vpop.f32.mrb[0].mxu0
      %v602 = vadd.f32 %v555, %v601
      %v603 = vpop.f32.mrb[0].mxu0
      %v604 = vpop.f32.mrb[0].mxu0
      %v605 = vpop.f32.mrb[0].mxu0
      %606 = vdwg.mxu0
      %v607 = vsel %vm560, %v602, -inf
      %608 = vmax.xlane.f32.xlu0 %v607
      %v609 = vpop.xlane.xlu0 %608
      %v610 = vsub.f32 %v602, %v609
      %v611 = vmul.f32 %v610, 1.442695
      %v612 = vpow.pop %v611
      %v613 = vsel %vm560, %v612, 0.0
      %614 = vadd.xlane.f32.xlu0 %v613
      %v615 = vpop.xlane.xlu0 %614
      %v616 = vrcp.pop %v615
      %v617 = vmul.f32 %v612, %v616
      %v618 = vpack.c.bf16 %v617, %v617
      %619 = vrot.lane.b32.xlu0 %v550, 64
      %v620 = vpop.permute.xlu0 %619
      %v622 = vsel %vm560, %v618, 0
      %vm624 = vcmask 1043456
      %v626 = vsel %vm624, %v620, 0
      %628 = vmatprep.subr.bf16.mxu0 0
      %629 = vmatpush1.bf16.msra.mxu0 %v626
      %630 = vmatprep.subr.bf16.mxu0 0
      %631 = vmatpush1.bf16.msra.mxu0 0
      %632 = vmatprep.subr.bf16.mxu0 0
      %633 = vmatpush1.bf16.msra.mxu0 0
      %634 = vmatprep.subr.bf16.mxu0 0
      %635 = vmatpush1.bf16.msra.mxu0 0
      %636 = vmatprep.subr.bf16.mxu0 0
      %637 = vmatpush1.bf16.msra.mxu0 0
      %638 = vmatprep.subr.bf16.mxu0 0
      %639 = vmatpush1.bf16.msra.mxu0 0
      %640 = vmatprep.subr.bf16.mxu0 0
      %641 = vmatpush1.bf16.msra.mxu0 0
      %642 = vmatprep.subr.bf16.mxu0 0
      %643 = vmatpush1.bf16.msra.mxu0 0
      %644 = vmatprep.subr.bf16.mxu0 0
      %645 = vmatpush1.bf16.msra.mxu0 0
      %646 = vmatprep.subr.bf16.mxu0 0
      %647 = vmatpush1.bf16.msra.mxu0 0
      %648 = vmatprep.subr.bf16.mxu0 0
      %649 = vmatpush1.bf16.msra.mxu0 0
      %650 = vmatprep.subr.bf16.mxu0 0
      %651 = vmatpush1.bf16.msra.mxu0 0
      %652 = vmatprep.subr.bf16.mxu0 0
      %653 = vmatpush1.bf16.msra.mxu0 0
      %654 = vmatprep.subr.bf16.mxu0 0
      %655 = vmatpush1.bf16.msra.mxu0 0
      %656 = vmatprep.subr.bf16.mxu0 0
      %657 = vmatpush1.bf16.msra.mxu0 0
      %658 = vmatprep.subr.bf16.mxu0 0
      %659 = vmatpush1.bf16.msra.mxu0 0
      %660 = vmatprep.mubr.bf16.mxu0 0
      %661 = vmatmul.mubr.bf16.gmra.mrb[0].mxu0 %v622
      %v662 = vpop.f32.mrb[0].mxu0
      %v663 = vadd.f32 0.0, %v662
      %v664 = vpop.f32.mrb[0].mxu0
      %v665 = vpop.f32.mrb[0].mxu0
      %v666 = vpop.f32.mrb[0].mxu0
      %667 = vdwg.mxu0
      %668 = vst.msk [vmem:[#allocation2] sm:$0xff] %vm560, %v663
      %670 = vrot.lane.b32.xlu0 %v549, 120
      %v671 = vpop.permute.xlu0 %670
      %672 = vrot.lane.b32.xlu0 %v550, 88
      %v673 = vpop.permute.xlu0 %672
      %v675 = vsel %vm560, %v671, 0
      %v678 = vsel %vm560, %v673, 0
      %680 = vmatprep.subr.bf16.mxu0 0
      %681 = vmatpush1.bf16.xpose.msra.mxu0 %v678
      %682 = vmatprep.subr.bf16.mxu0 0
      %683 = vmatpush1.bf16.xpose.msra.mxu0 0
      %684 = vmatprep.subr.bf16.mxu0 0
      %685 = vmatpush1.bf16.xpose.msra.mxu0 0
      %686 = vmatprep.subr.bf16.mxu0 0
      %687 = vmatpush1.bf16.xpose.msra.mxu0 0
      %688 = vmatprep.subr.bf16.mxu0 0
      %689 = vmatpush1.bf16.xpose.msra.mxu0 0
      %690 = vmatprep.subr.bf16.mxu0 0
      %691 = vmatpush1.bf16.xpose.msra.mxu0 0
      %692 = vmatprep.subr.bf16.mxu0 0
      %693 = vmatpush1.bf16.xpose.msra.mxu0 0
      %694 = vmatprep.subr.bf16.mxu0 0
      %695 = vmatpush1.bf16.xpose.msra.mxu0 0
      %696 = vmatprep.subr.bf16.mxu0 0
      %697 = vmatpush1.bf16.xpose.msra.mxu0 0
      %698 = vmatprep.subr.bf16.mxu0 0
      %699 = vmatpush1.bf16.xpose.msra.mxu0 0
      %700 = vmatprep.subr.bf16.mxu0 0
      %701 = vmatpush1.bf16.xpose.msra.mxu0 0
      %702 = vmatprep.subr.bf16.mxu0 0
      %703 = vmatpush1.bf16.xpose.msra.mxu0 0
      %704 = vmatprep.subr.bf16.mxu0 0
      %705 = vmatpush1.bf16.xpose.msra.mxu0 0
      %706 = vmatprep.subr.bf16.mxu0 0
      %707 = vmatpush1.bf16.xpose.msra.mxu0 0
      %708 = vmatprep.subr.bf16.mxu0 0
      %709 = vmatpush1.bf16.xpose.msra.mxu0 0
      %710 = vmatprep.subr.bf16.mxu0 0
      %711 = vmatpush1.bf16.xpose.msra.mxu0 0
      %712 = vmatprep.mubr.bf16.mxu0 0
      %713 = vmatmul.mubr.bf16.gmra.mrb[0].mxu0 %v675
      %v714 = vpop.f32.mrb[0].mxu0
      %v715 = vadd.f32 %v555, %v714
      %v716 = vpop.f32.mrb[0].mxu0
      %v717 = vpop.f32.mrb[0].mxu0
      %v718 = vpop.f32.mrb[0].mxu0
      %719 = vdwg.mxu0
      %v720 = vsel %vm560, %v715, -inf
      %721 = vmax.xlane.f32.xlu0 %v720
      %v722 = vpop.xlane.xlu0 %721
      %v723 = vsub.f32 %v715, %v722
      %v724 = vmul.f32 %v723, 1.442695
      %v725 = vpow.pop %v724
      %v726 = vsel %vm560, %v725, 0.0
      %727 = vadd.xlane.f32.xlu0 %v726
      %v728 = vpop.xlane.xlu0 %727
      %v729 = vrcp.pop %v728
      %v730 = vmul.f32 %v725, %v729
      %v731 = vpack.c.bf16 %v730, %v730
      %732 = vrot.lane.b32.xlu0 %v550, 56
      %v733 = vpop.permute.xlu0 %732
      %v735 = vsel %vm560, %v731, 0
      %v738 = vsel %vm624, %v733, 0
      %740 = vmatprep.subr.bf16.mxu0 0
      %741 = vmatpush1.bf16.msra.mxu0 %v738
      %742 = vmatprep.subr.bf16.mxu0 0
      %743 = vmatpush1.bf16.msra.mxu0 0
      %744 = vmatprep.subr.bf16.mxu0 0
      %745 = vmatpush1.bf16.msra.mxu0 0
      %746 = vmatprep.subr.bf16.mxu0 0
      %747 = vmatpush1.bf16.msra.mxu0 0
      %748 = vmatprep.subr.bf16.mxu0 0
      %749 = vmatpush1.bf16.msra.mxu0 0
      %750 = vmatprep.subr.bf16.mxu0 0
      %751 = vmatpush1.bf16.msra.mxu0 0
      %752 = vmatprep.subr.bf16.mxu0 0
      %753 = vmatpush1.bf16.msra.mxu0 0
      %754 = vmatprep.subr.bf16.mxu0 0
      %755 = vmatpush1.bf16.msra.mxu0 0
      %756 = vmatprep.subr.bf16.mxu0 0
      %757 = vmatpush1.bf16.msra.mxu0 0
      %758 = vmatprep.subr.bf16.mxu0 0
      %759 = vmatpush1.bf16.msra.mxu0 0
      %760 = vmatprep.subr.bf16.mxu0 0
      %761 = vmatpush1.bf16.msra.mxu0 0
      %762 = vmatprep.subr.bf16.mxu0 0
      %763 = vmatpush1.bf16.msra.mxu0 0
      %764 = vmatprep.subr.bf16.mxu0 0
      %765 = vmatpush1.bf16.msra.mxu0 0
      %766 = vmatprep.subr.bf16.mxu0 0
      %767 = vmatpush1.bf16.msra.mxu0 0
      %768 = vmatprep.subr.bf16.mxu0 0
      %769 = vmatpush1.bf16.msra.mxu0 0
      %770 = vmatprep.subr.bf16.mxu0 0
      %771 = vmatpush1.bf16.msra.mxu0 0
      %772 = vmatprep.mubr.bf16.mxu0 0
      %773 = vmatmul.mubr.bf16.gmra.mrb[0].mxu0 %v735
      %v774 = vpop.f32.mrb[0].mxu0
      %v775 = vadd.f32 0.0, %v774
      %v776 = vpop.f32.mrb[0].mxu0
      %v777 = vpop.f32.mrb[0].mxu0
      %v778 = vpop.f32.mrb[0].mxu0
      %779 = vdwg.mxu0
      %781 = vrot.lane.b32.xlu0 %v775, 8
      %v782 = vpop.permute.xlu0 %781
      %vm784 = vcmask 130112
      %785 = vst.msk [vmem:[#allocation2] sm:$0xff] %vm784, %v782
      %786 = vrot.lane.b32.xlu0 %v549, 112
      %v787 = vpop.permute.xlu0 %786
      %788 = vrot.lane.b32.xlu0 %v550, 80
      %v789 = vpop.permute.xlu0 %788
      %v791 = vsel %vm560, %v787, 0
      %v794 = vsel %vm560, %v789, 0
      %796 = vmatprep.subr.bf16.mxu0 0
      %797 = vmatpush1.bf16.xpose.msra.mxu0 %v794
      %798 = vmatprep.subr.bf16.mxu0 0
      %799 = vmatpush1.bf16.xpose.msra.mxu0 0
      %800 = vmatprep.subr.bf16.mxu0 0
      %801 = vmatpush1.bf16.xpose.msra.mxu0 0
      %802 = vmatprep.subr.bf16.mxu0 0
      %803 = vmatpush1.bf16.xpose.msra.mxu0 0
      %804 = vmatprep.subr.bf16.mxu0 0
      %805 = vmatpush1.bf16.xpose.msra.mxu0 0
      %806 = vmatprep.subr.bf16.mxu0 0
      %807 = vmatpush1.bf16.xpose.msra.mxu0 0
      %808 = vmatprep.subr.bf16.mxu0 0
      %809 = vmatpush1.bf16.xpose.msra.mxu0 0
      %810 = vmatprep.subr.bf16.mxu0 0
      %811 = vmatpush1.bf16.xpose.msra.mxu0 0
      %812 = vmatprep.subr.bf16.mxu0 0
      %813 = vmatpush1.bf16.xpose.msra.mxu0 0
      %814 = vmatprep.subr.bf16.mxu0 0
      %815 = vmatpush1.bf16.xpose.msra.mxu0 0
      %816 = vmatprep.subr.bf16.mxu0 0
      %817 = vmatpush1.bf16.xpose.msra.mxu0 0
      %818 = vmatprep.subr.bf16.mxu0 0
      %819 = vmatpush1.bf16.xpose.msra.mxu0 0
      %820 = vmatprep.subr.bf16.mxu0 0
      %821 = vmatpush1.bf16.xpose.msra.mxu0 0
      %822 = vmatprep.subr.bf16.mxu0 0
      %823 = vmatpush1.bf16.xpose.msra.mxu0 0
      %824 = vmatprep.subr.bf16.mxu0 0
      %825 = vmatpush1.bf16.xpose.msra.mxu0 0
      %826 = vmatprep.subr.bf16.mxu0 0
      %827 = vmatpush1.bf16.xpose.msra.mxu0 0
      %828 = vmatprep.mubr.bf16.mxu0 0
      %829 = vmatmul.mubr.bf16.gmra.mrb[0].mxu0 %v791
      %v830 = vpop.f32.mrb[0].mxu0
      %v831 = vadd.f32 %v555, %v830
      %v832 = vpop.f32.mrb[0].mxu0
      %v833 = vpop.f32.mrb[0].mxu0
      %v834 = vpop.f32.mrb[0].mxu0
      %835 = vdwg.mxu0
      %v836 = vsel %vm560, %v831, -inf
      %837 = vmax.xlane.f32.xlu0 %v836
      %v838 = vpop.xlane.xlu0 %837
      %v839 = vsub.f32 %v831, %v838
      %v840 = vmul.f32 %v839, 1.442695
      %v841 = vpow.pop %v840
      %v842 = vsel %vm560, %v841, 0.0
      %843 = vadd.xlane.f32.xlu0 %v842
      %v844 = vpop.xlane.xlu0 %843
      %v845 = vrcp.pop %v844
      %v846 = vmul.f32 %v841, %v845
      %v847 = vpack.c.bf16 %v846, %v846
      %848 = vrot.lane.b32.xlu0 %v550, 48
      %v849 = vpop.permute.xlu0 %848
      %v851 = vsel %vm560, %v847, 0
      %v854 = vsel %vm624, %v849, 0
      %856 = vmatprep.subr.bf16.mxu0 0
      %857 = vmatpush1.bf16.msra.mxu0 %v854
      %858 = vmatprep.subr.bf16.mxu0 0
      %859 = vmatpush1.bf16.msra.mxu0 0
      %860 = vmatprep.subr.bf16.mxu0 0
      %861 = vmatpush1.bf16.msra.mxu0 0
      %862 = vmatprep.subr.bf16.mxu0 0
      %863 = vmatpush1.bf16.msra.mxu0 0
      %864 = vmatprep.subr.bf16.mxu0 0
      %865 = vmatpush1.bf16.msra.mxu0 0
      %866 = vmatprep.subr.bf16.mxu0 0
      %867 = vmatpush1.bf16.msra.mxu0 0
      %868 = vmatprep.subr.bf16.mxu0 0
      %869 = vmatpush1.bf16.msra.mxu0 0
      %870 = vmatprep.subr.bf16.mxu0 0
      %871 = vmatpush1.bf16.msra.mxu0 0
      %872 = vmatprep.subr.bf16.mxu0 0
      %873 = vmatpush1.bf16.msra.mxu0 0
      %874 = vmatprep.subr.bf16.mxu0 0
      %875 = vmatpush1.bf16.msra.mxu0 0
      %876 = vmatprep.subr.bf16.mxu0 0
      %877 = vmatpush1.bf16.msra.mxu0 0
      %878 = vmatprep.subr.bf16.mxu0 0
      %879 = vmatpush1.bf16.msra.mxu0 0
      %880 = vmatprep.subr.bf16.mxu0 0
      %881 = vmatpush1.bf16.msra.mxu0 0
      %882 = vmatprep.subr.bf16.mxu0 0
      %883 = vmatpush1.bf16.msra.mxu0 0
      %884 = vmatprep.subr.bf16.mxu0 0
      %885 = vmatpush1.bf16.msra.mxu0 0
      %886 = vmatprep.subr.bf16.mxu0 0
      %887 = vmatpush1.bf16.msra.mxu0 0
      %888 = vmatprep.mubr.bf16.mxu0 0
      %889 = vmatmul.mubr.bf16.gmra.mrb[0].mxu0 %v851
      %v890 = vpop.f32.mrb[0].mxu0
      %v891 = vadd.f32 0.0, %v890
      %v892 = vpop.f32.mrb[0].mxu0
      %v893 = vpop.f32.mrb[0].mxu0
      %v894 = vpop.f32.mrb[0].mxu0
      %895 = vdwg.mxu0
      %897 = vrot.lane.b32.xlu0 %v891, 16
      %v898 = vpop.permute.xlu0 %897
      %vm900 = vcmask 195712
      %901 = vst.msk [vmem:[#allocation2] sm:$0xff] %vm900, %v898
      %902 = vrot.lane.b32.xlu0 %v549, 104
      %v903 = vpop.permute.xlu0 %902
      %904 = vrot.lane.b32.xlu0 %v550, 72
      %v905 = vpop.permute.xlu0 %904
      %v907 = vsel %vm560, %v903, 0
      %v910 = vsel %vm560, %v905, 0
      %912 = vmatprep.subr.bf16.mxu0 0
      %913 = vmatpush1.bf16.xpose.msra.mxu0 %v910
      %914 = vmatprep.subr.bf16.mxu0 0
      %915 = vmatpush1.bf16.xpose.msra.mxu0 0
      %916 = vmatprep.subr.bf16.mxu0 0
      %917 = vmatpush1.bf16.xpose.msra.mxu0 0
      %918 = vmatprep.subr.bf16.mxu0 0
      %919 = vmatpush1.bf16.xpose.msra.mxu0 0
      %920 = vmatprep.subr.bf16.mxu0 0
      %921 = vmatpush1.bf16.xpose.msra.mxu0 0
      %922 = vmatprep.subr.bf16.mxu0 0
      %923 = vmatpush1.bf16.xpose.msra.mxu0 0
      %924 = vmatprep.subr.bf16.mxu0 0
      %925 = vmatpush1.bf16.xpose.msra.mxu0 0
      %926 = vmatprep.subr.bf16.mxu0 0
      %927 = vmatpush1.bf16.xpose.msra.mxu0 0
      %928 = vmatprep.subr.bf16.mxu0 0
      %929 = vmatpush1.bf16.xpose.msra.mxu0 0
      %930 = vmatprep.subr.bf16.mxu0 0
      %931 = vmatpush1.bf16.xpose.msra.mxu0 0
      %932 = vmatprep.subr.bf16.mxu0 0
      %933 = vmatpush1.bf16.xpose.msra.mxu0 0
      %934 = vmatprep.subr.bf16.mxu0 0
      %935 = vmatpush1.bf16.xpose.msra.mxu0 0
      %936 = vmatprep.subr.bf16.mxu0 0
      %937 = vmatpush1.bf16.xpose.msra.mxu0 0
      %938 = vmatprep.subr.bf16.mxu0 0
      %939 = vmatpush1.bf16.xpose.msra.mxu0 0
      %940 = vmatprep.subr.bf16.mxu0 0
      %941 = vmatpush1.bf16.xpose.msra.mxu0 0
      %942 = vmatprep.subr.bf16.mxu0 0
      %943 = vmatpush1.bf16.xpose.msra.mxu0 0
      %944 = vmatprep.mubr.bf16.mxu0 0
      %945 = vmatmul.mubr.bf16.gmra.mrb[0].mxu0 %v907
      %v946 = vpop.f32.mrb[0].mxu0
      %v947 = vadd.f32 %v555, %v946
      %v948 = vpop.f32.mrb[0].mxu0
      %v949 = vpop.f32.mrb[0].mxu0
      %v950 = vpop.f32.mrb[0].mxu0
      %951 = vdwg.mxu0
      %v952 = vsel %vm560, %v947, -inf
      %953 = vmax.xlane.f32.xlu0 %v952
      %v954 = vpop.xlane.xlu0 %953
      %v955 = vsub.f32 %v947, %v954
      %v956 = vmul.f32 %v955, 1.442695
      %v957 = vpow.pop %v956
      %v958 = vsel %vm560, %v957, 0.0
      %959 = vadd.xlane.f32.xlu0 %v958
      %v960 = vpop.xlane.xlu0 %959
      %v961 = vrcp.pop %v960
      %v962 = vmul.f32 %v957, %v961
      %v963 = vpack.c.bf16 %v962, %v962
      %964 = vrot.lane.b32.xlu0 %v550, 40
      %v965 = vpop.permute.xlu0 %964
      %v967 = vsel %vm560, %v963, 0
      %v970 = vsel %vm624, %v965, 0
      %972 = vmatprep.subr.bf16.mxu0 0
      %973 = vmatpush1.bf16.msra.mxu0 %v970
      %974 = vmatprep.subr.bf16.mxu0 0
      %975 = vmatpush1.bf16.msra.mxu0 0
      %976 = vmatprep.subr.bf16.mxu0 0
      %977 = vmatpush1.bf16.msra.mxu0 0
      %978 = vmatprep.subr.bf16.mxu0 0
      %979 = vmatpush1.bf16.msra.mxu0 0
      %980 = vmatprep.subr.bf16.mxu0 0
      %981 = vmatpush1.bf16.msra.mxu0 0
      %982 = vmatprep.subr.bf16.mxu0 0
      %983 = vmatpush1.bf16.msra.mxu0 0
      %984 = vmatprep.subr.bf16.mxu0 0
      %985 = vmatpush1.bf16.msra.mxu0 0
      %986 = vmatprep.subr.bf16.mxu0 0
      %987 = vmatpush1.bf16.msra.mxu0 0
      %988 = vmatprep.subr.bf16.mxu0 0
      %989 = vmatpush1.bf16.msra.mxu0 0
      %990 = vmatprep.subr.bf16.mxu0 0
      %991 = vmatpush1.bf16.msra.mxu0 0
      %992 = vmatprep.subr.bf16.mxu0 0
      %993 = vmatpush1.bf16.msra.mxu0 0
      %994 = vmatprep.subr.bf16.mxu0 0
      %995 = vmatpush1.bf16.msra.mxu0 0
      %996 = vmatprep.subr.bf16.mxu0 0
      %997 = vmatpush1.bf16.msra.mxu0 0
      %998 = vmatprep.subr.bf16.mxu0 0
      %999 = vmatpush1.bf16.msra.mxu0 0
      %1000 = vmatprep.subr.bf16.mxu0 0
      %1001 = vmatpush1.bf16.msra.mxu0 0
      %1002 = vmatprep.subr.bf16.mxu0 0
      %1003 = vmatpush1.bf16.msra.mxu0 0
      %1004 = vmatprep.mubr.bf16.mxu0 0
      %1005 = vmatmul.mubr.bf16.gmra.mrb[0].mxu0 %v967
      %v1006 = vpop.f32.mrb[0].mxu0
      %v1007 = vadd.f32 0.0, %v1006
      %v1008 = vpop.f32.mrb[0].mxu0
      %v1009 = vpop.f32.mrb[0].mxu0
      %v1010 = vpop.f32.mrb[0].mxu0
      %1011 = vdwg.mxu0
      %1013 = vrot.lane.b32.xlu0 %v1007, 24
      %v1014 = vpop.permute.xlu0 %1013
      %vm1016 = vcmask 261312
      %1017 = vst.msk [vmem:[#allocation2] sm:$0xff] %vm1016, %v1014
      %v1018 = vld [vmem:[#allocation2] sm:$0xff]
      %v1019 = vpack.c.bf16 %v1018, %v1018
      %v1020 = vld [vmem:[%s4] sm:$0xf]
      %v1021 = vld [vmem:[%s4 + $0x4] sm:$0xf]
      %v1022 = vld [vmem:[%s4 + $0x8] sm:$0xf]
      %v1023 = vld [vmem:[%s4 + $0xc] sm:$0xf]
      %v1024 = vld [vmem:[%s5] sm:$0x1]
      %v1026 = vlaneseq
      %v1027 = vshrl.u32 %v1026, 7
      %v1028 = vsub.s32 0, %v1027
      %v1029 = vrot.slane %v1024, %v1028
      %v1035 = vunpack.c.l.b16 %v1020
      %v1036 = vunpack.c.l.b16 %v1021
      %v1037 = vunpack.c.l.b16 %v1022
      %v1038 = vunpack.c.l.b16 %v1023
      %v1039 = vpack.c.b16 %v1036, %v1035
      %v1040 = vpack.c.b16 %v1038, %v1037
      %v1044 = vsel %vm503, %v1019, 0
      %1046 = vmatprep.subr.bf16.mxu0 0
      %1047 = vmatpush1.bf16.msra.mxu0 %v1039
      %1048 = vmatprep.subr.bf16.mxu0 0
      %1049 = vmatpush1.bf16.msra.mxu0 %v1040
      %1050 = vmatprep.subr.bf16.mxu0 0
      %1051 = vmatpush1.bf16.msra.mxu0 0
      %1052 = vmatprep.subr.bf16.mxu0 0
      %1053 = vmatpush1.bf16.msra.mxu0 0
      %1054 = vmatprep.subr.bf16.mxu0 0
      %1055 = vmatpush1.bf16.msra.mxu0 0
      %1056 = vmatprep.subr.bf16.mxu0 0
      %1057 = vmatpush1.bf16.msra.mxu0 0
      %1058 = vmatprep.subr.bf16.mxu0 0
      %1059 = vmatpush1.bf16.msra.mxu0 0
      %1060 = vmatprep.subr.bf16.mxu0 0
      %1061 = vmatpush1.bf16.msra.mxu0 0
      %1062 = vmatprep.subr.bf16.mxu0 0
      %1063 = vmatpush1.bf16.msra.mxu0 0
      %1064 = vmatprep.subr.bf16.mxu0 0
      %1065 = vmatpush1.bf16.msra.mxu0 0
      %1066 = vmatprep.subr.bf16.mxu0 0
      %1067 = vmatpush1.bf16.msra.mxu0 0
      %1068 = vmatprep.subr.bf16.mxu0 0
      %1069 = vmatpush1.bf16.msra.mxu0 0
      %1070 = vmatprep.subr.bf16.mxu0 0
      %1071 = vmatpush1.bf16.msra.mxu0 0
      %1072 = vmatprep.subr.bf16.mxu0 0
      %1073 = vmatpush1.bf16.msra.mxu0 0
      %1074 = vmatprep.subr.bf16.mxu0 0
      %1075 = vmatpush1.bf16.msra.mxu0 0
      %1076 = vmatprep.subr.bf16.mxu0 0
      %1077 = vmatpush1.bf16.msra.mxu0 0
      %1078 = vmatprep.mubr.bf16.mxu0 0
      %1079 = vmatmul.mubr.bf16.gmra.mrb[0].mxu0 %v1044
      %v1080 = vpop.f32.mrb[0].mxu0
      %v1081 = vadd.f32 %v1029, %v1080
      %v1082 = vpop.f32.mrb[0].mxu0
      %v1083 = vpop.f32.mrb[0].mxu0
      %v1084 = vpop.f32.mrb[0].mxu0
      %1085 = vdwg.mxu0
      %v1086 = vadd.f32 %v1081, %v478
      %v1087 = vld [vmem:[%s6] sm:$0x1]
      %v1088 = vld [vmem:[%s7] sm:$0x1]
      %v1089 = vsel %vm503, %v1086, 0.0
      %1090 = vadd.xlane.f32.xlu0 %v1089
      %v1091 = vpop.xlane.xlu0 %1090
      %v1092 = vrcp.pop 32.0
      %v1093 = vmul.f32 %v1091, %v1092
      %v1094 = vsub.f32 %v1086, %v1093
      %v1095 = vmul.f32 %v1094, %v1094
      %v1096 = vsel %vm503, %v1095, 0.0
      %1097 = vadd.xlane.f32.xlu0 %v1096
      %v1098 = vpop.xlane.xlu0 %1097
      %v1099 = vmul.f32 %v1098, %v1092
      %v1100 = vadd.f32 %v1099, 1e-12
      %v1101 = vrsqrt.pop %v1100
      %v1102 = vmul.f32 %v1094, %v1101
      %v1104 = vlaneseq
      %v1105 = vshrl.u32 %v1104, 7
      %v1106 = vsub.s32 0, %v1105
      %v1107 = vrot.slane %v1087, %v1106
      %v1109 = vmul.f32 %v1102, %v1107
      %v1111 = vlaneseq
      %v1112 = vshrl.u32 %v1111, 7
      %v1113 = vsub.s32 0, %v1112
      %v1114 = vrot.slane %v1088, %v1113
      %v1116 = vadd.f32 %v1109, %v1114
      %v1117 = vpack.c.bf16 %v1116, %v1116
      %v1118 = vld [vmem:[%s8] sm:$0xf]
      %v1119 = vld [vmem:[%s8 + $0x4] sm:$0xf]
      %v1120 = vld [vmem:[%s8 + $0x8] sm:$0xf]
      %v1121 = vld [vmem:[%s8 + $0xc] sm:$0xf]
      %v1122 = vld [vmem:[%s9] sm:$0x1]
      %v1124 = vlaneseq
      %v1125 = vshrl.u32 %v1124, 7
      %v1126 = vsub.s32 0, %v1125
      %v1127 = vrot.slane %v1122, %v1126
      %v1133 = vunpack.c.l.b16 %v1118
      %v1134 = vunpack.c.l.b16 %v1119
      %v1135 = vunpack.c.l.b16 %v1120
      %v1136 = vunpack.c.l.b16 %v1121
      %v1137 = vpack.c.b16 %v1134, %v1133
      %v1138 = vpack.c.b16 %v1136, %v1135
      %v1142 = vsel %vm503, %v1117, 0
      %1144 = vmatprep.subr.bf16.mxu0 0
      %1145 = vmatpush1.bf16.msra.mxu0 %v1137
      %1146 = vmatprep.subr.bf16.mxu0 0
      %1147 = vmatpush1.bf16.msra.mxu0 %v1138
      %1148 = vmatprep.subr.bf16.mxu0 0
      %1149 = vmatpush1.bf16.msra.mxu0 0
      %1150 = vmatprep.subr.bf16.mxu0 0
      %1151 = vmatpush1.bf16.msra.mxu0 0
      %1152 = vmatprep.subr.bf16.mxu0 0
      %1153 = vmatpush1.bf16.msra.mxu0 0
      %1154 = vmatprep.subr.bf16.mxu0 0
      %1155 = vmatpush1.bf16.msra.mxu0 0
      %1156 = vmatprep.subr.bf16.mxu0 0
      %1157 = vmatpush1.bf16.msra.mxu0 0
      %1158 = vmatprep.subr.bf16.mxu0 0
      %1159 = vmatpush1.bf16.msra.mxu0 0
      %1160 = vmatprep.subr.bf16.mxu0 0
      %1161 = vmatpush1.bf16.msra.mxu0 0
      %1162 = vmatprep.subr.bf16.mxu0 0
      %1163 = vmatpush1.bf16.msra.mxu0 0
      %1164 = vmatprep.subr.bf16.mxu0 0
      %1165 = vmatpush1.bf16.msra.mxu0 0
      %1166 = vmatprep.subr.bf16.mxu0 0
      %1167 = vmatpush1.bf16.msra.mxu0 0
      %1168 = vmatprep.subr.bf16.mxu0 0
      %1169 = vmatpush1.bf16.msra.mxu0 0
      %1170 = vmatprep.subr.bf16.mxu0 0
      %1171 = vmatpush1.bf16.msra.mxu0 0
      %1172 = vmatprep.subr.bf16.mxu0 0
      %1173 = vmatpush1.bf16.msra.mxu0 0
      %1174 = vmatprep.subr.bf16.mxu0 0
      %1175 = vmatpush1.bf16.msra.mxu0 0
      %1176 = vmatprep.mubr.bf16.mxu0 0
      %1177 = vmatmul.mubr.bf16.gmra.mrb[0].mxu0 %v1142
      %v1178 = vpop.f32.mrb[0].mxu0
      %v1179 = vadd.f32 %v1127, %v1178
      %v1180 = vpop.f32.mrb[0].mxu0
      %v1181 = vpop.f32.mrb[0].mxu0
      %v1182 = vpop.f32.mrb[0].mxu0
      %1183 = vdwg.mxu0
      %v1184 = vmul.f32 %v1179, 0.5
      %v1185 = vmul.f32 %v1179, 0.70710677
      %v1186 = verf.f32.pop %v1185
      %v1187 = vadd.f32 %v1186, 1.0
      %v1188 = vmul.f32 %v1184, %v1187
      %v1189 = vpack.c.bf16 %v1188, %v1188
      %v1190 = vld [vmem:[%s10] sm:$0xf]
      %v1191 = vld [vmem:[%s10 + $0x4] sm:$0xf]
      %v1192 = vld [vmem:[%s10 + $0x8] sm:$0xf]
      %v1193 = vld [vmem:[%s10 + $0xc] sm:$0xf]
      %v1194 = vld [vmem:[%s10 + $0x10] sm:$0xf]
      %v1195 = vld [vmem:[%s10 + $0x14] sm:$0xf]
      %v1196 = vld [vmem:[%s10 + $0x18] sm:$0xf]
      %v1197 = vld [vmem:[%s10 + $0x1c] sm:$0xf]
      %v1198 = vld [vmem:[%s10 + $0x20] sm:$0xf]
      %v1199 = vld [vmem:[%s10 + $0x24] sm:$0xf]
      %v1200 = vld [vmem:[%s10 + $0x28] sm:$0xf]
      %v1201 = vld [vmem:[%s10 + $0x2c] sm:$0xf]
      %v1202 = vld [vmem:[%s10 + $0x30] sm:$0xf]
      %v1203 = vld [vmem:[%s10 + $0x34] sm:$0xf]
      %v1204 = vld [vmem:[%s10 + $0x38] sm:$0xf]
      %v1205 = vld [vmem:[%s10 + $0x3c] sm:$0xf]
      %v1206 = vld [vmem:[%s11] sm:$0x1]
      %v1208 = vlaneseq
      %v1209 = vshrl.u32 %v1208, 7
      %v1210 = vsub.s32 0, %v1209
      %v1211 = vrot.slane %v1206, %v1210
      %v1229 = vunpack.c.l.b16 %v1190
      %v1230 = vunpack.c.l.b16 %v1191
      %v1231 = vunpack.c.l.b16 %v1192
      %v1232 = vunpack.c.l.b16 %v1193
      %v1233 = vunpack.c.l.b16 %v1194
      %v1234 = vunpack.c.l.b16 %v1195
      %v1235 = vunpack.c.l.b16 %v1196
      %v1236 = vunpack.c.l.b16 %v1197
      %v1237 = vunpack.c.l.b16 %v1198
      %v1238 = vunpack.c.l.b16 %v1199
      %v1239 = vunpack.c.l.b16 %v1200
      %v1240 = vunpack.c.l.b16 %v1201
      %v1241 = vunpack.c.l.b16 %v1202
      %v1242 = vunpack.c.l.b16 %v1203
      %v1243 = vunpack.c.l.b16 %v1204
      %v1244 = vunpack.c.l.b16 %v1205
      %v1245 = vpack.c.b16 %v1230, %v1229
      %v1246 = vpack.c.b16 %v1232, %v1231
      %v1247 = vpack.c.b16 %v1234, %v1233
      %v1248 = vpack.c.b16 %v1236, %v1235
      %v1249 = vpack.c.b16 %v1238, %v1237
      %v1250 = vpack.c.b16 %v1240, %v1239
      %v1251 = vpack.c.b16 %v1242, %v1241
      %v1252 = vpack.c.b16 %v1244, %v1243
      %1261 = vmatprep.subr.bf16.mxu0 0
      %1262 = vmatpush1.bf16.msra.mxu0 %v1245
      %1263 = vmatprep.subr.bf16.mxu0 0
      %1264 = vmatpush1.bf16.msra.mxu0 %v1246
      %1265 = vmatprep.subr.bf16.mxu0 0
      %1266 = vmatpush1.bf16.msra.mxu0 %v1247
      %1267 = vmatprep.subr.bf16.mxu0 0
      %1268 = vmatpush1.bf16.msra.mxu0 %v1248
      %1269 = vmatprep.subr.bf16.mxu0 0
      %1270 = vmatpush1.bf16.msra.mxu0 %v1249
      %1271 = vmatprep.subr.bf16.mxu0 0
      %1272 = vmatpush1.bf16.msra.mxu0 %v1250
      %1273 = vmatprep.subr.bf16.mxu0 0
      %1274 = vmatpush1.bf16.msra.mxu0 %v1251
      %1275 = vmatprep.subr.bf16.mxu0 0
      %1276 = vmatpush1.bf16.msra.mxu0 %v1252
      %1277 = vmatprep.subr.bf16.mxu0 0
      %1278 = vmatpush1.bf16.msra.mxu0 0
      %1279 = vmatprep.subr.bf16.mxu0 0
      %1280 = vmatpush1.bf16.msra.mxu0 0
      %1281 = vmatprep.subr.bf16.mxu0 0
      %1282 = vmatpush1.bf16.msra.mxu0 0
      %1283 = vmatprep.subr.bf16.mxu0 0
      %1284 = vmatpush1.bf16.msra.mxu0 0
      %1285 = vmatprep.subr.bf16.mxu0 0
      %1286 = vmatpush1.bf16.msra.mxu0 0
      %1287 = vmatprep.subr.bf16.mxu0 0
      %1288 = vmatpush1.bf16.msra.mxu0 0
      %1289 = vmatprep.subr.bf16.mxu0 0
      %1290 = vmatpush1.bf16.msra.mxu0 0
      %1291 = vmatprep.subr.bf16.mxu0 0
      %1292 = vmatpush1.bf16.msra.mxu0 0
      %1293 = vmatprep.mubr.bf16.mxu0 0
      %1294 = vmatmul.mubr.bf16.gmra.mrb[0].mxu0 %v1189
      %v1295 = vpop.f32.mrb[0].mxu0
      %v1296 = vadd.f32 %v1211, %v1295
      %v1297 = vpop.f32.mrb[0].mxu0
      %v1298 = vpop.f32.mrb[0].mxu0
      %v1299 = vpop.f32.mrb[0].mxu0
      %1300 = vdwg.mxu0
      %v1301 = vadd.f32 %v1296, %v1116
      %v1302 = vld [vmem:[%s12] sm:$0x1]
      %v1303 = vld [vmem:[%s13] sm:$0x1]
      %v1304 = vsel %vm503, %v1301, 0.0
      %1305 = vadd.xlane.f32.xlu0 %v1304
      %v1306 = vpop.xlane.xlu0 %1305
      %v1307 = vmul.f32 %v1306, %v1092
      %v1308 = vsub.f32 %v1301, %v1307
      %v1309 = vmul.f32 %v1308, %v1308
      %v1310 = vsel %vm503, %v1309, 0.0
      %1311 = vadd.xlane.f32.xlu0 %v1310
      %v1312 = vpop.xlane.xlu0 %1311
      %v1313 = vmul.f32 %v1312, %v1092
      %v1314 = vadd.f32 %v1313, 1e-12
      %v1315 = vrsqrt.pop %v1314
      %v1316 = vmul.f32 %v1308, %v1315
      %v1318 = vlaneseq
      %v1319 = vshrl.u32 %v1318, 7
      %v1320 = vsub.s32 0, %v1319
      %v1321 = vrot.slane %v1302, %v1320
      %v1323 = vmul.f32 %v1316, %v1321
      %v1325 = vlaneseq
      %v1326 = vshrl.u32 %v1325, 7
      %v1327 = vsub.s32 0, %v1326
      %v1328 = vrot.slane %v1303, %v1327
      %v1330 = vadd.f32 %v1323, %v1328
      %1331 = vst.msk [vmem:[%s476] sm:$0xff] %vm503, %v1330
      %p1332 = scmp.lt.s32.totalorder %s25, 1
      %s1333 = scalar_select %p1332, %s25, 1
      %s1334 = smul.addr %s1333, 8
      %s1335 = scalar_lea.vmem %s14, %s1334
      // Predicated region
      $region77: #{bert_classifier_forward.4} parent=75 // pred_check
        %p1336 = pneg %p347
      $region78: #{bert_classifier_forward.4} parent=75 // pred_check_branch
        %1338 = sbr.rel (%p1336) target = $region80
      $region79: #{bert_classifier_forward.4} parent=75 // pred_region
        _
      $region80: #{bert_classifier_forward.4} parent=75 // pred_fallthru
        _
    $region76: #{bert_classifier_forward.4} parent=5 // pred_fallthru
      _
    %p1339 = scmp.le.s32.totalorder 2, %s20
    // Predicated region
    $region81: #{bert_classifier_forward.4} parent=5 // pred_check
      %p1340 = pneg %p1339
    $region82: #{bert_classifier_forward.4} parent=5 // pred_check_branch
      %1342 = sbr.rel (%p1340) target = $region84
    $region83: #{bert_classifier_forward.4} parent=5 // pred_region
      %s1343 = ssub.s32 %s20, 2
      // Predicated region
      $region85: #{bert_classifier_forward.4} parent=83 // pred_check
        %p1344 = pneg %p353
      $region86: #{bert_classifier_forward.4} parent=83 // pred_check_branch
        %1346 = sbr.rel (%p1344) target = $region88
      $region87: #{bert_classifier_forward.4} parent=83 // pred_region
        %p1347 = scmp.lt.s32.totalorder %s26, 1
        %s1348 = scalar_select %p1347, %s26, 1
        %s1349 = smul.addr %s1348, 8
        %s1350 = scalar_lea.vmem %s14, %s1349
      $region88: #{bert_classifier_forward.4} parent=83 // pred_fallthru
        _
    $region84: #{bert_classifier_forward.4} parent=5 // pred_fallthru
      _
  $region6: #{bert_classifier_forward.4} parent=0 // loop_footer
    %s24 = sadd.s32 1, %s20
  $region7: #{bert_classifier_forward.4} parent=0 // loop_footer_branch
    %19 = sbr.rel target = $region3
  $region8: #{bert_classifier_forward.4} parent=0 // loop_exit
    _

// kernel: bert_classifier_forward.3
$region0: #{bert_classifier_forward.3}
  #allocation0 [shape = 'u32[]', space=smem, size = 0x4, offset = 0x4, fixed_abs, tag = 'smem constant byte address 0x4 - core index']
  #allocation1 [shape = 'u32[144,128]{1,0:T(1,128)}', space=vmem, size = 0x12000, scoped, tag = 'internal scratch']
  #allocation2 [shape = 'f32[8,32]{1,0:T(8,128)}', space=vmem, size = 0x1000, scoped, tag = 'scratch operand']
  %s0 = inlined_call_operand.vmem [shape: f32[2,8,32], index: 0, kind: input, shape index: {}, may-alias: {0,16}]
  %s1 = inlined_call_operand.vmem [shape: f32[2,1,8], index: 1, kind: input, shape index: {}]
  %s2 = inlined_call_operand.vmem [shape: f32[1,32], index: 2, kind: input, shape index: {}]
  %s3 = inlined_call_operand.vmem [shape: f32[1,32], index: 3, kind: input, shape index: {}]
  %s4 = inlined_call_operand.vmem [shape: bf16[32,96], index: 4, kind: input, shape index: {}]
  %s5 = inlined_call_operand.vmem [shape: f32[1,96], index: 5, kind: input, shape index: {}]
  %s6 = inlined_call_operand.vmem [shape: bf16[32,32], index: 6, kind: input, shape index: {}]
  %s7 = inlined_call_operand.vmem [shape: f32[1,32], index: 7, kind: input, shape index: {}]
  %s8 = inlined_call_operand.vmem [shape: f32[1,32], index: 8, kind: input, shape index: {}]
  %s9 = inlined_call_operand.vmem [shape: f32[1,32], index: 9, kind: input, shape index: {}]
  %s10 = inlined_call_operand.vmem [shape: bf16[32,128], index: 10, kind: input, shape index: {}]
  %s11 = inlined_call_operand.vmem [shape: f32[1,128], index: 11, kind: input, shape index: {}]
  %s12 = inlined_call_operand.vmem [shape: bf16[128,32], index: 12, kind: input, shape index: {}]
  %s13 = inlined_call_operand.vmem [shape: f32[1,32], index: 13, kind: input, shape index: {}]
  %s14 = inlined_call_operand.vmem [shape: f32[1,32], index: 14, kind: input, shape index: {}]
  %s15 = inlined_call_operand.vmem [shape: f32[1,32], index: 15, kind: input, shape index: {}]
  %s16 = inlined_call_operand.vmem [shape: f32[2,8,32], index: 16, kind: output, shape index: {}, may-alias: {0,16}]
  %s17 = sld [smem:[#allocation0]]
  $region97: #{bert_classifier_forward.3} parent=0
    _
  %s19 = ssub.s32 1, %s17
  %s20 = scalar_select 0, %s19, %s17
  loop: start=0, step=1, limit=4
  $region2: #{bert_classifier_forward.3} parent=0 // loop_pre_header
    _
  $region3: #{bert_classifier_forward.3} parent=0 // loop_header
    %s22 = sphi 0, %s26
    %p23 = scmp.ge.s32.totalorder %s22, 4
    %s32 = sphi 0, %s34
    %s35 = sphi 0, %s32
    %s36 = sphi 0, %s35
    %s52 = sphi 0, %s36
    %s58 = sphi 0, %s60
    %s61 = sphi 0, %s58
    %s62 = sphi 0, %s61
    %s78 = sphi 0, %s62
    %s82 = sphi 0, %s82
    %s84 = sphi 0, %s82
    %s85 = sphi 0, %s84
    %s99 = sphi 0, %s85
    %s103 = sphi 0, %s103
    %s105 = sphi 0, %s103
    %s106 = sphi 0, %s105
    %s120 = sphi 0, %s106
    %s124 = sphi 0, %s124
    %s126 = sphi 0, %s124
    %s127 = sphi 0, %s126
    %s141 = sphi 0, %s127
    %s145 = sphi 0, %s145
    %s147 = sphi 0, %s145
    %s148 = sphi 0, %s147
    %s162 = sphi 0, %s148
    %s166 = sphi 0, %s166
    %s168 = sphi 0, %s166
    %s169 = sphi 0, %s168
    %s183 = sphi 0, %s169
    %s187 = sphi 0, %s187
    %s189 = sphi 0, %s187
    %s190 = sphi 0, %s189
    %s204 = sphi 0, %s190
    %s208 = sphi 0, %s208
    %s210 = sphi 0, %s208
    %s211 = sphi 0, %s210
    %s225 = sphi 0, %s211
    %s229 = sphi 0, %s229
    %s231 = sphi 0, %s229
    %s232 = sphi 0, %s231
    %s246 = sphi 0, %s232
    %s250 = sphi 0, %s250
    %s252 = sphi 0, %s250
    %s253 = sphi 0, %s252
    %s267 = sphi 0, %s253
    %s271 = sphi 0, %s271
    %s273 = sphi 0, %s271
    %s274 = sphi 0, %s273
    %s288 = sphi 0, %s274
    %s292 = sphi 0, %s292
    %s294 = sphi 0, %s292
    %s295 = sphi 0, %s294
    %s309 = sphi 0, %s295
    %s313 = sphi 0, %s313
    %s315 = sphi 0, %s313
    %s316 = sphi 0, %s315
    %s330 = sphi 0, %s316
    %s334 = sphi 0, %s334
    %s336 = sphi 0, %s334
    %s337 = sphi 0, %s336
    %s351 = sphi 0, %s337
    %s355 = sphi 0, %s355
    %s357 = sphi 0, %s355
    %s358 = sphi 0, %s357
    %s372 = sphi 0, %s358
    %s378 = sphi 0, %s380
    %s381 = sphi 0, %s378
    %s382 = sphi 0, %s381
    %s398 = sphi 0, %s382
  $region4: #{bert_classifier_forward.3} parent=0 // loop_header_branch
    %25 = sbr.rel (%p23) target = $region8
  $region5: #{bert_classifier_forward.3} parent=0 // loop_body
    %s27 = ssub.s32 %s22, 1
    %s28 = ssub.s32 %s22, 2
    %s29 = sadd.s32 %s22, 1
    %s30 = ssub.s32 %s22, %s29
    %p31 = scmp.eq.s32.totalorder %s30, 0
    %s33 = sadd.s32 %s32, 1
    %s34 = scalar_select %p31, %s32, %s33
    %p37 = pneg %p31
    %p38 = scmp.eq.s32.totalorder %s22, 1
    %p39 = por %p37, %p38
    %p40 = scmp.ne.s32.totalorder %s32, %s35
    %p41 = scmp.eq.s32.totalorder %s22, 0
    %p42 = por %p40, %p41
    %p43 = scmp.ne.s32.totalorder %s32, %s35
    %p44 = scmp.eq.s32.totalorder %s27, 1
    %p45 = por %p43, %p44
    %p46 = scmp.ne.s32.totalorder %s35, %s36
    %p47 = scmp.eq.s32.totalorder %s27, 0
    %p48 = por %p46, %p47
    %p49 = scmp.ne.s32.totalorder %s35, %s36
    %p50 = scmp.eq.s32.totalorder %s28, 1
    %p51 = por %p49, %p50
    %p53 = scmp.ne.s32.totalorder %s36, %s52
    %p54 = scmp.eq.s32.totalorder %s28, 0
    %p55 = por %p53, %p54
    %s56 = ssub.s32 %s22, %s29
    %p57 = scmp.eq.s32.totalorder %s56, 0
    %s59 = sadd.s32 %s58, 1
    %s60 = scalar_select %p57, %s58, %s59
    %p63 = pneg %p57
    %p64 = scmp.eq.s32.totalorder %s22, 1
    %p65 = por %p63, %p64
    %p66 = scmp.ne.s32.totalorder %s58, %s61
    %p67 = scmp.eq.s32.totalorder %s22, 0
    %p68 = por %p66, %p67
    %p69 = scmp.ne.s32.totalorder %s58, %s61
    %p70 = scmp.eq.s32.totalorder %s27, 1
    %p71 = por %p69, %p70
    %p72 = scmp.ne.s32.totalorder %s61, %s62
    %p73 = scmp.eq.s32.totalorder %s27, 0
    %p74 = por %p72, %p73
    %p75 = scmp.ne.s32.totalorder %s61, %s62
    %p76 = scmp.eq.s32.totalorder %s28, 1
    %p77 = por %p75, %p76
    %p79 = scmp.ne.s32.totalorder %s62, %s78
    %p80 = scmp.eq.s32.totalorder %s28, 0
    %p81 = por %p79, %p80
    %s83 = sadd.s32 %s82, 1
    %p86 = scmp.eq.s32.totalorder %s22, 1
    %p87 = scmp.ne.s32.totalorder %s82, %s84
    %p88 = scmp.eq.s32.totalorder %s22, 0
    %p89 = por %p87, %p88
    %p90 = scmp.ne.s32.totalorder %s82, %s84
    %p91 = scmp.eq.s32.totalorder %s27, 1
    %p92 = por %p90, %p91
    %p93 = scmp.ne.s32.totalorder %s84, %s85
    %p94 = scmp.eq.s32.totalorder %s27, 0
    %p95 = por %p93, %p94
    %p96 = scmp.ne.s32.totalorder %s84, %s85
    %p97 = scmp.eq.s32.totalorder %s28, 1
    %p98 = por %p96, %p97
    %p100 = scmp.ne.s32.totalorder %s85, %s99
    %p101 = scmp.eq.s32.totalorder %s28, 0
    %p102 = por %p100, %p101
    %s104 = sadd.s32 %s103, 1
    %p107 = scmp.eq.s32.totalorder %s22, 1
    %p108 = scmp.ne.s32.totalorder %s103, %s105
    %p109 = scmp.eq.s32.totalorder %s22, 0
    %p110 = por %p108, %p109
    %p111 = scmp.ne.s32.totalorder %s103, %s105
    %p112 = scmp.eq.s32.totalorder %s27, 1
    %p113 = por %p111, %p112
    %p114 = scmp.ne.s32.totalorder %s105, %s106
    %p115 = scmp.eq.s32.totalorder %s27, 0
    %p116 = por %p114, %p115
    %p117 = scmp.ne.s32.totalorder %s105, %s106
    %p118 = scmp.eq.s32.totalorder %s28, 1
    %p119 = por %p117, %p118
    %p121 = scmp.ne.s32.totalorder %s106, %s120
    %p122 = scmp.eq.s32.totalorder %s28, 0
    %p123 = por %p121, %p122
    %s125 = sadd.s32 %s124, 1
    %p128 = scmp.eq.s32.totalorder %s22, 1
    %p129 = scmp.ne.s32.totalorder %s124, %s126
    %p130 = scmp.eq.s32.totalorder %s22, 0
    %p131 = por %p129, %p130
    %p132 = scmp.ne.s32.totalorder %s124, %s126
    %p133 = scmp.eq.s32.totalorder %s27, 1
    %p134 = por %p132, %p133
    %p135 = scmp.ne.s32.totalorder %s126, %s127
    %p136 = scmp.eq.s32.totalorder %s27, 0
    %p137 = por %p135, %p136
    %p138 = scmp.ne.s32.totalorder %s126, %s127
    %p139 = scmp.eq.s32.totalorder %s28, 1
    %p140 = por %p138, %p139
    %p142 = scmp.ne.s32.totalorder %s127, %s141
    %p143 = scmp.eq.s32.totalorder %s28, 0
    %p144 = por %p142, %p143
    %s146 = sadd.s32 %s145, 1
    %p149 = scmp.eq.s32.totalorder %s22, 1
    %p150 = scmp.ne.s32.totalorder %s145, %s147
    %p151 = scmp.eq.s32.totalorder %s22, 0
    %p152 = por %p150, %p151
    %p153 = scmp.ne.s32.totalorder %s145, %s147
    %p154 = scmp.eq.s32.totalorder %s27, 1
    %p155 = por %p153, %p154
    %p156 = scmp.ne.s32.totalorder %s147, %s148
    %p157 = scmp.eq.s32.totalorder %s27, 0
    %p158 = por %p156, %p157
    %p159 = scmp.ne.s32.totalorder %s147, %s148
    %p160 = scmp.eq.s32.totalorder %s28, 1
    %p161 = por %p159, %p160
    %p163 = scmp.ne.s32.totalorder %s148, %s162
    %p164 = scmp.eq.s32.totalorder %s28, 0
    %p165 = por %p163, %p164
    %s167 = sadd.s32 %s166, 1
    %p170 = scmp.eq.s32.totalorder %s22, 1
    %p171 = scmp.ne.s32.totalorder %s166, %s168
    %p172 = scmp.eq.s32.totalorder %s22, 0
    %p173 = por %p171, %p172
    %p174 = scmp.ne.s32.totalorder %s166, %s168
    %p175 = scmp.eq.s32.totalorder %s27, 1
    %p176 = por %p174, %p175
    %p177 = scmp.ne.s32.totalorder %s168, %s169
    %p178 = scmp.eq.s32.totalorder %s27, 0
    %p179 = por %p177, %p178
    %p180 = scmp.ne.s32.totalorder %s168, %s169
    %p181 = scmp.eq.s32.totalorder %s28, 1
    %p182 = por %p180, %p181
    %p184 = scmp.ne.s32.totalorder %s169, %s183
    %p185 = scmp.eq.s32.totalorder %s28, 0
    %p186 = por %p184, %p185
    %s188 = sadd.s32 %s187, 1
    %p191 = scmp.eq.s32.totalorder %s22, 1
    %p192 = scmp.ne.s32.totalorder %s187, %s189
    %p193 = scmp.eq.s32.totalorder %s22, 0
    %p194 = por %p192, %p193
    %p195 = scmp.ne.s32.totalorder %s187, %s189
    %p196 = scmp.eq.s32.totalorder %s27, 1
    %p197 = por %p195, %p196
    %p198 = scmp.ne.s32.totalorder %s189, %s190
    %p199 = scmp.eq.s32.totalorder %s27, 0
    %p200 = por %p198, %p199
    %p201 = scmp.ne.s32.totalorder %s189, %s190
    %p202 = scmp.eq.s32.totalorder %s28, 1
    %p203 = por %p201, %p202
    %p205 = scmp.ne.s32.totalorder %s190, %s204
    %p206 = scmp.eq.s32.totalorder %s28, 0
    %p207 = por %p205, %p206
    %s209 = sadd.s32 %s208, 1
    %p212 = scmp.eq.s32.totalorder %s22, 1
    %p213 = scmp.ne.s32.totalorder %s208, %s210
    %p214 = scmp.eq.s32.totalorder %s22, 0
    %p215 = por %p213, %p214
    %p216 = scmp.ne.s32.totalorder %s208, %s210
    %p217 = scmp.eq.s32.totalorder %s27, 1
    %p218 = por %p216, %p217
    %p219 = scmp.ne.s32.totalorder %s210, %s211
    %p220 = scmp.eq.s32.totalorder %s27, 0
    %p221 = por %p219, %p220
    %p222 = scmp.ne.s32.totalorder %s210, %s211
    %p223 = scmp.eq.s32.totalorder %s28, 1
    %p224 = por %p222, %p223
    %p226 = scmp.ne.s32.totalorder %s211, %s225
    %p227 = scmp.eq.s32.totalorder %s28, 0
    %p228 = por %p226, %p227
    %s230 = sadd.s32 %s229, 1
    %p233 = scmp.eq.s32.totalorder %s22, 1
    %p234 = scmp.ne.s32.totalorder %s229, %s231
    %p235 = scmp.eq.s32.totalorder %s22, 0
    %p236 = por %p234, %p235
    %p237 = scmp.ne.s32.totalorder %s229, %s231
    %p238 = scmp.eq.s32.totalorder %s27, 1
    %p239 = por %p237, %p238
    %p240 = scmp.ne.s32.totalorder %s231, %s232
    %p241 = scmp.eq.s32.totalorder %s27, 0
    %p242 = por %p240, %p241
    %p243 = scmp.ne.s32.totalorder %s231, %s232
    %p244 = scmp.eq.s32.totalorder %s28, 1
    %p245 = por %p243, %p244
    %p247 = scmp.ne.s32.totalorder %s232, %s246
    %p248 = scmp.eq.s32.totalorder %s28, 0
    %p249 = por %p247, %p248
    %s251 = sadd.s32 %s250, 1
    %p254 = scmp.eq.s32.totalorder %s22, 1
    %p255 = scmp.ne.s32.totalorder %s250, %s252
    %p256 = scmp.eq.s32.totalorder %s22, 0
    %p257 = por %p255, %p256
    %p258 = scmp.ne.s32.totalorder %s250, %s252
    %p259 = scmp.eq.s32.totalorder %s27, 1
    %p260 = por %p258, %p259
    %p261 = scmp.ne.s32.totalorder %s252, %s253
    %p262 = scmp.eq.s32.totalorder %s27, 0
    %p263 = por %p261, %p262
    %p264 = scmp.ne.s32.totalorder %s252, %s253
    %p265 = scmp.eq.s32.totalorder %s28, 1
    %p266 = por %p264, %p265
    %p268 = scmp.ne.s32.totalorder %s253, %s267
    %p269 = scmp.eq.s32.totalorder %s28, 0
    %p270 = por %p268, %p269
    %s272 = sadd.s32 %s271, 1
    %p275 = scmp.eq.s32.totalorder %s22, 1
    %p276 = scmp.ne.s32.totalorder %s271, %s273
    %p277 = scmp.eq.s32.totalorder %s22, 0
    %p278 = por %p276, %p277
    %p279 = scmp.ne.s32.totalorder %s271, %s273
    %p280 = scmp.eq.s32.totalorder %s27, 1
    %p281 = por %p279, %p280
    %p282 = scmp.ne.s32.totalorder %s273, %s274
    %p283 = scmp.eq.s32.totalorder %s27, 0
    %p284 = por %p282, %p283
    %p285 = scmp.ne.s32.totalorder %s273, %s274
    %p286 = scmp.eq.s32.totalorder %s28, 1
    %p287 = por %p285, %p286
    %p289 = scmp.ne.s32.totalorder %s274, %s288
    %p290 = scmp.eq.s32.totalorder %s28, 0
    %p291 = por %p289, %p290
    %s293 = sadd.s32 %s292, 1
    %p296 = scmp.eq.s32.totalorder %s22, 1
    %p297 = scmp.ne.s32.totalorder %s292, %s294
    %p298 = scmp.eq.s32.totalorder %s22, 0
    %p299 = por %p297, %p298
    %p300 = scmp.ne.s32.totalorder %s292, %s294
    %p301 = scmp.eq.s32.totalorder %s27, 1
    %p302 = por %p300, %p301
    %p303 = scmp.ne.s32.totalorder %s294, %s295
    %p304 = scmp.eq.s32.totalorder %s27, 0
    %p305 = por %p303, %p304
    %p306 = scmp.ne.s32.totalorder %s294, %s295
    %p307 = scmp.eq.s32.totalorder %s28, 1
    %p308 = por %p306, %p307
    %p310 = scmp.ne.s32.totalorder %s295, %s309
    %p311 = scmp.eq.s32.totalorder %s28, 0
    %p312 = por %p310, %p311
    %s314 = sadd.s32 %s313, 1
    %p317 = scmp.eq.s32.totalorder %s22, 1
    %p318 = scmp.ne.s32.totalorder %s313, %s315
    %p319 = scmp.eq.s32.totalorder %s22, 0
    %p320 = por %p318, %p319
    %p321 = scmp.ne.s32.totalorder %s313, %s315
    %p322 = scmp.eq.s32.totalorder %s27, 1
    %p323 = por %p321, %p322
    %p324 = scmp.ne.s32.totalorder %s315, %s316
    %p325 = scmp.eq.s32.totalorder %s27, 0
    %p326 = por %p324, %p325
    %p327 = scmp.ne.s32.totalorder %s315, %s316
    %p328 = scmp.eq.s32.totalorder %s28, 1
    %p329 = por %p327, %p328
    %p331 = scmp.ne.s32.totalorder %s316, %s330
    %p332 = scmp.eq.s32.totalorder %s28, 0
    %p333 = por %p331, %p332
    %s335 = sadd.s32 %s334, 1
    %p338 = scmp.eq.s32.totalorder %s22, 1
    %p339 = scmp.ne.s32.totalorder %s334, %s336
    %p340 = scmp.eq.s32.totalorder %s22, 0
    %p341 = por %p339, %p340
    %p342 = scmp.ne.s32.totalorder %s334, %s336
    %p343 = scmp.eq.s32.totalorder %s27, 1
    %p344 = por %p342, %p343
    %p345 = scmp.ne.s32.totalorder %s336, %s337
    %p346 = scmp.eq.s32.totalorder %s27, 0
    %p347 = por %p345, %p346
    %p348 = scmp.ne.s32.totalorder %s336, %s337
    %p349 = scmp.eq.s32.totalorder %s28, 1
    %p350 = por %p348, %p349
    %p352 = scmp.ne.s32.totalorder %s337, %s351
    %p353 = scmp.eq.s32.totalorder %s28, 0
    %p354 = por %p352, %p353
    %s356 = sadd.s32 %s355, 1
    %p359 = scmp.eq.s32.totalorder %s22, 1
    %p360 = scmp.ne.s32.totalorder %s355, %s357
    %p361 = scmp.eq.s32.totalorder %s22, 0
    %p362 = por %p360, %p361
    %p363 = scmp.ne.s32.totalorder %s355, %s357
    %p364 = scmp.eq.s32.totalorder %s27, 1
    %p365 = por %p363, %p364
    %p366 = scmp.ne.s32.totalorder %s357, %s358
    %p367 = scmp.eq.s32.totalorder %s27, 0
    %p368 = por %p366, %p367
    %p369 = scmp.ne.s32.totalorder %s357, %s358
    %p370 = scmp.eq.s32.totalorder %s28, 1
    %p371 = por %p369, %p370
    %p373 = scmp.ne.s32.totalorder %s358, %s372
    %p374 = scmp.eq.s32.totalorder %s28, 0
    %p375 = por %p373, %p374
    %s376 = ssub.s32 %s22, %s29
    %p377 = scmp.eq.s32.totalorder %s376, 0
    %s379 = sadd.s32 %s378, 1
    %s380 = scalar_select %p377, %s378, %s379
    %p383 = pneg %p377
    %p384 = scmp.eq.s32.totalorder %s22, 1
    %p385 = por %p383, %p384
    %p386 = scmp.ne.s32.totalorder %s378, %s381
    %p387 = scmp.eq.s32.totalorder %s22, 0
    %p388 = por %p386, %p387
    %p389 = scmp.ne.s32.totalorder %s378, %s381
    %p390 = scmp.eq.s32.totalorder %s27, 1
    %p391 = por %p389, %p390
    %p392 = scmp.ne.s32.totalorder %s381, %s382
    %p393 = scmp.eq.s32.totalorder %s27, 0
    %p394 = por %p392, %p393
    %p395 = scmp.ne.s32.totalorder %s381, %s382
    %p396 = scmp.eq.s32.totalorder %s28, 1
    %p397 = por %p395, %p396
    %p399 = scmp.ne.s32.totalorder %s382, %s398
    %p400 = scmp.eq.s32.totalorder %s28, 0
    %p401 = por %p399, %p400
    %p402 = scmp.le.s32.totalorder 1, %s22
    %p403 = scmp.lt.s32.totalorder %s22, 3
    %p404 = pnand %p402, %p403
    %p405 = pneg %p404
    // Predicated region
    $region9: #{bert_classifier_forward.3} parent=5 // pred_check
      _
    $region10: #{bert_classifier_forward.3} parent=5 // pred_check_branch
      %407 = sbr.rel (%p404) target = $region12
    $region11: #{bert_classifier_forward.3} parent=5 // pred_region
      %s408 = ssub.s32 %s22, 1
      // Predicated region
      $region13: #{bert_classifier_forward.3} parent=11 // pred_check
        %p409 = pneg %p95
      $region14: #{bert_classifier_forward.3} parent=11 // pred_check_branch
        %411 = sbr.rel (%p409) target = $region16
      $region15: #{bert_classifier_forward.3} parent=11 // pred_region
        _
      $region16: #{bert_classifier_forward.3} parent=11 // pred_fallthru
        _
      // Predicated region
      $region17: #{bert_classifier_forward.3} parent=11 // pred_check
        %p412 = pneg %p116
      $region18: #{bert_classifier_forward.3} parent=11 // pred_check_branch
        %414 = sbr.rel (%p412) target = $region20
      $region19: #{bert_classifier_forward.3} parent=11 // pred_region
        _
      $region20: #{bert_classifier_forward.3} parent=11 // pred_fallthru
        _
      // Predicated region
      $region21: #{bert_classifier_forward.3} parent=11 // pred_check
        %p415 = pneg %p137
      $region22: #{bert_classifier_forward.3} parent=11 // pred_check_branch
        %417 = sbr.rel (%p415) target = $region24
      $region23: #{bert_classifier_forward.3} parent=11 // pred_region
        _
      $region24: #{bert_classifier_forward.3} parent=11 // pred_fallthru
        _
      // Predicated region
      $region25: #{bert_classifier_forward.3} parent=11 // pred_check
        %p418 = pneg %p158
      $region26: #{bert_classifier_forward.3} parent=11 // pred_check_branch
        %420 = sbr.rel (%p418) target = $region28
      $region27: #{bert_classifier_forward.3} parent=11 // pred_region
        _
      $region28: #{bert_classifier_forward.3} parent=11 // pred_fallthru
        _
      // Predicated region
      $region29: #{bert_classifier_forward.3} parent=11 // pred_check
        %p421 = pneg %p179
      $region30: #{bert_classifier_forward.3} parent=11 // pred_check_branch
        %423 = sbr.rel (%p421) target = $region32
      $region31: #{bert_classifier_forward.3} parent=11 // pred_region
        _
      $region32: #{bert_classifier_forward.3} parent=11 // pred_fallthru
        _
      // Predicated region
      $region33: #{bert_classifier_forward.3} parent=11 // pred_check
        %p424 = pneg %p200
      $region34: #{bert_classifier_forward.3} parent=11 // pred_check_branch
        %426 = sbr.rel (%p424) target = $region36
      $region35: #{bert_classifier_forward.3} parent=11 // pred_region
        _
      $region36: #{bert_classifier_forward.3} parent=11 // pred_fallthru
        _
      // Predicated region
      $region37: #{bert_classifier_forward.3} parent=11 // pred_check
        %p427 = pneg %p221
      $region38: #{bert_classifier_forward.3} parent=11 // pred_check_branch
        %429 = sbr.rel (%p427) target = $region40
      $region39: #{bert_classifier_forward.3} parent=11 // pred_region
        _
      $region40: #{bert_classifier_forward.3} parent=11 // pred_fallthru
        _
      // Predicated region
      $region41: #{bert_classifier_forward.3} parent=11 // pred_check
        %p430 = pneg %p242
      $region42: #{bert_classifier_forward.3} parent=11 // pred_check_branch
        %432 = sbr.rel (%p430) target = $region44
      $region43: #{bert_classifier_forward.3} parent=11 // pred_region
        _
      $region44: #{bert_classifier_forward.3} parent=11 // pred_fallthru
        _
      // Predicated region
      $region45: #{bert_classifier_forward.3} parent=11 // pred_check
        %p433 = pneg %p263
      $region46: #{bert_classifier_forward.3} parent=11 // pred_check_branch
        %435 = sbr.rel (%p433) target = $region48
      $region47: #{bert_classifier_forward.3} parent=11 // pred_region
        _
      $region48: #{bert_classifier_forward.3} parent=11 // pred_fallthru
        _
      // Predicated region
      $region49: #{bert_classifier_forward.3} parent=11 // pred_check
        %p436 = pneg %p284
      $region50: #{bert_classifier_forward.3} parent=11 // pred_check_branch
        %438 = sbr.rel (%p436) target = $region52
      $region51: #{bert_classifier_forward.3} parent=11 // pred_region
        _
      $region52: #{bert_classifier_forward.3} parent=11 // pred_fallthru
        _
      // Predicated region
      $region53: #{bert_classifier_forward.3} parent=11 // pred_check
        %p439 = pneg %p305
      $region54: #{bert_classifier_forward.3} parent=11 // pred_check_branch
        %441 = sbr.rel (%p439) target = $region56
      $region55: #{bert_classifier_forward.3} parent=11 // pred_region
        _
      $region56: #{bert_classifier_forward.3} parent=11 // pred_fallthru
        _
      // Predicated region
      $region57: #{bert_classifier_forward.3} parent=11 // pred_check
        %p442 = pneg %p326
      $region58: #{bert_classifier_forward.3} parent=11 // pred_check_branch
        %444 = sbr.rel (%p442) target = $region60
      $region59: #{bert_classifier_forward.3} parent=11 // pred_region
        _
      $region60: #{bert_classifier_forward.3} parent=11 // pred_fallthru
        _
      // Predicated region
      $region61: #{bert_classifier_forward.3} parent=11 // pred_check
        %p445 = pneg %p347
      $region62: #{bert_classifier_forward.3} parent=11 // pred_check_branch
        %447 = sbr.rel (%p445) target = $region64
      $region63: #{bert_classifier_forward.3} parent=11 // pred_region
        _
      $region64: #{bert_classifier_forward.3} parent=11 // pred_fallthru
        _
      // Predicated region
      $region65: #{bert_classifier_forward.3} parent=11 // pred_check
        %p448 = pneg %p368
      $region66: #{bert_classifier_forward.3} parent=11 // pred_check_branch
        %450 = sbr.rel (%p448) target = $region68
      $region67: #{bert_classifier_forward.3} parent=11 // pred_region
        _
      $region68: #{bert_classifier_forward.3} parent=11 // pred_fallthru
        _
    $region12: #{bert_classifier_forward.3} parent=5 // pred_fallthru
      _
    %p451 = scmp.lt.s32.totalorder %s22, 2
    // Predicated region
    $region69: #{bert_classifier_forward.3} parent=5 // pred_check
      %p452 = pneg %p451
    $region70: #{bert_classifier_forward.3} parent=5 // pred_check_branch
      %454 = sbr.rel (%p452) target = $region72
    $region71: #{bert_classifier_forward.3} parent=5 // pred_region
      // Predicated region
      $region73: #{bert_classifier_forward.3} parent=71 // pred_check
        %p455 = pneg %p42
      $region74: #{bert_classifier_forward.3} parent=71 // pred_check_branch
        %457 = sbr.rel (%p455) target = $region76
      $region75: #{bert_classifier_forward.3} parent=71 // pred_region
        %p458 = scmp.lt.s32.totalorder %s22, 1
        %s459 = scalar_select %p458, %s22, 1
        %s460 = smul.addr %s459, 8
        %s461 = scalar_lea.vmem %s0, %s460
      $region76: #{bert_classifier_forward.3} parent=71 // pred_fallthru
        _
      // Predicated region
      $region77: #{bert_classifier_forward.3} parent=71 // pred_check
        %p462 = pneg %p68
      $region78: #{bert_classifier_forward.3} parent=71 // pred_check_branch
        %464 = sbr.rel (%p462) target = $region80
      $region79: #{bert_classifier_forward.3} parent=71 // pred_region
        %p465 = scmp.lt.s32.totalorder %s22, 1
        %s466 = scalar_select %p465, %s22, 1
        %s467 = scalar_lea.vmem %s1, %s466
      $region80: #{bert_classifier_forward.3} parent=71 // pred_fallthru
        _
    $region72: #{bert_classifier_forward.3} parent=5 // pred_fallthru
      _
    %p468 = scmp.le.s32.totalorder 1, %s22
    %p469 = scmp.lt.s32.totalorder %s22, 3
    %p470 = pnand %p468, %p469
    %p471 = pneg %p470
    // Predicated region
    $region81: #{bert_classifier_forward.3} parent=5 // pred_check
      _
    $region82: #{bert_classifier_forward.3} parent=5 // pred_check_branch
      %473 = sbr.rel (%p470) target = $region84
    $region83: #{bert_classifier_forward.3} parent=5 // pred_region
      %s474 = ssub.s32 %s22, 1
      %p475 = scmp.lt.s32.totalorder %s27, 1
      %s476 = scalar_select %p475, %s27, 1
      %s477 = smul.addr %s476, 8
      %s478 = scalar_lea.vmem %s0, %s477
      %p479 = pneg %p48
      %p480 = pneg %p45
      %p481 = scmp.lt.s32.totalorder %s27, 1
      %s482 = scalar_select %p481, %s27, 1
      %s483 = scalar_lea.vmem %s1, %s482
      %p484 = pneg %p74
      %p485 = pneg %p71
      %p486 = pneg %p95
      %p487 = pneg %p92
      %p488 = pneg %p116
      %p489 = pneg %p113
      %p490 = pneg %p137
      %p491 = pneg %p134
      %p492 = pneg %p158
      %p493 = pneg %p155
      %p494 = pneg %p179
      %p495 = pneg %p176
      %p496 = pneg %p200
      %p497 = pneg %p197
      %p498 = pneg %p221
      %p499 = pneg %p218
      %p500 = pneg %p242
      %p501 = pneg %p239
      %p502 = pneg %p263
      %p503 = pneg %p260
      %p504 = pneg %p284
      %p505 = pneg %p281
      %p506 = pneg %p305
      %p507 = pneg %p302
      %p508 = pneg %p326
      %p509 = pneg %p323
      %p510 = pneg %p347
      %p511 = pneg %p344
      %p512 = pneg %p368
      %p513 = pneg %p365
      %p514 = pneg %p394
      %p515 = pneg %p391
      %p516 = scmp.lt.s32.totalorder %s27, 1
      %s517 = scalar_select %p516, %s27, 1
      %s518 = smul.addr %s517, 8
      %s519 = scalar_lea.vmem %s16, %s518
      %p520 = scmp.lt.s32.totalorder %s27, 1
      %s521 = scalar_select %p520, %s27, 1
      %s522 = smul.addr %s521, 8
      %s523 = scalar_lea.vmem %s0, %s522
      %p524 = scmp.lt.s32.totalorder %s27, 1
      %s525 = scalar_select %p524, %s27, 1
      %s526 = scalar_lea.vmem %s1, %s525
      %p527 = scmp.lt.s32.totalorder %s27, 1
      %s528 = scalar_select %p527, %s27, 1
      %s529 = smul.addr %s528, 8
      %s530 = scalar_lea.vmem %s16, %s529
      %v532 = vld [vmem:[%s523] sm:$0xff]
      %v533 = vld [vmem:[%s2] sm:$0x1]
      %v534 = vld [vmem:[%s3] sm:$0x1]
      %vm535 = vcmask 261120
      %v536 = vsel %vm535, %v532, 0.0
      %537 = vadd.xlane.f32.xlu0 %v536
      %v538 = vpop.xlane.xlu0 %537
      %v539 = vrcp.pop 32.0
      %v540 = vmul.f32 %v538, %v539
      %v541 = vsub.f32 %v532, %v540
      %v542 = vmul.f32 %v541, %v541
      %v543 = vsel %vm535, %v542, 0.0
      %544 = vadd.xlane.f32.xlu0 %v543
      %v545 = vpop.xlane.xlu0 %544
      %v546 = vmul.f32 %v545, %v539
      %v547 = vadd.f32 %v546, 1e-12
      %v548 = vrsqrt.pop %v547
      %v549 = vmul.f32 %v541, %v548
      %v551 = vlaneseq
      %v552 = vshrl.u32 %v551, 7
      %v553 = vsub.s32 0, %v552
      %v554 = vrot.slane %v533, %v553
      %v556 = vmul.f32 %v549, %v554
      %v558 = vlaneseq
      %v559 = vshrl.u32 %v558, 7
      %v560 = vsub.s32 0, %v559
      %v561 = vrot.slane %v534, %v560
      %v563 = vadd.f32 %v556, %v561
      %v564 = vpack.c.bf16 %v563, %v563
      %v565 = vld [vmem:[%s4] sm:$0xf]
      %v566 = vld [vmem:[%s4 + $0x4] sm:$0xf]
      %v567 = vld [vmem:[%s4 + $0x8] sm:$0xf]
      %v568 = vld [vmem:[%s4 + $0xc] sm:$0xf]
      %v569 = vld [vmem:[%s5] sm:$0x1]
      %v571 = vlaneseq
      %v572 = vshrl.u32 %v571, 7
      %v573 = vsub.s32 0, %v572
      %v574 = vrot.slane %v569, %v573
      %v580 = vunpack.c.l.b16 %v565
      %v581 = vunpack.c.l.b16 %v566
      %v582 = vunpack.c.l.b16 %v567
      %v583 = vunpack.c.l.b16 %v568
      %v584 = vpack.c.b16 %v581, %v580
      %v585 = vpack.c.b16 %v583, %v582
      %v589 = vsel %vm535, %v564, 0
      %591 = vmatprep.subr.bf16.mxu0 0
      %592 = vmatpush1.bf16.msra.mxu0 %v584
      %593 = vmatprep.subr.bf16.mxu0 0
      %594 = vmatpush1.bf16.msra.mxu0 %v585
      %595 = vmatprep.subr.bf16.mxu0 0
      %596 = vmatpush1.bf16.msra.mxu0 0
      %597 = vmatprep.subr.bf16.mxu0 0
      %598 = vmatpush1.bf16.msra.mxu0 0
      %599 = vmatprep.subr.bf16.mxu0 0
      %600 = vmatpush1.bf16.msra.mxu0 0
      %601 = vmatprep.subr.bf16.mxu0 0
      %602 = vmatpush1.bf16.msra.mxu0 0
      %603 = vmatprep.subr.bf16.mxu0 0
      %604 = vmatpush1.bf16.msra.mxu0 0
      %605 = vmatprep.subr.bf16.mxu0 0
      %606 = vmatpush1.bf16.msra.mxu0 0
      %607 = vmatprep.subr.bf16.mxu0 0
      %608 = vmatpush1.bf16.msra.mxu0 0
      %609 = vmatprep.subr.bf16.mxu0 0
      %610 = vmatpush1.bf16.msra.mxu0 0
      %611 = vmatprep.subr.bf16.mxu0 0
      %612 = vmatpush1.bf16.msra.mxu0 0
      %613 = vmatprep.subr.bf16.mxu0 0
      %614 = vmatpush1.bf16.msra.mxu0 0
      %615 = vmatprep.subr.bf16.mxu0 0
      %616 = vmatpush1.bf16.msra.mxu0 0
      %617 = vmatprep.subr.bf16.mxu0 0
      %618 = vmatpush1.bf16.msra.mxu0 0
      %619 = vmatprep.subr.bf16.mxu0 0
      %620 = vmatpush1.bf16.msra.mxu0 0
      %621 = vmatprep.subr.bf16.mxu0 0
      %622 = vmatpush1.bf16.msra.mxu0 0
      %623 = vmatprep.mubr.bf16.mxu0 0
      %624 = vmatmul.mubr.bf16.gmra.mrb[0].mxu0 %v589
      %v625 = vpop.f32.mrb[0].mxu0
      %v626 = vadd.f32 %v574, %v625
      %v627 = vpop.f32.mrb[0].mxu0
      %v628 = vpop.f32.mrb[0].mxu0
      %v629 = vpop.f32.mrb[0].mxu0
      %630 = vdwg.mxu0
      %v631 = vld [vmem:[%s526] sm:$0x1]
      %v632 = vmul.f32 %v626, 0.35355338
      %v633 = vpack.c.bf16 %v632, %v632
      %v634 = vpack.c.bf16 %v626, %v626
      %v636 = vlaneseq
      %v637 = vshrl.u32 %v636, 7
      %v638 = vsub.s32 0, %v637
      %v639 = vrot.slane %v631, %v638
      %642 = vrot.lane.b32.xlu0 %v634, 96
      %v643 = vpop.permute.xlu0 %642
      %vm644 = vcmask 64512
      %v646 = vsel %vm644, %v633, 0
      %v649 = vsel %vm644, %v643, 0
      %651 = vmatprep.subr.bf16.mxu0 0
      %652 = vmatpush1.bf16.xpose.msra.mxu0 %v649
      %653 = vmatprep.subr.bf16.mxu0 0
      %654 = vmatpush1.bf16.xpose.msra.mxu0 0
      %655 = vmatprep.subr.bf16.mxu0 0
      %656 = vmatpush1.bf16.xpose.msra.mxu0 0
      %657 = vmatprep.subr.bf16.mxu0 0
      %658 = vmatpush1.bf16.xpose.msra.mxu0 0
      %659 = vmatprep.subr.bf16.mxu0 0
      %660 = vmatpush1.bf16.xpose.msra.mxu0 0
      %661 = vmatprep.subr.bf16.mxu0 0
      %662 = vmatpush1.bf16.xpose.msra.mxu0 0
      %663 = vmatprep.subr.bf16.mxu0 0
      %664 = vmatpush1.bf16.xpose.msra.mxu0 0
      %665 = vmatprep.subr.bf16.mxu0 0
      %666 = vmatpush1.bf16.xpose.msra.mxu0 0
      %667 = vmatprep.subr.bf16.mxu0 0
      %668 = vmatpush1.bf16.xpose.msra.mxu0 0
      %669 = vmatprep.subr.bf16.mxu0 0
      %670 = vmatpush1.bf16.xpose.msra.mxu0 0
      %671 = vmatprep.subr.bf16.mxu0 0
      %672 = vmatpush1.bf16.xpose.msra.mxu0 0
      %673 = vmatprep.subr.bf16.mxu0 0
      %674 = vmatpush1.bf16.xpose.msra.mxu0 0
      %675 = vmatprep.subr.bf16.mxu0 0
      %676 = vmatpush1.bf16.xpose.msra.mxu0 0
      %677 = vmatprep.subr.bf16.mxu0 0
      %678 = vmatpush1.bf16.xpose.msra.mxu0 0
      %679 = vmatprep.subr.bf16.mxu0 0
      %680 = vmatpush1.bf16.xpose.msra.mxu0 0
      %681 = vmatprep.subr.bf16.mxu0 0
      %682 = vmatpush1.bf16.xpose.msra.mxu0 0
      %683 = vmatprep.mubr.bf16.mxu0 0
      %684 = vmatmul.mubr.bf16.gmra.mrb[0].mxu0 %v646
      %v685 = vpop.f32.mrb[0].mxu0
      %v686 = vadd.f32 %v639, %v685
      %v687 = vpop.f32.mrb[0].mxu0
      %v688 = vpop.f32.mrb[0].mxu0
      %v689 = vpop.f32.mrb[0].mxu0
      %690 = vdwg.mxu0
      %v691 = vsel %vm644, %v686, -inf
      %692 = vmax.xlane.f32.xlu0 %v691
      %v693 = vpop.xlane.xlu0 %692
      %v694 = vsub.f32 %v686, %v693
      %v695 = vmul.f32 %v694, 1.442695
      %v696 = vpow.pop %v695
      %v697 = vsel %vm644, %v696, 0.0
      %698 = vadd.xlane.f32.xlu0 %v697
      %v699 = vpop.xlane.xlu0 %698
      %v700 = vrcp.pop %v699
      %v701 = vmul.f32 %v696, %v700
      %v702 = vpack.c.bf16 %v701, %v701
      %703 = vrot.lane.b32.xlu0 %v634, 64
      %v704 = vpop.permute.xlu0 %703
      %v706 = vsel %vm644, %v702, 0
      %vm708 = vcmask 1043456
      %v710 = vsel %vm708, %v704, 0
      %712 = vmatprep.subr.bf16.mxu0 0
      %713 = vmatpush1.bf16.msra.mxu0 %v710
      %714 = vmatprep.subr.bf16.mxu0 0
      %715 = vmatpush1.bf16.msra.mxu0 0
      %716 = vmatprep.subr.bf16.mxu0 0
      %717 = vmatpush1.bf16.msra.mxu0 0
      %718 = vmatprep.subr.bf16.mxu0 0
      %719 = vmatpush1.bf16.msra.mxu0 0
      %720 = vmatprep.subr.bf16.mxu0 0
      %721 = vmatpush1.bf16.msra.mxu0 0
      %722 = vmatprep.subr.bf16.mxu0 0
      %723 = vmatpush1.bf16.msra.mxu0 0
      %724 = vmatprep.subr.bf16.mxu0 0
      %725 = vmatpush1.bf16.msra.mxu0 0
      %726 = vmatprep.subr.bf16.mxu0 0
      %727 = vmatpush1.bf16.msra.mxu0 0
      %728 = vmatprep.subr.bf16.mxu0 0
      %729 = vmatpush1.bf16.msra.mxu0 0
      %730 = vmatprep.subr.bf16.mxu0 0
      %731 = vmatpush1.bf16.msra.mxu0 0
      %732 = vmatprep.subr.bf16.mxu0 0
      %733 = vmatpush1.bf16.msra.mxu0 0
      %734 = vmatprep.subr.bf16.mxu0 0
      %735 = vmatpush1.bf16.msra.mxu0 0
      %736 = vmatprep.subr.bf16.mxu0 0
      %737 = vmatpush1.bf16.msra.mxu0 0
      %738 = vmatprep.subr.bf16.mxu0 0
      %739 = vmatpush1.bf16.msra.mxu0 0
      %740 = vmatprep.subr.bf16.mxu0 0
      %741 = vmatpush1.bf16.msra.mxu0 0
      %742 = vmatprep.subr.bf16.mxu0 0
      %743 = vmatpush1.bf16.msra.mxu0 0
      %744 = vmatprep.mubr.bf16.mxu0 0
      %745 = vmatmul.mubr.bf16.gmra.mrb[0].mxu0 %v706
      %v746 = vpop.f32.mrb[0].mxu0
      %v747 = vadd.f32 0.0, %v746
      %v748 = vpop.f32.mrb[0].mxu0
      %v749 = vpop.f32.mrb[0].mxu0
      %v750 = vpop.f32.mrb[0].mxu0
      %751 = vdwg.mxu0
      %752 = vst.msk [vmem:[#allocation2] sm:$0xff] %vm644, %v747
      %754 = vrot.lane.b32.xlu0 %v633, 120
      %v755 = vpop.permute.xlu0 %754
      %756 = vrot.lane.b32.xlu0 %v634, 88
      %v757 = vpop.permute.xlu0 %756
      %v759 = vsel %vm644, %v755, 0
      %v762 = vsel %vm644, %v757, 0
      %764 = vmatprep.subr.bf16.mxu0 0
      %765 = vmatpush1.bf16.xpose.msra.mxu0 %v762
      %766 = vmatprep.subr.bf16.mxu0 0
      %767 = vmatpush1.bf16.xpose.msra.mxu0 0
      %768 = vmatprep.subr.bf16.mxu0 0
      %769 = vmatpush1.bf16.xpose.msra.mxu0 0
      %770 = vmatprep.subr.bf16.mxu0 0
      %771 = vmatpush1.bf16.xpose.msra.mxu0 0
      %772 = vmatprep.subr.bf16.mxu0 0
      %773 = vmatpush1.bf16.xpose.msra.mxu0 0
      %774 = vmatprep.subr.bf16.mxu0 0
      %775 = vmatpush1.bf16.xpose.msra.mxu0 0
      %776 = vmatprep.subr.bf16.mxu0 0
      %777 = vmatpush1.bf16.xpose.msra.mxu0 0
      %778 = vmatprep.subr.bf16.mxu0 0
      %779 = vmatpush1.bf16.xpose.msra.mxu0 0
      %780 = vmatprep.subr.bf16.mxu0 0
      %781 = vmatpush1.bf16.xpose.msra.mxu0 0
      %782 = vmatprep.subr.bf16.mxu0 0
      %783 = vmatpush1.bf16.xpose.msra.mxu0 0
      %784 = vmatprep.subr.bf16.mxu0 0
      %785 = vmatpush1.bf16.xpose.msra.mxu0 0
      %786 = vmatprep.subr.bf16.mxu0 0
      %787 = vmatpush1.bf16.xpose.msra.mxu0 0
      %788 = vmatprep.subr.bf16.mxu0 0
      %789 = vmatpush1.bf16.xpose.msra.mxu0 0
      %790 = vmatprep.subr.bf16.mxu0 0
      %791 = vmatpush1.bf16.xpose.msra.mxu0 0
      %792 = vmatprep.subr.bf16.mxu0 0
      %793 = vmatpush1.bf16.xpose.msra.mxu0 0
      %794 = vmatprep.subr.bf16.mxu0 0
      %795 = vmatpush1.bf16.xpose.msra.mxu0 0
      %796 = vmatprep.mubr.bf16.mxu0 0
      %797 = vmatmul.mubr.bf16.gmra.mrb[0].mxu0 %v759
      %v798 = vpop.f32.mrb[0].mxu0
      %v799 = vadd.f32 %v639, %v798
      %v800 = vpop.f32.mrb[0].mxu0
      %v801 = vpop.f32.mrb[0].mxu0
      %v802 = vpop.f32.mrb[0].mxu0
      %803 = vdwg.mxu0
      %v804 = vsel %vm644, %v799, -inf
      %805 = vmax.xlane.f32.xlu0 %v804
      %v806 = vpop.xlane.xlu0 %805
      %v807 = vsub.f32 %v799, %v806
      %v808 = vmul.f32 %v807, 1.442695
      %v809 = vpow.pop %v808
      %v810 = vsel %vm644, %v809, 0.0
      %811 = vadd.xlane.f32.xlu0 %v810
      %v812 = vpop.xlane.xlu0 %811
      %v813 = vrcp.pop %v812
      %v814 = vmul.f32 %v809, %v813
      %v815 = vpack.c.bf16 %v814, %v814
      %816 = vrot.lane.b32.xlu0 %v634, 56
      %v817 = vpop.permute.xlu0 %816
      %v819 = vsel %vm644, %v815, 0
      %v822 = vsel %vm708, %v817, 0
      %824 = vmatprep.subr.bf16.mxu0 0
      %825 = vmatpush1.bf16.msra.mxu0 %v822
      %826 = vmatprep.subr.bf16.mxu0 0
      %827 = vmatpush1.bf16.msra.mxu0 0
      %828 = vmatprep.subr.bf16.mxu0 0
      %829 = vmatpush1.bf16.msra.mxu0 0
      %830 = vmatprep.subr.bf16.mxu0 0
      %831 = vmatpush1.bf16.msra.mxu0 0
      %832 = vmatprep.subr.bf16.mxu0 0
      %833 = vmatpush1.bf16.msra.mxu0 0
      %834 = vmatprep.subr.bf16.mxu0 0
      %835 = vmatpush1.bf16.msra.mxu0 0
      %836 = vmatprep.subr.bf16.mxu0 0
      %837 = vmatpush1.bf16.msra.mxu0 0
      %838 = vmatprep.subr.bf16.mxu0 0
      %839 = vmatpush1.bf16.msra.mxu0 0
      %840 = vmatprep.subr.bf16.mxu0 0
      %841 = vmatpush1.bf16.msra.mxu0 0
      %842 = vmatprep.subr.bf16.mxu0 0
      %843 = vmatpush1.bf16.msra.mxu0 0
      %844 = vmatprep.subr.bf16.mxu0 0
      %845 = vmatpush1.bf16.msra.mxu0 0
      %846 = vmatprep.subr.bf16.mxu0 0
      %847 = vmatpush1.bf16.msra.mxu0 0
      %848 = vmatprep.subr.bf16.mxu0 0
      %849 = vmatpush1.bf16.msra.mxu0 0
      %850 = vmatprep.subr.bf16.mxu0 0
      %851 = vmatpush1.bf16.msra.mxu0 0
      %852 = vmatprep.subr.bf16.mxu0 0
      %853 = vmatpush1.bf16.msra.mxu0 0
      %854 = vmatprep.subr.bf16.mxu0 0
      %855 = vmatpush1.bf16.msra.mxu0 0
      %856 = vmatprep.mubr.bf16.mxu0 0
      %857 = vmatmul.mubr.bf16.gmra.mrb[0].mxu0 %v819
      %v858 = vpop.f32.mrb[0].mxu0
      %v859 = vadd.f32 0.0, %v858
      %v860 = vpop.f32.mrb[0].mxu0
      %v861 = vpop.f32.mrb[0].mxu0
      %v862 = vpop.f32.mrb[0].mxu0
      %863 = vdwg.mxu0
      %865 = vrot.lane.b32.xlu0 %v859, 8
      %v866 = vpop.permute.xlu0 %865
      %vm868 = vcmask 130112
      %869 = vst.msk [vmem:[#allocation2] sm:$0xff] %vm868, %v866
      %870 = vrot.lane.b32.xlu0 %v633, 112
      %v871 = vpop.permute.xlu0 %870
      %872 = vrot.lane.b32.xlu0 %v634, 80
      %v873 = vpop.permute.xlu0 %872
      %v875 = vsel %vm644, %v871, 0
      %v878 = vsel %vm644, %v873, 0
      %880 = vmatprep.subr.bf16.mxu0 0
      %881 = vmatpush1.bf16.xpose.msra.mxu0 %v878
      %882 = vmatprep.subr.bf16.mxu0 0
      %883 = vmatpush1.bf16.xpose.msra.mxu0 0
      %884 = vmatprep.subr.bf16.mxu0 0
      %885 = vmatpush1.bf16.xpose.msra.mxu0 0
      %886 = vmatprep.subr.bf16.mxu0 0
      %887 = vmatpush1.bf16.xpose.msra.mxu0 0
      %888 = vmatprep.subr.bf16.mxu0 0
      %889 = vmatpush1.bf16.xpose.msra.mxu0 0
      %890 = vmatprep.subr.bf16.mxu0 0
      %891 = vmatpush1.bf16.xpose.msra.mxu0 0
      %892 = vmatprep.subr.bf16.mxu0 0
      %893 = vmatpush1.bf16.xpose.msra.mxu0 0
      %894 = vmatprep.subr.bf16.mxu0 0
      %895 = vmatpush1.bf16.xpose.msra.mxu0 0
      %896 = vmatprep.subr.bf16.mxu0 0
      %897 = vmatpush1.bf16.xpose.msra.mxu0 0
      %898 = vmatprep.subr.bf16.mxu0 0
      %899 = vmatpush1.bf16.xpose.msra.mxu0 0
      %900 = vmatprep.subr.bf16.mxu0 0
      %901 = vmatpush1.bf16.xpose.msra.mxu0 0
      %902 = vmatprep.subr.bf16.mxu0 0
      %903 = vmatpush1.bf16.xpose.msra.mxu0 0
      %904 = vmatprep.subr.bf16.mxu0 0
      %905 = vmatpush1.bf16.xpose.msra.mxu0 0
      %906 = vmatprep.subr.bf16.mxu0 0
      %907 = vmatpush1.bf16.xpose.msra.mxu0 0
      %908 = vmatprep.subr.bf16.mxu0 0
      %909 = vmatpush1.bf16.xpose.msra.mxu0 0
      %910 = vmatprep.subr.bf16.mxu0 0
      %911 = vmatpush1.bf16.xpose.msra.mxu0 0
      %912 = vmatprep.mubr.bf16.mxu0 0
      %913 = vmatmul.mubr.bf16.gmra.mrb[0].mxu0 %v875
      %v914 = vpop.f32.mrb[0].mxu0
      %v915 = vadd.f32 %v639, %v914
      %v916 = vpop.f32.mrb[0].mxu0
      %v917 = vpop.f32.mrb[0].mxu0
      %v918 = vpop.f32.mrb[0].mxu0
      %919 = vdwg.mxu0
      %v920 = vsel %vm644, %v915, -inf
      %921 = vmax.xlane.f32.xlu0 %v920
      %v922 = vpop.xlane.xlu0 %921
      %v923 = vsub.f32 %v915, %v922
      %v924 = vmul.f32 %v923, 1.442695
      %v925 = vpow.pop %v924
      %v926 = vsel %vm644, %v925, 0.0
      %927 = vadd.xlane.f32.xlu0 %v926
      %v928 = vpop.xlane.xlu0 %927
      %v929 = vrcp.pop %v928
      %v930 = vmul.f32 %v925, %v929
      %v931 = vpack.c.bf16 %v930, %v930
      %932 = vrot.lane.b32.xlu0 %v634, 48
      %v933 = vpop.permute.xlu0 %932
      %v935 = vsel %vm644, %v931, 0
      %v938 = vsel %vm708, %v933, 0
      %940 = vmatprep.subr.bf16.mxu0 0
      %941 = vmatpush1.bf16.msra.mxu0 %v938
      %942 = vmatprep.subr.bf16.mxu0 0
      %943 = vmatpush1.bf16.msra.mxu0 0
      %944 = vmatprep.subr.bf16.mxu0 0
      %945 = vmatpush1.bf16.msra.mxu0 0
      %946 = vmatprep.subr.bf16.mxu0 0
      %947 = vmatpush1.bf16.msra.mxu0 0
      %948 = vmatprep.subr.bf16.mxu0 0
      %949 = vmatpush1.bf16.msra.mxu0 0
      %950 = vmatprep.subr.bf16.mxu0 0
      %951 = vmatpush1.bf16.msra.mxu0 0
      %952 = vmatprep.subr.bf16.mxu0 0
      %953 = vmatpush1.bf16.msra.mxu0 0
      %954 = vmatprep.subr.bf16.mxu0 0
      %955 = vmatpush1.bf16.msra.mxu0 0
      %956 = vmatprep.subr.bf16.mxu0 0
      %957 = vmatpush1.bf16.msra.mxu0 0
      %958 = vmatprep.subr.bf16.mxu0 0
      %959 = vmatpush1.bf16.msra.mxu0 0
      %960 = vmatprep.subr.bf16.mxu0 0
      %961 = vmatpush1.bf16.msra.mxu0 0
      %962 = vmatprep.subr.bf16.mxu0 0
      %963 = vmatpush1.bf16.msra.mxu0 0
      %964 = vmatprep.subr.bf16.mxu0 0
      %965 = vmatpush1.bf16.msra.mxu0 0
      %966 = vmatprep.subr.bf16.mxu0 0
      %967 = vmatpush1.bf16.msra.mxu0 0
      %968 = vmatprep.subr.bf16.mxu0 0
      %969 = vmatpush1.bf16.msra.mxu0 0
      %970 = vmatprep.subr.bf16.mxu0 0
      %971 = vmatpush1.bf16.msra.mxu0 0
      %972 = vmatprep.mubr.bf16.mxu0 0
      %973 = vmatmul.mubr.bf16.gmra.mrb[0].mxu0 %v935
      %v974 = vpop.f32.mrb[0].mxu0
      %v975 = vadd.f32 0.0, %v974
      %v976 = vpop.f32.mrb[0].mxu0
      %v977 = vpop.f32.mrb[0].mxu0
      %v978 = vpop.f32.mrb[0].mxu0
      %979 = vdwg.mxu0
      %981 = vrot.lane.b32.xlu0 %v975, 16
      %v982 = vpop.permute.xlu0 %981
      %vm984 = vcmask 195712
      %985 = vst.msk [vmem:[#allocation2] sm:$0xff] %vm984, %v982
      %986 = vrot.lane.b32.xlu0 %v633, 104
      %v987 = vpop.permute.xlu0 %986
      %988 = vrot.lane.b32.xlu0 %v634, 72
      %v989 = vpop.permute.xlu0 %988
      %v991 = vsel %vm644, %v987, 0
      %v994 = vsel %vm644, %v989, 0
      %996 = vmatprep.subr.bf16.mxu0 0
      %997 = vmatpush1.bf16.xpose.msra.mxu0 %v994
      %998 = vmatprep.subr.bf16.mxu0 0
      %999 = vmatpush1.bf16.xpose.msra.mxu0 0
      %1000 = vmatprep.subr.bf16.mxu0 0
      %1001 = vmatpush1.bf16.xpose.msra.mxu0 0
      %1002 = vmatprep.subr.bf16.mxu0 0
      %1003 = vmatpush1.bf16.xpose.msra.mxu0 0
      %1004 = vmatprep.subr.bf16.mxu0 0
      %1005 = vmatpush1.bf16.xpose.msra.mxu0 0
      %1006 = vmatprep.subr.bf16.mxu0 0
      %1007 = vmatpush1.bf16.xpose.msra.mxu0 0
      %1008 = vmatprep.subr.bf16.mxu0 0
      %1009 = vmatpush1.bf16.xpose.msra.mxu0 0
      %1010 = vmatprep.subr.bf16.mxu0 0
      %1011 = vmatpush1.bf16.xpose.msra.mxu0 0
      %1012 = vmatprep.subr.bf16.mxu0 0
      %1013 = vmatpush1.bf16.xpose.msra.mxu0 0
      %1014 = vmatprep.subr.bf16.mxu0 0
      %1015 = vmatpush1.bf16.xpose.msra.mxu0 0
      %1016 = vmatprep.subr.bf16.mxu0 0
      %1017 = vmatpush1.bf16.xpose.msra.mxu0 0
      %1018 = vmatprep.subr.bf16.mxu0 0
      %1019 = vmatpush1.bf16.xpose.msra.mxu0 0
      %1020 = vmatprep.subr.bf16.mxu0 0
      %1021 = vmatpush1.bf16.xpose.msra.mxu0 0
      %1022 = vmatprep.subr.bf16.mxu0 0
      %1023 = vmatpush1.bf16.xpose.msra.mxu0 0
      %1024 = vmatprep.subr.bf16.mxu0 0
      %1025 = vmatpush1.bf16.xpose.msra.mxu0 0
      %1026 = vmatprep.subr.bf16.mxu0 0
      %1027 = vmatpush1.bf16.xpose.msra.mxu0 0
      %1028 = vmatprep.mubr.bf16.mxu0 0
      %1029 = vmatmul.mubr.bf16.gmra.mrb[0].mxu0 %v991
      %v1030 = vpop.f32.mrb[0].mxu0
      %v1031 = vadd.f32 %v639, %v1030
      %v1032 = vpop.f32.mrb[0].mxu0
      %v1033 = vpop.f32.mrb[0].mxu0
      %v1034 = vpop.f32.mrb[0].mxu0
      %1035 = vdwg.mxu0
      %v1036 = vsel %vm644, %v1031, -inf
      %1037 = vmax.xlane.f32.xlu0 %v1036
      %v1038 = vpop.xlane.xlu0 %1037
      %v1039 = vsub.f32 %v1031, %v1038
      %v1040 = vmul.f32 %v1039, 1.442695
      %v1041 = vpow.pop %v1040
      %v1042 = vsel %vm644, %v1041, 0.0
      %1043 = vadd.xlane.f32.xlu0 %v1042
      %v1044 = vpop.xlane.xlu0 %1043
      %v1045 = vrcp.pop %v1044
      %v1046 = vmul.f32 %v1041, %v1045
      %v1047 = vpack.c.bf16 %v1046, %v1046
      %1048 = vrot.lane.b32.xlu0 %v634, 40
      %v1049 = vpop.permute.xlu0 %1048
      %v1051 = vsel %vm644, %v1047, 0
      %v1054 = vsel %vm708, %v1049, 0
      %1056 = vmatprep.subr.bf16.mxu0 0
      %1057 = vmatpush1.bf16.msra.mxu0 %v1054
      %1058 = vmatprep.subr.bf16.mxu0 0
      %1059 = vmatpush1.bf16.msra.mxu0 0
      %1060 = vmatprep.subr.bf16.mxu0 0
      %1061 = vmatpush1.bf16.msra.mxu0 0
      %1062 = vmatprep.subr.bf16.mxu0 0
      %1063 = vmatpush1.bf16.msra.mxu0 0
      %1064 = vmatprep.subr.bf16.mxu0 0
      %1065 = vmatpush1.bf16.msra.mxu0 0
      %1066 = vmatprep.subr.bf16.mxu0 0
      %1067 = vmatpush1.bf16.msra.mxu0 0
      %1068 = vmatprep.subr.bf16.mxu0 0
      %1069 = vmatpush1.bf16.msra.mxu0 0
      %1070 = vmatprep.subr.bf16.mxu0 0
      %1071 = vmatpush1.bf16.msra.mxu0 0
      %1072 = vmatprep.subr.bf16.mxu0 0
      %1073 = vmatpush1.bf16.msra.mxu0 0
      %1074 = vmatprep.subr.bf16.mxu0 0
      %1075 = vmatpush1.bf16.msra.mxu0 0
      %1076 = vmatprep.subr.bf16.mxu0 0
      %1077 = vmatpush1.bf16.msra.mxu0 0
      %1078 = vmatprep.subr.bf16.mxu0 0
      %1079 = vmatpush1.bf16.msra.mxu0 0
      %1080 = vmatprep.subr.bf16.mxu0 0
      %1081 = vmatpush1.bf16.msra.mxu0 0
      %1082 = vmatprep.subr.bf16.mxu0 0
      %1083 = vmatpush1.bf16.msra.mxu0 0
      %1084 = vmatprep.subr.bf16.mxu0 0
      %1085 = vmatpush1.bf16.msra.mxu0 0
      %1086 = vmatprep.subr.bf16.mxu0 0
      %1087 = vmatpush1.bf16.msra.mxu0 0
      %1088 = vmatprep.mubr.bf16.mxu0 0
      %1089 = vmatmul.mubr.bf16.gmra.mrb[0].mxu0 %v1051
      %v1090 = vpop.f32.mrb[0].mxu0
      %v1091 = vadd.f32 0.0, %v1090
      %v1092 = vpop.f32.mrb[0].mxu0
      %v1093 = vpop.f32.mrb[0].mxu0
      %v1094 = vpop.f32.mrb[0].mxu0
      %1095 = vdwg.mxu0
      %1097 = vrot.lane.b32.xlu0 %v1091, 24
      %v1098 = vpop.permute.xlu0 %1097
      %vm1100 = vcmask 261312
      %1101 = vst.msk [vmem:[#allocation2] sm:$0xff] %vm1100, %v1098
      %v1102 = vld [vmem:[#allocation2] sm:$0xff]
      %v1103 = vpack.c.bf16 %v1102, %v1102
      %v1104 = vld [vmem:[%s6] sm:$0xf]
      %v1105 = vld [vmem:[%s6 + $0x4] sm:$0xf]
      %v1106 = vld [vmem:[%s6 + $0x8] sm:$0xf]
      %v1107 = vld [vmem:[%s6 + $0xc] sm:$0xf]
      %v1108 = vld [vmem:[%s7] sm:$0x1]
      %v1110 = vlaneseq
      %v1111 = vshrl.u32 %v1110, 7
      %v1112 = vsub.s32 0, %v1111
      %v1113 = vrot.slane %v1108, %v1112
      %v1119 = vunpack.c.l.b16 %v1104
      %v1120 = vunpack.c.l.b16 %v1105
      %v1121 = vunpack.c.l.b16 %v1106
      %v1122 = vunpack.c.l.b16 %v1107
      %v1123 = vpack.c.b16 %v1120, %v1119
      %v1124 = vpack.c.b16 %v1122, %v1121
      %v1128 = vsel %vm535, %v1103, 0
      %1130 = vmatprep.subr.bf16.mxu0 0
      %1131 = vmatpush1.bf16.msra.mxu0 %v1123
      %1132 = vmatprep.subr.bf16.mxu0 0
      %1133 = vmatpush1.bf16.msra.mxu0 %v1124
      %1134 = vmatprep.subr.bf16.mxu0 0
      %1135 = vmatpush1.bf16.msra.mxu0 0
      %1136 = vmatprep.subr.bf16.mxu0 0
      %1137 = vmatpush1.bf16.msra.mxu0 0
      %1138 = vmatprep.subr.bf16.mxu0 0
      %1139 = vmatpush1.bf16.msra.mxu0 0
      %1140 = vmatprep.subr.bf16.mxu0 0
      %1141 = vmatpush1.bf16.msra.mxu0 0
      %1142 = vmatprep.subr.bf16.mxu0 0
      %1143 = vmatpush1.bf16.msra.mxu0 0
      %1144 = vmatprep.subr.bf16.mxu0 0
      %1145 = vmatpush1.bf16.msra.mxu0 0
      %1146 = vmatprep.subr.bf16.mxu0 0
      %1147 = vmatpush1.bf16.msra.mxu0 0
      %1148 = vmatprep.subr.bf16.mxu0 0
      %1149 = vmatpush1.bf16.msra.mxu0 0
      %1150 = vmatprep.subr.bf16.mxu0 0
      %1151 = vmatpush1.bf16.msra.mxu0 0
      %1152 = vmatprep.subr.bf16.mxu0 0
      %1153 = vmatpush1.bf16.msra.mxu0 0
      %1154 = vmatprep.subr.bf16.mxu0 0
      %1155 = vmatpush1.bf16.msra.mxu0 0
      %1156 = vmatprep.subr.bf16.mxu0 0
      %1157 = vmatpush1.bf16.msra.mxu0 0
      %1158 = vmatprep.subr.bf16.mxu0 0
      %1159 = vmatpush1.bf16.msra.mxu0 0
      %1160 = vmatprep.subr.bf16.mxu0 0
      %1161 = vmatpush1.bf16.msra.mxu0 0
      %1162 = vmatprep.mubr.bf16.mxu0 0
      %1163 = vmatmul.mubr.bf16.gmra.mrb[0].mxu0 %v1128
      %v1164 = vpop.f32.mrb[0].mxu0
      %v1165 = vadd.f32 %v1113, %v1164
      %v1166 = vpop.f32.mrb[0].mxu0
      %v1167 = vpop.f32.mrb[0].mxu0
      %v1168 = vpop.f32.mrb[0].mxu0
      %1169 = vdwg.mxu0
      %v1170 = vadd.f32 %v1165, %v563
      %v1171 = vld [vmem:[%s8] sm:$0x1]
      %v1172 = vld [vmem:[%s9] sm:$0x1]
      %v1173 = vsel %vm535, %v1170, 0.0
      %1174 = vadd.xlane.f32.xlu0 %v1173
      %v1175 = vpop.xlane.xlu0 %1174
      %v1176 = vmul.f32 %v1175, %v539
      %v1177 = vsub.f32 %v1170, %v1176
      %v1178 = vmul.f32 %v1177, %v1177
      %v1179 = vsel %vm535, %v1178, 0.0
      %1180 = vadd.xlane.f32.xlu0 %v1179
      %v1181 = vpop.xlane.xlu0 %1180
      %v1182 = vmul.f32 %v1181, %v539
      %v1183 = vadd.f32 %v1182, 1e-12
      %v1184 = vrsqrt.pop %v1183
      %v1185 = vmul.f32 %v1177, %v1184
      %v1187 = vlaneseq
      %v1188 = vshrl.u32 %v1187, 7
      %v1189 = vsub.s32 0, %v1188
      %v1190 = vrot.slane %v1171, %v1189
      %v1192 = vmul.f32 %v1185, %v1190
      %v1194 = vlaneseq
      %v1195 = vshrl.u32 %v1194, 7
      %v1196 = vsub.s32 0, %v1195
      %v1197 = vrot.slane %v1172, %v1196
      %v1199 = vadd.f32 %v1192, %v1197
      %v1200 = vpack.c.bf16 %v1199, %v1199
      %v1201 = vld [vmem:[%s10] sm:$0xf]
      %v1202 = vld [vmem:[%s10 + $0x4] sm:$0xf]
      %v1203 = vld [vmem:[%s10 + $0x8] sm:$0xf]
      %v1204 = vld [vmem:[%s10 + $0xc] sm:$0xf]
      %v1205 = vld [vmem:[%s11] sm:$0x1]
      %v1207 = vlaneseq
      %v1208 = vshrl.u32 %v1207, 7
      %v1209 = vsub.s32 0, %v1208
      %v1210 = vrot.slane %v1205, %v1209
      %v1216 = vunpack.c.l.b16 %v1201
      %v1217 = vunpack.c.l.b16 %v1202
      %v1218 = vunpack.c.l.b16 %v1203
      %v1219 = vunpack.c.l.b16 %v1204
      %v1220 = vpack.c.b16 %v1217, %v1216
      %v1221 = vpack.c.b16 %v1219, %v1218
      %v1225 = vsel %vm535, %v1200, 0
      %1227 = vmatprep.subr.bf16.mxu0 0
      %1228 = vmatpush1.bf16.msra.mxu0 %v1220
      %1229 = vmatprep.subr.bf16.mxu0 0
      %1230 = vmatpush1.bf16.msra.mxu0 %v1221
      %1231 = vmatprep.subr.bf16.mxu0 0
      %1232 = vmatpush1.bf16.msra.mxu0 0
      %1233 = vmatprep.subr.bf16.mxu0 0
      %1234 = vmatpush1.bf16.msra.mxu0 0
      %1235 = vmatprep.subr.bf16.mxu0 0
      %1236 = vmatpush1.bf16.msra.mxu0 0
      %1237 = vmatprep.subr.bf16.mxu0 0
      %1238 = vmatpush1.bf16.msra.mxu0 0
      %1239 = vmatprep.subr.bf16.mxu0 0
      %1240 = vmatpush1.bf16.msra.mxu0 0
      %1241 = vmatprep.subr.bf16.mxu0 0
      %1242 = vmatpush1.bf16.msra.mxu0 0
      %1243 = vmatprep.subr.bf16.mxu0 0
      %1244 = vmatpush1.bf16.msra.mxu0 0
      %1245 = vmatprep.subr.bf16.mxu0 0
      %1246 = vmatpush1.bf16.msra.mxu0 0
      %1247 = vmatprep.subr.bf16.mxu0 0
      %1248 = vmatpush1.bf16.msra.mxu0 0
      %1249 = vmatprep.subr.bf16.mxu0 0
      %1250 = vmatpush1.bf16.msra.mxu0 0
      %1251 = vmatprep.subr.bf16.mxu0 0
      %1252 = vmatpush1.bf16.msra.mxu0 0
      %1253 = vmatprep.subr.bf16.mxu0 0
      %1254 = vmatpush1.bf16.msra.mxu0 0
      %1255 = vmatprep.subr.bf16.mxu0 0
      %1256 = vmatpush1.bf16.msra.mxu0 0
      %1257 = vmatprep.subr.bf16.mxu0 0
      %1258 = vmatpush1.bf16.msra.mxu0 0
      %1259 = vmatprep.mubr.bf16.mxu0 0
      %1260 = vmatmul.mubr.bf16.gmra.mrb[0].mxu0 %v1225
      %v1261 = vpop.f32.mrb[0].mxu0
      %v1262 = vadd.f32 %v1210, %v1261
      %v1263 = vpop.f32.mrb[0].mxu0
      %v1264 = vpop.f32.mrb[0].mxu0
      %v1265 = vpop.f32.mrb[0].mxu0
      %1266 = vdwg.mxu0
      %v1267 = vmul.f32 %v1262, 0.5
      %v1268 = vmul.f32 %v1262, 0.70710677
      %v1269 = verf.f32.pop %v1268
      %v1270 = vadd.f32 %v1269, 1.0
      %v1271 = vmul.f32 %v1267, %v1270
      %v1272 = vpack.c.bf16 %v1271, %v1271
      %v1273 = vld [vmem:[%s12] sm:$0xf]
      %v1274 = vld [vmem:[%s12 + $0x4] sm:$0xf]
      %v1275 = vld [vmem:[%s12 + $0x8] sm:$0xf]
      %v1276 = vld [vmem:[%s12 + $0xc] sm:$0xf]
      %v1277 = vld [vmem:[%s12 + $0x10] sm:$0xf]
      %v1278 = vld [vmem:[%s12 + $0x14] sm:$0xf]
      %v1279 = vld [vmem:[%s12 + $0x18] sm:$0xf]
      %v1280 = vld [vmem:[%s12 + $0x1c] sm:$0xf]
      %v1281 = vld [vmem:[%s12 + $0x20] sm:$0xf]
      %v1282 = vld [vmem:[%s12 + $0x24] sm:$0xf]
      %v1283 = vld [vmem:[%s12 + $0x28] sm:$0xf]
      %v1284 = vld [vmem:[%s12 + $0x2c] sm:$0xf]
      %v1285 = vld [vmem:[%s12 + $0x30] sm:$0xf]
      %v1286 = vld [vmem:[%s12 + $0x34] sm:$0xf]
      %v1287 = vld [vmem:[%s12 + $0x38] sm:$0xf]
      %v1288 = vld [vmem:[%s12 + $0x3c] sm:$0xf]
      %v1289 = vld [vmem:[%s13] sm:$0x1]
      %v1291 = vlaneseq
      %v1292 = vshrl.u32 %v1291, 7
      %v1293 = vsub.s32 0, %v1292
      %v1294 = vrot.slane %v1289, %v1293
      %v1312 = vunpack.c.l.b16 %v1273
      %v1313 = vunpack.c.l.b16 %v1274
      %v1314 = vunpack.c.l.b16 %v1275
      %v1315 = vunpack.c.l.b16 %v1276
      %v1316 = vunpack.c.l.b16 %v1277
      %v1317 = vunpack.c.l.b16 %v1278
      %v1318 = vunpack.c.l.b16 %v1279
      %v1319 = vunpack.c.l.b16 %v1280
      %v1320 = vunpack.c.l.b16 %v1281
      %v1321 = vunpack.c.l.b16 %v1282
      %v1322 = vunpack.c.l.b16 %v1283
      %v1323 = vunpack.c.l.b16 %v1284
      %v1324 = vunpack.c.l.b16 %v1285
      %v1325 = vunpack.c.l.b16 %v1286
      %v1326 = vunpack.c.l.b16 %v1287
      %v1327 = vunpack.c.l.b16 %v1288
      %v1328 = vpack.c.b16 %v1313, %v1312
      %v1329 = vpack.c.b16 %v1315, %v1314
      %v1330 = vpack.c.b16 %v1317, %v1316
      %v1331 = vpack.c.b16 %v1319, %v1318
      %v1332 = vpack.c.b16 %v1321, %v1320
      %v1333 = vpack.c.b16 %v1323, %v1322
      %v1334 = vpack.c.b16 %v1325, %v1324
      %v1335 = vpack.c.b16 %v1327, %v1326
      %1344 = vmatprep.subr.bf16.mxu0 0
      %1345 = vmatpush1.bf16.msra.mxu0 %v1328
      %1346 = vmatprep.subr.bf16.mxu0 0
      %1347 = vmatpush1.bf16.msra.mxu0 %v1329
      %1348 = vmatprep.subr.bf16.mxu0 0
      %1349 = vmatpush1.bf16.msra.mxu0 %v1330
      %1350 = vmatprep.subr.bf16.mxu0 0
      %1351 = vmatpush1.bf16.msra.mxu0 %v1331
      %1352 = vmatprep.subr.bf16.mxu0 0
      %1353 = vmatpush1.bf16.msra.mxu0 %v1332
      %1354 = vmatprep.subr.bf16.mxu0 0
      %1355 = vmatpush1.bf16.msra.mxu0 %v1333
      %1356 = vmatprep.subr.bf16.mxu0 0
      %1357 = vmatpush1.bf16.msra.mxu0 %v1334
      %1358 = vmatprep.subr.bf16.mxu0 0
      %1359 = vmatpush1.bf16.msra.mxu0 %v1335
      %1360 = vmatprep.subr.bf16.mxu0 0
      %1361 = vmatpush1.bf16.msra.mxu0 0
      %1362 = vmatprep.subr.bf16.mxu0 0
      %1363 = vmatpush1.bf16.msra.mxu0 0
      %1364 = vmatprep.subr.bf16.mxu0 0
      %1365 = vmatpush1.bf16.msra.mxu0 0
      %1366 = vmatprep.subr.bf16.mxu0 0
      %1367 = vmatpush1.bf16.msra.mxu0 0
      %1368 = vmatprep.subr.bf16.mxu0 0
      %1369 = vmatpush1.bf16.msra.mxu0 0
      %1370 = vmatprep.subr.bf16.mxu0 0
      %1371 = vmatpush1.bf16.msra.mxu0 0
      %1372 = vmatprep.subr.bf16.mxu0 0
      %1373 = vmatpush1.bf16.msra.mxu0 0
      %1374 = vmatprep.subr.bf16.mxu0 0
      %1375 = vmatpush1.bf16.msra.mxu0 0
      %1376 = vmatprep.mubr.bf16.mxu0 0
      %1377 = vmatmul.mubr.bf16.gmra.mrb[0].mxu0 %v1272
      %v1378 = vpop.f32.mrb[0].mxu0
      %v1379 = vadd.f32 %v1294, %v1378
      %v1380 = vpop.f32.mrb[0].mxu0
      %v1381 = vpop.f32.mrb[0].mxu0
      %v1382 = vpop.f32.mrb[0].mxu0
      %1383 = vdwg.mxu0
      %v1384 = vadd.f32 %v1379, %v1199
      %v1385 = vld [vmem:[%s14] sm:$0x1]
      %v1386 = vld [vmem:[%s15] sm:$0x1]
      %v1387 = vsel %vm535, %v1384, 0.0
      %1388 = vadd.xlane.f32.xlu0 %v1387
      %v1389 = vpop.xlane.xlu0 %1388
      %v1390 = vmul.f32 %v1389, %v539
      %v1391 = vsub.f32 %v1384, %v1390
      %v1392 = vmul.f32 %v1391, %v1391
      %v1393 = vsel %vm535, %v1392, 0.0
      %1394 = vadd.xlane.f32.xlu0 %v1393
      %v1395 = vpop.xlane.xlu0 %1394
      %v1396 = vmul.f32 %v1395, %v539
      %v1397 = vadd.f32 %v1396, 1e-12
      %v1398 = vrsqrt.pop %v1397
      %v1399 = vmul.f32 %v1391, %v1398
      %v1401 = vlaneseq
      %v1402 = vshrl.u32 %v1401, 7
      %v1403 = vsub.s32 0, %v1402
      %v1404 = vrot.slane %v1385, %v1403
      %v1406 = vmul.f32 %v1399, %v1404
      %v1408 = vlaneseq
      %v1409 = vshrl.u32 %v1408, 7
      %v1410 = vsub.s32 0, %v1409
      %v1411 = vrot.slane %v1386, %v1410
      %v1413 = vadd.f32 %v1406, %v1411
      %1414 = vst.msk [vmem:[%s530] sm:$0xff] %vm535, %v1413
      %p1415 = scmp.lt.s32.totalorder %s27, 1
      %s1416 = scalar_select %p1415, %s27, 1
      %s1417 = smul.addr %s1416, 8
      %s1418 = scalar_lea.vmem %s16, %s1417
      // Predicated region
      $region85: #{bert_classifier_forward.3} parent=83 // pred_check
        %p1419 = pneg %p391
      $region86: #{bert_classifier_forward.3} parent=83 // pred_check_branch
        %1421 = sbr.rel (%p1419) target = $region88
      $region87: #{bert_classifier_forward.3} parent=83 // pred_region
        _
      $region88: #{bert_classifier_forward.3} parent=83 // pred_fallthru
        _
    $region84: #{bert_classifier_forward.3} parent=5 // pred_fallthru
      _
    %p1422 = scmp.le.s32.totalorder 2, %s22
    // Predicated region
    $region89: #{bert_classifier_forward.3} parent=5 // pred_check
      %p1423 = pneg %p1422
    $region90: #{bert_classifier_forward.3} parent=5 // pred_check_branch
      %1425 = sbr.rel (%p1423) target = $region92
    $region91: #{bert_classifier_forward.3} parent=5 // pred_region
      %s1426 = ssub.s32 %s22, 2
      // Predicated region
      $region93: #{bert_classifier_forward.3} parent=91 // pred_check
        %p1427 = pneg %p397
      $region94: #{bert_classifier_forward.3} parent=91 // pred_check_branch
        %1429 = sbr.rel (%p1427) target = $region96
      $region95: #{bert_classifier_forward.3} parent=91 // pred_region
        %p1430 = scmp.lt.s32.totalorder %s28, 1
        %s1431 = scalar_select %p1430, %s28, 1
        %s1432 = smul.addr %s1431, 8
        %s1433 = scalar_lea.vmem %s16, %s1432
      $region96: #{bert_classifier_forward.3} parent=91 // pred_fallthru
        _
    $region92: #{bert_classifier_forward.3} parent=5 // pred_fallthru
      _
  $region6: #{bert_classifier_forward.3} parent=0 // loop_footer
    %s26 = sadd.s32 1, %s22
  $region7: #{bert_classifier_forward.3} parent=0 // loop_footer_branch
    %21 = sbr.rel target = $region3
  $region8: #{bert_classifier_forward.3} parent=0 // loop_exit
    _

</llo_original>
